<compile_context>
chip_gen: v7x
topology: tpu7x:2x2x1
jax: 0.10.0
libtpu: 0.0.40
codegen_flags: <defaults>
</compile_context>

<pallas_src>
import functools

import jax
import jax.numpy as jnp
from jax import lax
from jax.experimental import pallas as pl
from jax.experimental.pallas import tpu as pltpu

EPS = 1e-5
LANE = 128
_MIB = 1024 * 1024


def _round_up(x, m):
    return (x + m - 1) // m * m


def _pick_tile_m(m, cap=1024):
    """Largest multiple-of-8 tile that divides m exactly (no M padding, no stats masks)."""
    cap = max(8, cap - cap % 8)
    for t in range(min(cap, m), 7, -1):
        if t % 8 == 0 and m % t == 0:
            return t, m
    t = min(cap, _round_up(m, 8))          # fallback: pad M and mask the stats
    return t, _round_up(m, t)


def _cparams(buf_bytes):
    """1-D parallel grid + VMEM limit sized to the double-buffered tile footprint."""
    need = 4 * int(buf_bytes)              # 2x double-buffering + 2x temporaries headroom
    limit = int(min(max(need, 32 * _MIB), 56 * _MIB))   # stay under v7x's 64 MiB physical
    return pltpu.CompilerParams(dimension_semantics=("parallel",),
                                vmem_limit_bytes=limit)


# --------------------------------------------------------------------------------------
# Kernel: [optional fused bn+relu on the input] -> 1x1 conv (matmul) -> bf16 pre-BN output
# plus per-tile partial BN statistics.  Used for conv1 (no prelude) and conv3 (bn2+relu).
# --------------------------------------------------------------------------------------
def _conv1x1_kernel(x_ref, w_ref, scale_ref, bias_ref, y_ref, stats_ref,
                    *, apply_input_bn, mask_rows, tile_m, m_real):
    x = x_ref[...].astype(jnp.float32)
    if apply_input_bn:                       # previous BN folded to scale/bias, + ReLU (f32)
        x = jnp.maximum(x * scale_ref[...] + bias_ref[...], 0.0)

    y = jnp.dot(x.astype(jnp.bfloat16), w_ref[...],        # bf16 MXU, f32 accumulate
                preferred_element_type=jnp.float32)
    y_ref[...] = y.astype(y_ref.dtype)                      # bf16 inter-stage storage

    ym = y
    if mask_rows:                            # exclude padded M rows from the BN statistics
        row = pl.program_id(0) * tile_m + lax.broadcasted_iota(jnp.int32, (tile_m, 1), 0)
        ym = jnp.where(row < m_real, y, 0.0)
    s = jnp.sum(ym, axis=0, keepdims=True)
    ss = jnp.sum(ym * ym, axis=0, keepdims=True)
    stats_ref[0] = jnp.concatenate([s, ss], axis=0)          # rows: [sum, sum_sq]


def _conv1x1_stage(x2d, w, in_scale, in_bias, *, apply_input_bn, tile_m, m_real):
    m_pad, c_in = x2d.shape
    c_out = w.shape[1]
    n_tiles = m_pad // tile_m
    kern = functools.partial(
        _conv1x1_kernel,
        apply_input_bn=apply_input_bn,
        mask_rows=(apply_input_bn and m_pad != m_real),
        tile_m=tile_m, m_real=m_real)
    buf_bytes = (tile_m * c_in * x2d.dtype.itemsize + w.size * 2
                 + tile_m * c_out * 2 + 4 * c_out * 4)
    y, stats = pl.pallas_call(
        kern,
        grid=(n_tiles,),
        in_specs=[
            pl.BlockSpec((tile_m, c_in), lambda i: (i, 0)),
            pl.BlockSpec(w.shape, lambda i: (0, 0)),
            pl.BlockSpec(in_scale.shape, lambda i: (0, 0)),
            pl.BlockSpec(in_bias.shape, lambda i: (0, 0)),
        ],
        out_specs=[
            pl.BlockSpec((tile_m, c_out), lambda i: (i, 0)),
            pl.BlockSpec((1, 2, c_out), lambda i: (i, 0, 0)),
        ],
        out_shape=[
            jax.ShapeDtypeStruct((m_pad, c_out), jnp.bfloat16),
            jax.ShapeDtypeStruct((n_tiles, 2, c_out), jnp.float32),
        ],
        compiler_params=_cparams(buf_bytes),
    )(x2d, w, in_scale, in_bias)
    return y, stats


# --------------------------------------------------------------------------------------
# Kernel: bn1+relu prelude -> 3x3 conv (pad=1, stride=1) as ONE big-K im2col matmul per
# image (K = 9*C), plus per-image partial BN statistics.
# --------------------------------------------------------------------------------------
def _conv3x3_kernel(x_ref, w_ref, scale_ref, bias_ref, y_ref, stats_ref, *, hgt, wid):
    c = x_ref.shape[-1]
    hw = hgt * wid
    slab_rows = (hgt + 2) * wid

    x = x_ref[0].astype(jnp.float32)                            # (H*W, C): pre-BN conv1 out
    x = jnp.maximum(x * scale_ref[...] + bias_ref[...], 0.0)    # bn1 + relu (f32)

    # zero-ROW halo: ((H+2)*W, C).  Sublane-aligned concat (W is a multiple of 8).
    zrow = jnp.zeros((wid, c), jnp.float32)
    xp = jnp.concatenate([zrow, x, zrow], axis=0)

    # +-1 horizontal-shift slabs: XLU sublane roll + column-boundary wrap mask.
    col = lax.broadcasted_iota(jnp.int32, (slab_rows, 1), 0) % wid
    x_l = jnp.where(col == 0, 0.0,
                    pltpu.roll(xp, shift=1, axis=0))                 # left neighbor (kw=-1)
    x_r = jnp.where(col == wid - 1, 0.0,
                    pltpu.roll(xp, shift=slab_rows - 1, axis=0))     # right neighbor (kw=+1)

    # im2col slab (H*W, 9*C) in bf16; tap order (kh, kw) row-major matches w2's row layout.
    slabs = (x_l.astype(jnp.bfloat16), xp.astype(jnp.bfloat16), x_r.astype(jnp.bfloat16))
    taps = []
    for kh in range(3):                               # vertical taps: aligned row offsets
        off = kh * wid
        for slab in slabs:
            taps.append(slab[off:off + hw, :])
    im2col = jnp.concatenate(taps, axis=1)

    acc = jnp.dot(im2col, w_ref[...], preferred_element_type=jnp.float32)   # one big-K matmul

    y_ref[0] = acc.astype(y_ref.dtype)                         # bf16 inter-stage storage
    s = jnp.sum(acc, axis=0, keepdims=True)
    ss = jnp.sum(acc * acc, axis=0, keepdims=True)
    stats_ref[0] = jnp.concatenate([s, ss], axis=0)


def _conv3x3_stage(x_img, w2, in_scale, in_bias, *, hgt, wid):
    n, hw, c = x_img.shape
    kern = functools.partial(_conv3x3_kernel, hgt=hgt, wid=wid)
    slab_rows = (hgt + 2) * wid
    buf_bytes = (hw * c * 2 + w2.size * 2 + hw * c * 2 + 2 * c * 4        # pipeline buffers
                 + 3 * slab_rows * c * 4 + hw * 9 * c * 2 + hw * c * 4)   # in-kernel temps
    y, stats = pl.pallas_call(
        kern,
        grid=(n,),
        in_specs=[
            pl.BlockSpec((1, hw, c), lambda i: (i, 0, 0)),
            pl.BlockSpec(w2.shape, lambda i: (0, 0)),
            pl.BlockSpec(in_scale.shape, lambda i: (0, 0)),
            pl.BlockSpec(in_bias.shape, lambda i: (0, 0)),
        ],
        out_specs=[
            pl.BlockSpec((1, hw, c), lambda i: (i, 0, 0)),
            pl.BlockSpec((1, 2, c), lambda i: (i, 0, 0)),
        ],
        out_shape=[
            jax.ShapeDtypeStruct((n, hw, c), jnp.bfloat16),
            jax.ShapeDtypeStruct((n, 2, c), jnp.float32),
        ],
        compiler_params=_cparams(buf_bytes),
    )(x_img, w2, in_scale, in_bias)
    return y, stats


# --------------------------------------------------------------------------------------
# Kernel: bn3 (scale/bias) + identity residual + relu, tiled over M.
# --------------------------------------------------------------------------------------
def _bn_add_relu_kernel(y_ref, scale_ref, bias_ref, res_ref, o_ref):
    y = y_ref[...].astype(jnp.float32)
    o_ref[...] = jnp.maximum(y * scale_ref[...] + bias_ref[...] + res_ref[...], 0.0)


def _bn_add_relu_stage(y, scale, bias, res, *, tile_m):
    m_pad, c = y.shape
    n_tiles = m_pad // tile_m
    buf_bytes = tile_m * c * (2 + 4 + 4) + 2 * c * 4
    return pl.pallas_call(
        _bn_add_relu_kernel,
        grid=(n_tiles,),
        in_specs=[
            pl.BlockSpec((tile_m, c), lambda i: (i, 0)),
            pl.BlockSpec(scale.shape, lambda i: (0, 0)),
            pl.BlockSpec(bias.shape, lambda i: (0, 0)),
            pl.BlockSpec((tile_m, c), lambda i: (i, 0)),
        ],
        out_specs=pl.BlockSpec((tile_m, c), lambda i: (i, 0)),
        out_shape=jax.ShapeDtypeStruct((m_pad, c), jnp.float32),
        compiler_params=_cparams(buf_bytes),
    )(y, scale, bias, res)


def _finalize_bn(stats, gamma, beta, count):
    # stats: (tiles, 2, C); row 0 = sum, row 1 = sum of squares over the real M rows
    tot = jnp.sum(stats, axis=0)
    mean = tot[0:1] / count
    var = jnp.maximum(tot[1:2] / count - mean * mean, 0.0)   # biased var (BN training fwd)
    scale = gamma * lax.rsqrt(var + EPS)
    bias = beta - mean * scale
    return scale, bias


def basic_block_forward(x_nchw, params, *, tile_m_cap=1024):
    n, c_in, hgt, wid = x_nchw.shape
    c_mid = params["w1"].shape[1]
    c_out = params["w3"].shape[1]
    assert c_out == c_in, "identity residual requires first_channels == third_channels"
    cin_p = _round_up(c_in, LANE)
    cmid_p = _round_up(c_mid, LANE)
    cout_p = _round_up(c_out, LANE)

    m = n * hgt * wid
    tile_m, m_pad = _pick_tile_m(m, tile_m_cap)

    # NCHW -> NHWC (channels on the lane dim), flatten to (M, C), pad channels lane-dense.
    x2d = jnp.transpose(x_nchw, (0, 2, 3, 1)).reshape(m, c_in)
    x2d = jnp.pad(x2d, ((0, m_pad - m), (0, cin_p - c_in)))

    # lane-dense bf16 weights; BN affine params padded with zeros so padded lanes stay 0
    w1 = jnp.pad(params["w1"], ((0, cin_p - c_in), (0, cmid_p - c_mid))).astype(jnp.bfloat16)
    w2 = jnp.pad(params["w2"], ((0, 0), (0, 0),
                                (0, cmid_p - c_mid), (0, cmid_p - c_mid)))
    w2 = w2.reshape(9 * cmid_p, cmid_p).astype(jnp.bfloat16)     # rows ordered (kh, kw, cin)
    w3 = jnp.pad(params["w3"], ((0, cmid_p - c_mid), (0, cout_p - c_out))).astype(jnp.bfloat16)
    g1 = jnp.pad(params["g1"], ((0, 0), (0, cmid_p - c_mid)))
    b1 = jnp.pad(params["b1"], ((0, 0), (0, cmid_p - c_mid)))
    g2 = jnp.pad(params["g2"], ((0, 0), (0, cmid_p - c_mid)))
    b2 = jnp.pad(params["b2"], ((0, 0), (0, cmid_p - c_mid)))
    g3 = jnp.pad(params["g3"], ((0, 0), (0, cout_p - c_out)))
    b3 = jnp.pad(params["b3"], ((0, 0), (0, cout_p - c_out)))

    dummy = jnp.zeros((1, cin_p), jnp.float32)   # unused prelude refs for conv1

    # conv1 (1x1): bf16 pre-BN output + partial BN1 stats
    y1, st1 = _conv1x1_stage(x2d, w1, dummy, dummy, apply_input_bn=False,
                             tile_m=tile_m, m_real=m)
    scale1, bias1 = _finalize_bn(st1, g1, b1, m)

    # conv2 (3x3, pad=1, stride=1): bn1+relu fused prelude, big-K im2col matmul per image
    y1_img = (y1 if m_pad == m else y1[:m]).reshape(n, hgt * wid, cmid_p)
    y2_img, st2 = _conv3x3_stage(y1_img, w2, scale1, bias1, hgt=hgt, wid=wid)
    scale2, bias2 = _finalize_bn(st2, g2, b2, m)

    # conv3 (1x1): bn2+relu fused prelude
    y2 = y2_img.reshape(m, cmid_p)
    if m_pad != m:
        y2 = jnp.pad(y2, ((0, m_pad - m), (0, 0)))
    y3, st3 = _conv1x1_stage(y2, w3, scale2, bias2, apply_input_bn=True,
                             tile_m=tile_m, m_real=m)
    scale3, bias3 = _finalize_bn(st3, g3, b3, m)

    # bn3 + identity residual + relu
    out = _bn_add_relu_stage(y3, scale3, bias3, x2d, tile_m=tile_m)

    out = out[:m, :c_out].reshape(n, hgt, wid, c_out)
    return jnp.transpose(out, (0, 3, 1, 2))   # back to NCHW


def reference_forward(x_nchw, params):
    # pure-JAX reference (bf16 conv operands, f32 BN) used only as a sanity check
    x = jnp.transpose(x_nchw, (0, 2, 3, 1))

    def bn(y, g, b):
        mean = jnp.mean(y, axis=(0, 1, 2), keepdims=True)
        var = jnp.mean(jnp.square(y - mean), axis=(0, 1, 2), keepdims=True)
        return (y - mean) * lax.rsqrt(var + EPS) * g.reshape(1, 1, 1, -1) + b.reshape(1, 1, 1, -1)

    def conv(y, w_hwio, pad):
        return lax.conv_general_dilated(
            y.astype(jnp.bfloat16), w_hwio.astype(jnp.bfloat16),
            window_strides=(1, 1), padding=pad,
            dimension_numbers=("NHWC", "HWIO", "NHWC"),
            preferred_element_type=jnp.float32)

    c_in = x.shape[-1]
    c_mid = params["w1"].shape[-1]
    o = jnp.maximum(bn(conv(x, params["w1"].reshape(1, 1, c_in, c_mid), "VALID"),
                       params["g1"], params["b1"]), 0.0)
    o = jnp.maximum(bn(conv(o, params["w2"], [(1, 1), (1, 1)]),
                       params["g2"], params["b2"]), 0.0)
    o = bn(conv(o, params["w3"].reshape(1, 1, c_mid, -1), "VALID"),
           params["g3"], params["b3"]) + x
    return jnp.transpose(jnp.maximum(o, 0.0), (0, 3, 1, 2))


if __name__ == "__main__":
    key = jax.random.PRNGKey(0)
    k_x, k_w1, k_w2, k_w3 = jax.random.split(key, 4)

    # bottleneck config: first_channels == third_channels so the identity residual is valid
    N, C_IN, H, W = 2, 16, 16, 16   # NCHW input
    C_MID = 4                       # second_channels; expansion=4 -> third_channels = 16
    C_OUT = C_IN

    x = jax.random.normal(k_x, (N, C_IN, H, W), jnp.float32)

    params = {
        # conv weights in HWIO (1x1 kernels stored with spatial dims squeezed)
        "w1": 0.1 * jax.random.normal(k_w1, (C_IN, C_MID), jnp.float32),
        "w2": 0.1 * jax.random.normal(k_w2, (3, 3, C_MID, C_MID), jnp.float32),
        "w3": 0.1 * jax.random.normal(k_w3, (C_MID, C_OUT), jnp.float32),
        # BatchNorm affine params: PyTorch init (gamma=1, beta=0)
        "g1": jnp.ones((1, C_MID), jnp.float32), "b1": jnp.zeros((1, C_MID), jnp.float32),
        "g2": jnp.ones((1, C_MID), jnp.float32), "b2": jnp.zeros((1, C_MID), jnp.float32),
        "g3": jnp.ones((1, C_OUT), jnp.float32), "b3": jnp.zeros((1, C_OUT), jnp.float32),
    }

    out = jax.jit(basic_block_forward)(x, params)
    out = jax.block_until_ready(out)

    ref = reference_forward(x, params)
    assert out.shape == (N, C_OUT, H, W)
    # bf16 inter-stage storage + bf16 MXU operands -> compare with a loose tolerance
    if not jnp.allclose(out, ref, atol=5e-2, rtol=5e-2):
        raise AssertionError(f"mismatch vs reference, max_err={jnp.max(jnp.abs(out - ref))}")

    print("KERNEL_OK")
</pallas_src>

<mosaic_0001>
module attributes {stable_mosaic.version = 11 : i64} {
  func.func @_conv1x1_kernel(%arg0: i32, %arg1: memref<512x128xf32, #tpu.memory_space<vmem>>, %arg2: memref<128x128xbf16, #tpu.memory_space<vmem>>, %arg3: memref<1x128xf32, #tpu.memory_space<vmem>>, %arg4: memref<1x128xf32, #tpu.memory_space<vmem>>, %arg5: memref<512x128xbf16, #tpu.memory_space<vmem>>, %arg6: memref<1x2x128xf32, #tpu.memory_space<vmem>>) attributes {dimension_semantics = [#tpu.dimension_semantics<parallel>], iteration_bounds = array<i64: 1>, scalar_prefetch = 0 : i64, scratch_operands = 0 : i64, tpu.core_type = #tpu.core_type<tc>, window_params = [{transform_indices = @transform_0, window_bounds = array<i64: 512, 128>}, {pipeline_mode = #tpu.pipeline_mode<synchronous>, transform_indices = @transform_1, window_bounds = array<i64: 128, 128>}, {pipeline_mode = #tpu.pipeline_mode<synchronous>, transform_indices = @transform_2, window_bounds = array<i64: 1, 128>}, {pipeline_mode = #tpu.pipeline_mode<synchronous>, transform_indices = @transform_3, window_bounds = array<i64: 1, 128>}, {transform_indices = @transform_4, window_bounds = array<i64: 512, 128>}, {transform_indices = @transform_5, window_bounds = array<i64: 1, 2, 128>}]} {
    %c0 = arith.constant 0 : index
    %c0_0 = arith.constant 0 : index
    %0 = vector.load %arg1[%c0, %c0_0] : memref<512x128xf32, #tpu.memory_space<vmem>>, vector<512x128xf32>
    %1 = arith.truncf %0 : vector<512x128xf32> to vector<512x128xbf16>
    %c0_1 = arith.constant 0 : index
    %c0_2 = arith.constant 0 : index
    %2 = vector.load %arg2[%c0_1, %c0_2] : memref<128x128xbf16, #tpu.memory_space<vmem>>, vector<128x128xbf16>
    %cst = arith.constant dense<0.000000e+00> : vector<512x128xf32>
    %3 = tpu.matmul %1, %2, %cst {dimension_numbers = #tpu.dot_dimension_numbers<[1], [0], [0], [1], [0, 0, 1, 1], [], []>} : vector<512x128xbf16>, vector<128x128xbf16>, vector<512x128xf32> -> vector<512x128xf32>
    %4 = arith.truncf %3 : vector<512x128xf32> to vector<512x128xbf16>
    %c0_3 = arith.constant 0 : index
    %c0_4 = arith.constant 0 : index
    %5 = vector.load %arg5[%c0_3, %c0_4] : memref<512x128xbf16, #tpu.memory_space<vmem>>, vector<512x128xbf16>
    tpu.vector_store %arg5[%c0_3, %c0_4], %4 {strides = array<i32>} : memref<512x128xbf16, #tpu.memory_space<vmem>>, vector<512x128xbf16>,
    %cst_5 = arith.constant dense<0.000000e+00> : vector<128xf32>
    %6 = vector.multi_reduction <add>, %3, %cst_5 [0] : vector<512x128xf32> to vector<128xf32>
    %7 = vector.shape_cast %6 : vector<128xf32> to vector<1x128xf32>
    %8 = arith.mulf %3, %3 : vector<512x128xf32>
    %cst_6 = arith.constant dense<0.000000e+00> : vector<128xf32>
    %9 = vector.multi_reduction <add>, %8, %cst_6 [0] : vector<512x128xf32> to vector<128xf32>
    %10 = vector.shape_cast %9 : vector<128xf32> to vector<1x128xf32>
    %11 = tpu.concatenate %7, %10 in 0 : vector<1x128xf32>, vector<1x128xf32> -> vector<2x128xf32>
    %c0_7 = arith.constant 0 : index
    %c0_8 = arith.constant 0 : index
    %c0_9 = arith.constant 0 : index
    %12 = vector.load %arg6[%c0_7, %c0_8, %c0_9] : memref<1x2x128xf32, #tpu.memory_space<vmem>>, vector<1x2x128xf32>
    %13 = vector.shape_cast %12 : vector<1x2x128xf32> to vector<2x128xf32>
    %14 = vector.shape_cast %11 : vector<2x128xf32> to vector<1x2x128xf32>
    tpu.vector_store %arg6[%c0_7, %c0_8, %c0_9], %14 {strides = array<i32>} : memref<1x2x128xf32, #tpu.memory_space<vmem>>, vector<1x2x128xf32>,
    return
  }
  func.func @transform_0(%arg0: i32) -> (i32, i32) {
    %c0_i32 = arith.constant 0 : i32
    %c0_i32_0 = arith.constant 0 : i32
    return %arg0, %c0_i32 : i32, i32
  }
  func.func @transform_1(%arg0: i32) -> (i32, i32) {
    %c0_i32 = arith.constant 0 : i32
    %c0_i32_0 = arith.constant 0 : i32
    %c0_i32_1 = arith.constant 0 : i32
    return %c0_i32, %c0_i32_0 : i32, i32
  }
  func.func @transform_2(%arg0: i32) -> (i32, i32) {
    %c0_i32 = arith.constant 0 : i32
    %c0_i32_0 = arith.constant 0 : i32
    %c0_i32_1 = arith.constant 0 : i32
    return %c0_i32, %c0_i32_0 : i32, i32
  }
  func.func @transform_3(%arg0: i32) -> (i32, i32) {
    %c0_i32 = arith.constant 0 : i32
    %c0_i32_0 = arith.constant 0 : i32
    %c0_i32_1 = arith.constant 0 : i32
    return %c0_i32, %c0_i32_0 : i32, i32
  }
  func.func @transform_4(%arg0: i32) -> (i32, i32) {
    %c0_i32 = arith.constant 0 : i32
    %c0_i32_0 = arith.constant 0 : i32
    return %arg0, %c0_i32 : i32, i32
  }
  func.func @transform_5(%arg0: i32) -> (i32, i32, i32) {
    %c0_i32 = arith.constant 0 : i32
    %c0_i32_0 = arith.constant 0 : i32
    %c0_i32_1 = arith.constant 0 : i32
    return %arg0, %c0_i32, %c0_i32_0 : i32, i32, i32
  }
}

module attributes {stable_mosaic.version = 11 : i64} {
  func.func @_conv3x3_kernel(%arg0: i32, %arg1: memref<1x256x128xbf16, #tpu.memory_space<vmem>>, %arg2: memref<1152x128xbf16, #tpu.memory_space<vmem>>, %arg3: memref<1x128xf32, #tpu.memory_space<vmem>>, %arg4: memref<1x128xf32, #tpu.memory_space<vmem>>, %arg5: memref<1x256x128xbf16, #tpu.memory_space<vmem>>, %arg6: memref<1x2x128xf32, #tpu.memory_space<vmem>>) attributes {dimension_semantics = [#tpu.dimension_semantics<parallel>], iteration_bounds = array<i64: 2>, scalar_prefetch = 0 : i64, scratch_operands = 0 : i64, tpu.core_type = #tpu.core_type<tc>, window_params = [{transform_indices = @transform_0, window_bounds = array<i64: 1, 256, 128>}, {pipeline_mode = #tpu.pipeline_mode<synchronous>, transform_indices = @transform_1, window_bounds = array<i64: 1152, 128>}, {pipeline_mode = #tpu.pipeline_mode<synchronous>, transform_indices = @transform_2, window_bounds = array<i64: 1, 128>}, {pipeline_mode = #tpu.pipeline_mode<synchronous>, transform_indices = @transform_3, window_bounds = array<i64: 1, 128>}, {transform_indices = @transform_4, window_bounds = array<i64: 1, 256, 128>}, {transform_indices = @transform_5, window_bounds = array<i64: 1, 2, 128>}]} {
    %c0 = arith.constant 0 : index
    %c0_0 = arith.constant 0 : index
    %c0_1 = arith.constant 0 : index
    %0 = vector.load %arg1[%c0, %c0_0, %c0_1] : memref<1x256x128xbf16, #tpu.memory_space<vmem>>, vector<1x256x128xbf16>
    %1 = vector.shape_cast %0 : vector<1x256x128xbf16> to vector<256x128xbf16>
    %2 = arith.extf %1 : vector<256x128xbf16> to vector<256x128xf32>
    %c0_2 = arith.constant 0 : index
    %c0_3 = arith.constant 0 : index
    %3 = vector.load %arg3[%c0_2, %c0_3] : memref<1x128xf32, #tpu.memory_space<vmem>>, vector<1x128xf32>
    %4 = vector.broadcast %3 : vector<1x128xf32> to vector<256x128xf32>
    %5 = arith.mulf %2, %4 : vector<256x128xf32>
    %c0_4 = arith.constant 0 : index
    %c0_5 = arith.constant 0 : index
    %6 = vector.load %arg4[%c0_4, %c0_5] : memref<1x128xf32, #tpu.memory_space<vmem>>, vector<1x128xf32>
    %7 = vector.broadcast %6 : vector<1x128xf32> to vector<256x128xf32>
    %8 = arith.addf %5, %7 : vector<256x128xf32>
    %cst = arith.constant 0.000000e+00 : f32
    %9 = vector.broadcast %cst : f32 to vector<256x128xf32>
    %10 = arith.maximumf %8, %9 : vector<256x128xf32>
    %cst_6 = arith.constant 0.000000e+00 : f32
    %11 = vector.broadcast %cst_6 : f32 to vector<16x128xf32>
    %12 = tpu.concatenate %11, %10, %11 in 0 : vector<16x128xf32>, vector<256x128xf32>, vector<16x128xf32> -> vector<288x128xf32>
    %13 = tpu.iota {dimensions = array<i32: 0>} : vector<288x1xi32>
    %c16_i32 = arith.constant 16 : i32
    %c0_i32 = arith.constant 0 : i32
    %14 = arith.cmpi eq, %c16_i32, %c0_i32 : i32
    %c1_i32 = arith.constant 1 : i32
    %15 = arith.select %14, %c1_i32, %c16_i32 : i32
    %16 = vector.broadcast %15 : i32 to vector<288x1xi32>
    %17 = arith.remsi %13, %16 : vector<288x1xi32>
    %c0_i32_7 = arith.constant 0 : i32
    %18 = vector.broadcast %c0_i32_7 : i32 to vector<288x1xi32>
    %19 = arith.cmpi ne, %17, %18 : vector<288x1xi32>
    %c0_i32_8 = arith.constant 0 : i32
    %20 = vector.broadcast %c0_i32_8 : i32 to vector<288x1xi32>
    %21 = arith.cmpi slt, %17, %20 : vector<288x1xi32>
    %c0_i32_9 = arith.constant 0 : i32
    %22 = arith.cmpi slt, %15, %c0_i32_9 : i32
    %23 = vector.broadcast %22 : i1 to vector<288x1xi1>
    %24 = vector.broadcast %23 : vector<288x1xi1> to vector<288x1xi1>
    %25 = arith.xori %21, %24 : vector<288x1xi1>
    %26 = arith.andi %25, %19 : vector<288x1xi1>
    %27 = vector.broadcast %15 : i32 to vector<288x1xi32>
    %28 = arith.addi %17, %27 : vector<288x1xi32>
    %29 = arith.select %26, %28, %17 : vector<288x1xi1>, vector<288x1xi32>
    %c0_i32_10 = arith.constant 0 : i32
    %30 = vector.broadcast %c0_i32_10 : i32 to vector<288x1xi32>
    %31 = arith.cmpi eq, %29, %30 : vector<288x1xi32>
    %c1_i32_11 = arith.constant 1 : i32
    %32 = tpu.dynamic_rotate %12 by %c1_i32_11 dim 0 : vector<288x128xf32>, i32 -> vector<288x128xf32>
    %cst_12 = arith.constant 0.000000e+00 : f32
    %33 = vector.shape_cast %31 : vector<288x1xi1> to vector<288x1xi1>
    %34 = vector.broadcast %33 : vector<288x1xi1> to vector<288x128xi1>
    %35 = vector.broadcast %cst_12 : f32 to vector<288x128xf32>
    %36 = arith.select %34, %35, %32 : vector<288x128xi1>, vector<288x128xf32>
    %c15_i32 = arith.constant 15 : i32
    %37 = vector.broadcast %c15_i32 : i32 to vector<288x1xi32>
    %38 = arith.cmpi eq, %29, %37 : vector<288x1xi32>
    %c287_i32 = arith.constant 287 : i32
    %39 = tpu.dynamic_rotate %12 by %c287_i32 dim 0 : vector<288x128xf32>, i32 -> vector<288x128xf32>
    %cst_13 = arith.constant 0.000000e+00 : f32
    %40 = vector.shape_cast %38 : vector<288x1xi1> to vector<288x1xi1>
    %41 = vector.broadcast %40 : vector<288x1xi1> to vector<288x128xi1>
    %42 = vector.broadcast %cst_13 : f32 to vector<288x128xf32>
    %43 = arith.select %41, %42, %39 : vector<288x128xi1>, vector<288x128xf32>
    %44 = arith.truncf %36 : vector<288x128xf32> to vector<288x128xbf16>
    %45 = arith.truncf %12 : vector<288x128xf32> to vector<288x128xbf16>
    %46 = arith.truncf %43 : vector<288x128xf32> to vector<288x128xbf16>
    %47 = vector.extract_strided_slice %44 {offsets = [0, 0], sizes = [256, 128], strides = [1, 1]} : vector<288x128xbf16> to vector<256x128xbf16>
    %48 = vector.extract_strided_slice %45 {offsets = [0, 0], sizes = [256, 128], strides = [1, 1]} : vector<288x128xbf16> to vector<256x128xbf16>
    %49 = vector.extract_strided_slice %46 {offsets = [0, 0], sizes = [256, 128], strides = [1, 1]} : vector<288x128xbf16> to vector<256x128xbf16>
    %50 = vector.extract_strided_slice %44 {offsets = [16, 0], sizes = [256, 128], strides = [1, 1]} : vector<288x128xbf16> to vector<256x128xbf16>
    %51 = vector.extract_strided_slice %45 {offsets = [16, 0], sizes = [256, 128], strides = [1, 1]} : vector<288x128xbf16> to vector<256x128xbf16>
    %52 = vector.extract_strided_slice %46 {offsets = [16, 0], sizes = [256, 128], strides = [1, 1]} : vector<288x128xbf16> to vector<256x128xbf16>
    %53 = vector.extract_strided_slice %44 {offsets = [32, 0], sizes = [256, 128], strides = [1, 1]} : vector<288x128xbf16> to vector<256x128xbf16>
    %54 = vector.extract_strided_slice %45 {offsets = [32, 0], sizes = [256, 128], strides = [1, 1]} : vector<288x128xbf16> to vector<256x128xbf16>
    %55 = vector.extract_strided_slice %46 {offsets = [32, 0], sizes = [256, 128], strides = [1, 1]} : vector<288x128xbf16> to vector<256x128xbf16>
    %56 = tpu.concatenate %47, %48, %49, %50, %51, %52, %53, %54, %55 in 1 : vector<256x128xbf16>, vector<256x128xbf16>, vector<256x128xbf16>, vector<256x128xbf16>, vector<256x128xbf16>, vector<256x128xbf16>, vector<256x128xbf16>, vector<256x128xbf16>, vector<256x128xbf16> -> vector<256x1152xbf16>
    %c0_14 = arith.constant 0 : index
    %c0_15 = arith.constant 0 : index
    %57 = vector.load %arg2[%c0_14, %c0_15] : memref<1152x128xbf16, #tpu.memory_space<vmem>>, vector<1152x128xbf16>
    %cst_16 = arith.constant dense<0.000000e+00> : vector<256x128xf32>
    %58 = tpu.matmul %56, %57, %cst_16 {dimension_numbers = #tpu.dot_dimension_numbers<[1], [0], [0], [1], [0, 0, 1, 1], [], []>} : vector<256x1152xbf16>, vector<1152x128xbf16>, vector<256x128xf32> -> vector<256x128xf32>
    %59 = arith.truncf %58 : vector<256x128xf32> to vector<256x128xbf16>
    %c0_17 = arith.constant 0 : index
    %c0_18 = arith.constant 0 : index
    %c0_19 = arith.constant 0 : index
    %60 = vector.load %arg5[%c0_17, %c0_18, %c0_19] : memref<1x256x128xbf16, #tpu.memory_space<vmem>>, vector<1x256x128xbf16>
    %61 = vector.shape_cast %60 : vector<1x256x128xbf16> to vector<256x128xbf16>
    %62 = vector.shape_cast %59 : vector<256x128xbf16> to vector<1x256x128xbf16>
    tpu.vector_store %arg5[%c0_17, %c0_18, %c0_19], %62 {strides = array<i32>} : memref<1x256x128xbf16, #tpu.memory_space<vmem>>, vector<1x256x128xbf16>,
    %cst_20 = arith.constant dense<0.000000e+00> : vector<128xf32>
    %63 = vector.multi_reduction <add>, %58, %cst_20 [0] : vector<256x128xf32> to vector<128xf32>
    %64 = vector.shape_cast %63 : vector<128xf32> to vector<1x128xf32>
    %65 = arith.mulf %58, %58 : vector<256x128xf32>
    %cst_21 = arith.constant dense<0.000000e+00> : vector<128xf32>
    %66 = vector.multi_reduction <add>, %65, %cst_21 [0] : vector<256x128xf32> to vector<128xf32>
    %67 = vector.shape_cast %66 : vector<128xf32> to vector<1x128xf32>
    %68 = tpu.concatenate %64, %67 in 0 : vector<1x128xf32>, vector<1x128xf32> -> vector<2x128xf32>
    %c0_22 = arith.constant 0 : index
    %c0_23 = arith.constant 0 : index
    %c0_24 = arith.constant 0 : index
    %69 = vector.load %arg6[%c0_22, %c0_23, %c0_24] : memref<1x2x128xf32, #tpu.memory_space<vmem>>, vector<1x2x128xf32>
    %70 = vector.shape_cast %69 : vector<1x2x128xf32> to vector<2x128xf32>
    %71 = vector.shape_cast %68 : vector<2x128xf32> to vector<1x2x128xf32>
    tpu.vector_store %arg6[%c0_22, %c0_23, %c0_24], %71 {strides = array<i32>} : memref<1x2x128xf32, #tpu.memory_space<vmem>>, vector<1x2x128xf32>,
    return
  }
  func.func @transform_0(%arg0: i32) -> (i32, i32, i32) {
    %c0_i32 = arith.constant 0 : i32
    %c0_i32_0 = arith.constant 0 : i32
    %c0_i32_1 = arith.constant 0 : i32
    return %arg0, %c0_i32, %c0_i32_0 : i32, i32, i32
  }
  func.func @transform_1(%arg0: i32) -> (i32, i32) {
    %c0_i32 = arith.constant 0 : i32
    %c0_i32_0 = arith.constant 0 : i32
    %c0_i32_1 = arith.constant 0 : i32
    return %c0_i32, %c0_i32_0 : i32, i32
  }
  func.func @transform_2(%arg0: i32) -> (i32, i32) {
    %c0_i32 = arith.constant 0 : i32
    %c0_i32_0 = arith.constant 0 : i32
    %c0_i32_1 = arith.constant 0 : i32
    return %c0_i32, %c0_i32_0 : i32, i32
  }
  func.func @transform_3(%arg0: i32) -> (i32, i32) {
    %c0_i32 = arith.constant 0 : i32
    %c0_i32_0 = arith.constant 0 : i32
    %c0_i32_1 = arith.constant 0 : i32
    return %c0_i32, %c0_i32_0 : i32, i32
  }
  func.func @transform_4(%arg0: i32) -> (i32, i32, i32) {
    %c0_i32 = arith.constant 0 : i32
    %c0_i32_0 = arith.constant 0 : i32
    %c0_i32_1 = arith.constant 0 : i32
    return %arg0, %c0_i32, %c0_i32_0 : i32, i32, i32
  }
  func.func @transform_5(%arg0: i32) -> (i32, i32, i32) {
    %c0_i32 = arith.constant 0 : i32
    %c0_i32_0 = arith.constant 0 : i32
    %c0_i32_1 = arith.constant 0 : i32
    return %arg0, %c0_i32, %c0_i32_0 : i32, i32, i32
  }
}

module attributes {stable_mosaic.version = 11 : i64} {
  func.func @_conv1x1_kernel(%arg0: i32, %arg1: memref<512x128xbf16, #tpu.memory_space<vmem>>, %arg2: memref<128x128xbf16, #tpu.memory_space<vmem>>, %arg3: memref<1x128xf32, #tpu.memory_space<vmem>>, %arg4: memref<1x128xf32, #tpu.memory_space<vmem>>, %arg5: memref<512x128xbf16, #tpu.memory_space<vmem>>, %arg6: memref<1x2x128xf32, #tpu.memory_space<vmem>>) attributes {dimension_semantics = [#tpu.dimension_semantics<parallel>], iteration_bounds = array<i64: 1>, scalar_prefetch = 0 : i64, scratch_operands = 0 : i64, tpu.core_type = #tpu.core_type<tc>, window_params = [{transform_indices = @transform_0, window_bounds = array<i64: 512, 128>}, {pipeline_mode = #tpu.pipeline_mode<synchronous>, transform_indices = @transform_1, window_bounds = array<i64: 128, 128>}, {pipeline_mode = #tpu.pipeline_mode<synchronous>, transform_indices = @transform_2, window_bounds = array<i64: 1, 128>}, {pipeline_mode = #tpu.pipeline_mode<synchronous>, transform_indices = @transform_3, window_bounds = array<i64: 1, 128>}, {transform_indices = @transform_4, window_bounds = array<i64: 512, 128>}, {transform_indices = @transform_5, window_bounds = array<i64: 1, 2, 128>}]} {
    %c0 = arith.constant 0 : index
    %c0_0 = arith.constant 0 : index
    %0 = vector.load %arg1[%c0, %c0_0] : memref<512x128xbf16, #tpu.memory_space<vmem>>, vector<512x128xbf16>
    %1 = arith.extf %0 : vector<512x128xbf16> to vector<512x128xf32>
    %c0_1 = arith.constant 0 : index
    %c0_2 = arith.constant 0 : index
    %2 = vector.load %arg3[%c0_1, %c0_2] : memref<1x128xf32, #tpu.memory_space<vmem>>, vector<1x128xf32>
    %3 = vector.broadcast %2 : vector<1x128xf32> to vector<512x128xf32>
    %4 = arith.mulf %1, %3 : vector<512x128xf32>
    %c0_3 = arith.constant 0 : index
    %c0_4 = arith.constant 0 : index
    %5 = vector.load %arg4[%c0_3, %c0_4] : memref<1x128xf32, #tpu.memory_space<vmem>>, vector<1x128xf32>
    %6 = vector.broadcast %5 : vector<1x128xf32> to vector<512x128xf32>
    %7 = arith.addf %4, %6 : vector<512x128xf32>
    %cst = arith.constant 0.000000e+00 : f32
    %8 = vector.broadcast %cst : f32 to vector<512x128xf32>
    %9 = arith.maximumf %7, %8 : vector<512x128xf32>
    %10 = arith.truncf %9 : vector<512x128xf32> to vector<512x128xbf16>
    %c0_5 = arith.constant 0 : index
    %c0_6 = arith.constant 0 : index
    %11 = vector.load %arg2[%c0_5, %c0_6] : memref<128x128xbf16, #tpu.memory_space<vmem>>, vector<128x128xbf16>
    %cst_7 = arith.constant dense<0.000000e+00> : vector<512x128xf32>
    %12 = tpu.matmul %10, %11, %cst_7 {dimension_numbers = #tpu.dot_dimension_numbers<[1], [0], [0], [1], [0, 0, 1, 1], [], []>} : vector<512x128xbf16>, vector<128x128xbf16>, vector<512x128xf32> -> vector<512x128xf32>
    %13 = arith.truncf %12 : vector<512x128xf32> to vector<512x128xbf16>
    %c0_8 = arith.constant 0 : index
    %c0_9 = arith.constant 0 : index
    %14 = vector.load %arg5[%c0_8, %c0_9] : memref<512x128xbf16, #tpu.memory_space<vmem>>, vector<512x128xbf16>
    tpu.vector_store %arg5[%c0_8, %c0_9], %13 {strides = array<i32>} : memref<512x128xbf16, #tpu.memory_space<vmem>>, vector<512x128xbf16>,
    %cst_10 = arith.constant dense<0.000000e+00> : vector<128xf32>
    %15 = vector.multi_reduction <add>, %12, %cst_10 [0] : vector<512x128xf32> to vector<128xf32>
    %16 = vector.shape_cast %15 : vector<128xf32> to vector<1x128xf32>
    %17 = arith.mulf %12, %12 : vector<512x128xf32>
    %cst_11 = arith.constant dense<0.000000e+00> : vector<128xf32>
    %18 = vector.multi_reduction <add>, %17, %cst_11 [0] : vector<512x128xf32> to vector<128xf32>
    %19 = vector.shape_cast %18 : vector<128xf32> to vector<1x128xf32>
    %20 = tpu.concatenate %16, %19 in 0 : vector<1x128xf32>, vector<1x128xf32> -> vector<2x128xf32>
    %c0_12 = arith.constant 0 : index
    %c0_13 = arith.constant 0 : index
    %c0_14 = arith.constant 0 : index
    %21 = vector.load %arg6[%c0_12, %c0_13, %c0_14] : memref<1x2x128xf32, #tpu.memory_space<vmem>>, vector<1x2x128xf32>
    %22 = vector.shape_cast %21 : vector<1x2x128xf32> to vector<2x128xf32>
    %23 = vector.shape_cast %20 : vector<2x128xf32> to vector<1x2x128xf32>
    tpu.vector_store %arg6[%c0_12, %c0_13, %c0_14], %23 {strides = array<i32>} : memref<1x2x128xf32, #tpu.memory_space<vmem>>, vector<1x2x128xf32>,
    return
  }
  func.func @transform_0(%arg0: i32) -> (i32, i32) {
    %c0_i32 = arith.constant 0 : i32
    %c0_i32_0 = arith.constant 0 : i32
    return %arg0, %c0_i32 : i32, i32
  }
  func.func @transform_1(%arg0: i32) -> (i32, i32) {
    %c0_i32 = arith.constant 0 : i32
    %c0_i32_0 = arith.constant 0 : i32
    %c0_i32_1 = arith.constant 0 : i32
    return %c0_i32, %c0_i32_0 : i32, i32
  }
  func.func @transform_2(%arg0: i32) -> (i32, i32) {
    %c0_i32 = arith.constant 0 : i32
    %c0_i32_0 = arith.constant 0 : i32
    %c0_i32_1 = arith.constant 0 : i32
    return %c0_i32, %c0_i32_0 : i32, i32
  }
  func.func @transform_3(%arg0: i32) -> (i32, i32) {
    %c0_i32 = arith.constant 0 : i32
    %c0_i32_0 = arith.constant 0 : i32
    %c0_i32_1 = arith.constant 0 : i32
    return %c0_i32, %c0_i32_0 : i32, i32
  }
  func.func @transform_4(%arg0: i32) -> (i32, i32) {
    %c0_i32 = arith.constant 0 : i32
    %c0_i32_0 = arith.constant 0 : i32
    return %arg0, %c0_i32 : i32, i32
  }
  func.func @transform_5(%arg0: i32) -> (i32, i32, i32) {
    %c0_i32 = arith.constant 0 : i32
    %c0_i32_0 = arith.constant 0 : i32
    %c0_i32_1 = arith.constant 0 : i32
    return %arg0, %c0_i32, %c0_i32_0 : i32, i32, i32
  }
}

module attributes {stable_mosaic.version = 11 : i64} {
  func.func @_bn_add_relu_kernel(%arg0: i32, %arg1: memref<512x128xbf16, #tpu.memory_space<vmem>>, %arg2: memref<1x128xf32, #tpu.memory_space<vmem>>, %arg3: memref<1x128xf32, #tpu.memory_space<vmem>>, %arg4: memref<512x128xf32, #tpu.memory_space<vmem>>, %arg5: memref<512x128xf32, #tpu.memory_space<vmem>>) attributes {dimension_semantics = [#tpu.dimension_semantics<parallel>], iteration_bounds = array<i64: 1>, scalar_prefetch = 0 : i64, scratch_operands = 0 : i64, tpu.core_type = #tpu.core_type<tc>, window_params = [{transform_indices = @transform_0, window_bounds = array<i64: 512, 128>}, {pipeline_mode = #tpu.pipeline_mode<synchronous>, transform_indices = @transform_1, window_bounds = array<i64: 1, 128>}, {pipeline_mode = #tpu.pipeline_mode<synchronous>, transform_indices = @transform_2, window_bounds = array<i64: 1, 128>}, {transform_indices = @transform_3, window_bounds = array<i64: 512, 128>}, {transform_indices = @transform_4, window_bounds = array<i64: 512, 128>}]} {
    %c0 = arith.constant 0 : index
    %c0_0 = arith.constant 0 : index
    %0 = vector.load %arg1[%c0, %c0_0] : memref<512x128xbf16, #tpu.memory_space<vmem>>, vector<512x128xbf16>
    %1 = arith.extf %0 : vector<512x128xbf16> to vector<512x128xf32>
    %c0_1 = arith.constant 0 : index
    %c0_2 = arith.constant 0 : index
    %2 = vector.load %arg2[%c0_1, %c0_2] : memref<1x128xf32, #tpu.memory_space<vmem>>, vector<1x128xf32>
    %3 = vector.broadcast %2 : vector<1x128xf32> to vector<512x128xf32>
    %4 = arith.mulf %1, %3 : vector<512x128xf32>
    %c0_3 = arith.constant 0 : index
    %c0_4 = arith.constant 0 : index
    %5 = vector.load %arg3[%c0_3, %c0_4] : memref<1x128xf32, #tpu.memory_space<vmem>>, vector<1x128xf32>
    %6 = vector.broadcast %5 : vector<1x128xf32> to vector<512x128xf32>
    %7 = arith.addf %4, %6 : vector<512x128xf32>
    %c0_5 = arith.constant 0 : index
    %c0_6 = arith.constant 0 : index
    %8 = vector.load %arg4[%c0_5, %c0_6] : memref<512x128xf32, #tpu.memory_space<vmem>>, vector<512x128xf32>
    %9 = arith.addf %7, %8 : vector<512x128xf32>
    %cst = arith.constant 0.000000e+00 : f32
    %10 = vector.broadcast %cst : f32 to vector<512x128xf32>
    %11 = arith.maximumf %9, %10 : vector<512x128xf32>
    %c0_7 = arith.constant 0 : index
    %c0_8 = arith.constant 0 : index
    %12 = vector.load %arg5[%c0_7, %c0_8] : memref<512x128xf32, #tpu.memory_space<vmem>>, vector<512x128xf32>
    tpu.vector_store %arg5[%c0_7, %c0_8], %11 {strides = array<i32>} : memref<512x128xf32, #tpu.memory_space<vmem>>, vector<512x128xf32>,
    return
  }
  func.func @transform_0(%arg0: i32) -> (i32, i32) {
    %c0_i32 = arith.constant 0 : i32
    %c0_i32_0 = arith.constant 0 : i32
    return %arg0, %c0_i32 : i32, i32
  }
  func.func @transform_1(%arg0: i32) -> (i32, i32) {
    %c0_i32 = arith.constant 0 : i32
    %c0_i32_0 = arith.constant 0 : i32
    %c0_i32_1 = arith.constant 0 : i32
    return %c0_i32, %c0_i32_0 : i32, i32
  }
  func.func @transform_2(%arg0: i32) -> (i32, i32) {
    %c0_i32 = arith.constant 0 : i32
    %c0_i32_0 = arith.constant 0 : i32
    %c0_i32_1 = arith.constant 0 : i32
    return %c0_i32, %c0_i32_0 : i32, i32
  }
  func.func @transform_3(%arg0: i32) -> (i32, i32) {
    %c0_i32 = arith.constant 0 : i32
    %c0_i32_0 = arith.constant 0 : i32
    return %arg0, %c0_i32 : i32, i32
  }
  func.func @transform_4(%arg0: i32) -> (i32, i32) {
    %c0_i32 = arith.constant 0 : i32
    %c0_i32_0 = arith.constant 0 : i32
    return %arg0, %c0_i32 : i32, i32
  }
}

</mosaic_0001>

<llo_original>
// kernel: basic_block_forward.7
$region0: #{basic_block_forward.7}
  #allocation0 [shape = 'u32[]', space=smem, size = 0x4, offset = 0x4, fixed_abs, tag = 'smem constant byte address 0x4 - core index']
  #allocation1 [shape = 'u32[144,128]{1,0:T(1,128)}', space=vmem, size = 0x12000, scoped, tag = 'internal scratch']
  %s0 = inlined_call_operand.vmem [shape: bf16[512,128], index: 0, kind: input, shape index: {}]
  %s1 = inlined_call_operand.vmem [shape: f32[1,128], index: 1, kind: input, shape index: {}]
  %s2 = inlined_call_operand.vmem [shape: f32[1,128], index: 2, kind: input, shape index: {}]
  %s3 = inlined_call_operand.vmem [shape: f32[512,128], index: 3, kind: input, shape index: {}]
  %s4 = inlined_call_operand.vmem [shape: f32[512,128], index: 4, kind: output, shape index: {}]
  %s5 = sld [smem:[#allocation0]]
  $region26: #{basic_block_forward.7} parent=0
    _
  %s7 = ssub.s32 1, %s5
  %s8 = scalar_select 0, %s7, %s5
  // Predicated region
  $region2: #{basic_block_forward.7} parent=0 // pred_check
    _
  $region3: #{basic_block_forward.7} parent=0 // pred_check_branch
    %10 = sbr.rel (0) target = $region5
  $region4: #{basic_block_forward.7} parent=0 // pred_region
    _
  $region5: #{basic_block_forward.7} parent=0 // pred_fallthru
    _
  // Predicated region
  $region6: #{basic_block_forward.7} parent=0 // pred_check
    _
  $region7: #{basic_block_forward.7} parent=0 // pred_check_branch
    %12 = sbr.rel (0) target = $region9
  $region8: #{basic_block_forward.7} parent=0 // pred_region
    _
  $region9: #{basic_block_forward.7} parent=0 // pred_fallthru
    _
  // Predicated region
  $region10: #{basic_block_forward.7} parent=0 // pred_check
    _
  $region11: #{basic_block_forward.7} parent=0 // pred_check_branch
    %14 = sbr.rel (0) target = $region13
  $region12: #{basic_block_forward.7} parent=0 // pred_region
    _
  $region13: #{basic_block_forward.7} parent=0 // pred_fallthru
    _
  // Predicated region
  $region14: #{basic_block_forward.7} parent=0 // pred_check
    _
  $region15: #{basic_block_forward.7} parent=0 // pred_check_branch
    %16 = sbr.rel (0) target = $region17
  $region16: #{basic_block_forward.7} parent=0 // pred_region
    _
  $region17: #{basic_block_forward.7} parent=0 // pred_fallthru
    _
  %v17 = vld [vmem:[%s0] sm:$0xf]
  %v18 = vld [vmem:[%s0 + $0x4] sm:$0xf]
  %v19 = vld [vmem:[%s0 + $0x8] sm:$0xf]
  %v20 = vld [vmem:[%s0 + $0xc] sm:$0xf]
  %v21 = vld [vmem:[%s0 + $0x10] sm:$0xf]
  %v22 = vld [vmem:[%s0 + $0x14] sm:$0xf]
  %v23 = vld [vmem:[%s0 + $0x18] sm:$0xf]
  %v24 = vld [vmem:[%s0 + $0x1c] sm:$0xf]
  %v25 = vld [vmem:[%s0 + $0x20] sm:$0xf]
  %v26 = vld [vmem:[%s0 + $0x24] sm:$0xf]
  %v27 = vld [vmem:[%s0 + $0x28] sm:$0xf]
  %v28 = vld [vmem:[%s0 + $0x2c] sm:$0xf]
  %v29 = vld [vmem:[%s0 + $0x30] sm:$0xf]
  %v30 = vld [vmem:[%s0 + $0x34] sm:$0xf]
  %v31 = vld [vmem:[%s0 + $0x38] sm:$0xf]
  %v32 = vld [vmem:[%s0 + $0x3c] sm:$0xf]
  %v33 = vld [vmem:[%s0 + $0x40] sm:$0xf]
  %v34 = vld [vmem:[%s0 + $0x44] sm:$0xf]
  %v35 = vld [vmem:[%s0 + $0x48] sm:$0xf]
  %v36 = vld [vmem:[%s0 + $0x4c] sm:$0xf]
  %v37 = vld [vmem:[%s0 + $0x50] sm:$0xf]
  %v38 = vld [vmem:[%s0 + $0x54] sm:$0xf]
  %v39 = vld [vmem:[%s0 + $0x58] sm:$0xf]
  %v40 = vld [vmem:[%s0 + $0x5c] sm:$0xf]
  %v41 = vld [vmem:[%s0 + $0x60] sm:$0xf]
  %v42 = vld [vmem:[%s0 + $0x64] sm:$0xf]
  %v43 = vld [vmem:[%s0 + $0x68] sm:$0xf]
  %v44 = vld [vmem:[%s0 + $0x6c] sm:$0xf]
  %v45 = vld [vmem:[%s0 + $0x70] sm:$0xf]
  %v46 = vld [vmem:[%s0 + $0x74] sm:$0xf]
  %v47 = vld [vmem:[%s0 + $0x78] sm:$0xf]
  %v48 = vld [vmem:[%s0 + $0x7c] sm:$0xf]
  %v49 = vld [vmem:[%s0 + $0x80] sm:$0xf]
  %v50 = vld [vmem:[%s0 + $0x84] sm:$0xf]
  %v51 = vld [vmem:[%s0 + $0x88] sm:$0xf]
  %v52 = vld [vmem:[%s0 + $0x8c] sm:$0xf]
  %v53 = vld [vmem:[%s0 + $0x90] sm:$0xf]
  %v54 = vld [vmem:[%s0 + $0x94] sm:$0xf]
  %v55 = vld [vmem:[%s0 + $0x98] sm:$0xf]
  %v56 = vld [vmem:[%s0 + $0x9c] sm:$0xf]
  %v57 = vld [vmem:[%s0 + $0xa0] sm:$0xf]
  %v58 = vld [vmem:[%s0 + $0xa4] sm:$0xf]
  %v59 = vld [vmem:[%s0 + $0xa8] sm:$0xf]
  %v60 = vld [vmem:[%s0 + $0xac] sm:$0xf]
  %v61 = vld [vmem:[%s0 + $0xb0] sm:$0xf]
  %v62 = vld [vmem:[%s0 + $0xb4] sm:$0xf]
  %v63 = vld [vmem:[%s0 + $0xb8] sm:$0xf]
  %v64 = vld [vmem:[%s0 + $0xbc] sm:$0xf]
  %v65 = vld [vmem:[%s0 + $0xc0] sm:$0xf]
  %v66 = vld [vmem:[%s0 + $0xc4] sm:$0xf]
  %v67 = vld [vmem:[%s0 + $0xc8] sm:$0xf]
  %v68 = vld [vmem:[%s0 + $0xcc] sm:$0xf]
  %v69 = vld [vmem:[%s0 + $0xd0] sm:$0xf]
  %v70 = vld [vmem:[%s0 + $0xd4] sm:$0xf]
  %v71 = vld [vmem:[%s0 + $0xd8] sm:$0xf]
  %v72 = vld [vmem:[%s0 + $0xdc] sm:$0xf]
  %v73 = vld [vmem:[%s0 + $0xe0] sm:$0xf]
  %v74 = vld [vmem:[%s0 + $0xe4] sm:$0xf]
  %v75 = vld [vmem:[%s0 + $0xe8] sm:$0xf]
  %v76 = vld [vmem:[%s0 + $0xec] sm:$0xf]
  %v77 = vld [vmem:[%s0 + $0xf0] sm:$0xf]
  %v78 = vld [vmem:[%s0 + $0xf4] sm:$0xf]
  %v79 = vld [vmem:[%s0 + $0xf8] sm:$0xf]
  %v80 = vld [vmem:[%s0 + $0xfc] sm:$0xf]
  %v81 = vunpack.c.l.bf16 %v17
  %v82 = vunpack.c.l.bf16 %v18
  %v83 = vunpack.c.l.bf16 %v19
  %v84 = vunpack.c.l.bf16 %v20
  %v85 = vunpack.c.l.bf16 %v21
  %v86 = vunpack.c.l.bf16 %v22
  %v87 = vunpack.c.l.bf16 %v23
  %v88 = vunpack.c.l.bf16 %v24
  %v89 = vunpack.c.l.bf16 %v25
  %v90 = vunpack.c.l.bf16 %v26
  %v91 = vunpack.c.l.bf16 %v27
  %v92 = vunpack.c.l.bf16 %v28
  %v93 = vunpack.c.l.bf16 %v29
  %v94 = vunpack.c.l.bf16 %v30
  %v95 = vunpack.c.l.bf16 %v31
  %v96 = vunpack.c.l.bf16 %v32
  %v97 = vunpack.c.l.bf16 %v33
  %v98 = vunpack.c.l.bf16 %v34
  %v99 = vunpack.c.l.bf16 %v35
  %v100 = vunpack.c.l.bf16 %v36
  %v101 = vunpack.c.l.bf16 %v37
  %v102 = vunpack.c.l.bf16 %v38
  %v103 = vunpack.c.l.bf16 %v39
  %v104 = vunpack.c.l.bf16 %v40
  %v105 = vunpack.c.l.bf16 %v41
  %v106 = vunpack.c.l.bf16 %v42
  %v107 = vunpack.c.l.bf16 %v43
  %v108 = vunpack.c.l.bf16 %v44
  %v109 = vunpack.c.l.bf16 %v45
  %v110 = vunpack.c.l.bf16 %v46
  %v111 = vunpack.c.l.bf16 %v47
  %v112 = vunpack.c.l.bf16 %v48
  %v113 = vunpack.c.l.bf16 %v49
  %v114 = vunpack.c.l.bf16 %v50
  %v115 = vunpack.c.l.bf16 %v51
  %v116 = vunpack.c.l.bf16 %v52
  %v117 = vunpack.c.l.bf16 %v53
  %v118 = vunpack.c.l.bf16 %v54
  %v119 = vunpack.c.l.bf16 %v55
  %v120 = vunpack.c.l.bf16 %v56
  %v121 = vunpack.c.l.bf16 %v57
  %v122 = vunpack.c.l.bf16 %v58
  %v123 = vunpack.c.l.bf16 %v59
  %v124 = vunpack.c.l.bf16 %v60
  %v125 = vunpack.c.l.bf16 %v61
  %v126 = vunpack.c.l.bf16 %v62
  %v127 = vunpack.c.l.bf16 %v63
  %v128 = vunpack.c.l.bf16 %v64
  %v129 = vunpack.c.l.bf16 %v65
  %v130 = vunpack.c.l.bf16 %v66
  %v131 = vunpack.c.l.bf16 %v67
  %v132 = vunpack.c.l.bf16 %v68
  %v133 = vunpack.c.l.bf16 %v69
  %v134 = vunpack.c.l.bf16 %v70
  %v135 = vunpack.c.l.bf16 %v71
  %v136 = vunpack.c.l.bf16 %v72
  %v137 = vunpack.c.l.bf16 %v73
  %v138 = vunpack.c.l.bf16 %v74
  %v139 = vunpack.c.l.bf16 %v75
  %v140 = vunpack.c.l.bf16 %v76
  %v141 = vunpack.c.l.bf16 %v77
  %v142 = vunpack.c.l.bf16 %v78
  %v143 = vunpack.c.l.bf16 %v79
  %v144 = vunpack.c.l.bf16 %v80
  %v145 = vld [vmem:[%s1] sm:$0x1]
  %v147 = vlaneseq
  %v148 = vshrl.u32 %v147, 7
  %v149 = vsub.s32 0, %v148
  %v150 = vrot.slane %v145, %v149
  %v152 = vmul.f32 %v81, %v150
  %v153 = vmul.f32 %v82, %v150
  %v154 = vmul.f32 %v83, %v150
  %v155 = vmul.f32 %v84, %v150
  %v156 = vmul.f32 %v85, %v150
  %v157 = vmul.f32 %v86, %v150
  %v158 = vmul.f32 %v87, %v150
  %v159 = vmul.f32 %v88, %v150
  %v160 = vmul.f32 %v89, %v150
  %v161 = vmul.f32 %v90, %v150
  %v162 = vmul.f32 %v91, %v150
  %v163 = vmul.f32 %v92, %v150
  %v164 = vmul.f32 %v93, %v150
  %v165 = vmul.f32 %v94, %v150
  %v166 = vmul.f32 %v95, %v150
  %v167 = vmul.f32 %v96, %v150
  %v168 = vmul.f32 %v97, %v150
  %v169 = vmul.f32 %v98, %v150
  %v170 = vmul.f32 %v99, %v150
  %v171 = vmul.f32 %v100, %v150
  %v172 = vmul.f32 %v101, %v150
  %v173 = vmul.f32 %v102, %v150
  %v174 = vmul.f32 %v103, %v150
  %v175 = vmul.f32 %v104, %v150
  %v176 = vmul.f32 %v105, %v150
  %v177 = vmul.f32 %v106, %v150
  %v178 = vmul.f32 %v107, %v150
  %v179 = vmul.f32 %v108, %v150
  %v180 = vmul.f32 %v109, %v150
  %v181 = vmul.f32 %v110, %v150
  %v182 = vmul.f32 %v111, %v150
  %v183 = vmul.f32 %v112, %v150
  %v184 = vmul.f32 %v113, %v150
  %v185 = vmul.f32 %v114, %v150
  %v186 = vmul.f32 %v115, %v150
  %v187 = vmul.f32 %v116, %v150
  %v188 = vmul.f32 %v117, %v150
  %v189 = vmul.f32 %v118, %v150
  %v190 = vmul.f32 %v119, %v150
  %v191 = vmul.f32 %v120, %v150
  %v192 = vmul.f32 %v121, %v150
  %v193 = vmul.f32 %v122, %v150
  %v194 = vmul.f32 %v123, %v150
  %v195 = vmul.f32 %v124, %v150
  %v196 = vmul.f32 %v125, %v150
  %v197 = vmul.f32 %v126, %v150
  %v198 = vmul.f32 %v127, %v150
  %v199 = vmul.f32 %v128, %v150
  %v200 = vmul.f32 %v129, %v150
  %v201 = vmul.f32 %v130, %v150
  %v202 = vmul.f32 %v131, %v150
  %v203 = vmul.f32 %v132, %v150
  %v204 = vmul.f32 %v133, %v150
  %v205 = vmul.f32 %v134, %v150
  %v206 = vmul.f32 %v135, %v150
  %v207 = vmul.f32 %v136, %v150
  %v208 = vmul.f32 %v137, %v150
  %v209 = vmul.f32 %v138, %v150
  %v210 = vmul.f32 %v139, %v150
  %v211 = vmul.f32 %v140, %v150
  %v212 = vmul.f32 %v141, %v150
  %v213 = vmul.f32 %v142, %v150
  %v214 = vmul.f32 %v143, %v150
  %v215 = vmul.f32 %v144, %v150
  %v216 = vld [vmem:[%s2] sm:$0x1]
  %v218 = vlaneseq
  %v219 = vshrl.u32 %v218, 7
  %v220 = vsub.s32 0, %v219
  %v221 = vrot.slane %v216, %v220
  %v223 = vadd.f32 %v152, %v221
  %v224 = vadd.f32 %v153, %v221
  %v225 = vadd.f32 %v154, %v221
  %v226 = vadd.f32 %v155, %v221
  %v227 = vadd.f32 %v156, %v221
  %v228 = vadd.f32 %v157, %v221
  %v229 = vadd.f32 %v158, %v221
  %v230 = vadd.f32 %v159, %v221
  %v231 = vadd.f32 %v160, %v221
  %v232 = vadd.f32 %v161, %v221
  %v233 = vadd.f32 %v162, %v221
  %v234 = vadd.f32 %v163, %v221
  %v235 = vadd.f32 %v164, %v221
  %v236 = vadd.f32 %v165, %v221
  %v237 = vadd.f32 %v166, %v221
  %v238 = vadd.f32 %v167, %v221
  %v239 = vadd.f32 %v168, %v221
  %v240 = vadd.f32 %v169, %v221
  %v241 = vadd.f32 %v170, %v221
  %v242 = vadd.f32 %v171, %v221
  %v243 = vadd.f32 %v172, %v221
  %v244 = vadd.f32 %v173, %v221
  %v245 = vadd.f32 %v174, %v221
  %v246 = vadd.f32 %v175, %v221
  %v247 = vadd.f32 %v176, %v221
  %v248 = vadd.f32 %v177, %v221
  %v249 = vadd.f32 %v178, %v221
  %v250 = vadd.f32 %v179, %v221
  %v251 = vadd.f32 %v180, %v221
  %v252 = vadd.f32 %v181, %v221
  %v253 = vadd.f32 %v182, %v221
  %v254 = vadd.f32 %v183, %v221
  %v255 = vadd.f32 %v184, %v221
  %v256 = vadd.f32 %v185, %v221
  %v257 = vadd.f32 %v186, %v221
  %v258 = vadd.f32 %v187, %v221
  %v259 = vadd.f32 %v188, %v221
  %v260 = vadd.f32 %v189, %v221
  %v261 = vadd.f32 %v190, %v221
  %v262 = vadd.f32 %v191, %v221
  %v263 = vadd.f32 %v192, %v221
  %v264 = vadd.f32 %v193, %v221
  %v265 = vadd.f32 %v194, %v221
  %v266 = vadd.f32 %v195, %v221
  %v267 = vadd.f32 %v196, %v221
  %v268 = vadd.f32 %v197, %v221
  %v269 = vadd.f32 %v198, %v221
  %v270 = vadd.f32 %v199, %v221
  %v271 = vadd.f32 %v200, %v221
  %v272 = vadd.f32 %v201, %v221
  %v273 = vadd.f32 %v202, %v221
  %v274 = vadd.f32 %v203, %v221
  %v275 = vadd.f32 %v204, %v221
  %v276 = vadd.f32 %v205, %v221
  %v277 = vadd.f32 %v206, %v221
  %v278 = vadd.f32 %v207, %v221
  %v279 = vadd.f32 %v208, %v221
  %v280 = vadd.f32 %v209, %v221
  %v281 = vadd.f32 %v210, %v221
  %v282 = vadd.f32 %v211, %v221
  %v283 = vadd.f32 %v212, %v221
  %v284 = vadd.f32 %v213, %v221
  %v285 = vadd.f32 %v214, %v221
  %v286 = vadd.f32 %v215, %v221
  %v287 = vld [vmem:[%s3] sm:$0xff]
  %v288 = vld [vmem:[%s3 + $0x8] sm:$0xff]
  %v289 = vld [vmem:[%s3 + $0x10] sm:$0xff]
  %v290 = vld [vmem:[%s3 + $0x18] sm:$0xff]
  %v291 = vld [vmem:[%s3 + $0x20] sm:$0xff]
  %v292 = vld [vmem:[%s3 + $0x28] sm:$0xff]
  %v293 = vld [vmem:[%s3 + $0x30] sm:$0xff]
  %v294 = vld [vmem:[%s3 + $0x38] sm:$0xff]
  %v295 = vld [vmem:[%s3 + $0x40] sm:$0xff]
  %v296 = vld [vmem:[%s3 + $0x48] sm:$0xff]
  %v297 = vld [vmem:[%s3 + $0x50] sm:$0xff]
  %v298 = vld [vmem:[%s3 + $0x58] sm:$0xff]
  %v299 = vld [vmem:[%s3 + $0x60] sm:$0xff]
  %v300 = vld [vmem:[%s3 + $0x68] sm:$0xff]
  %v301 = vld [vmem:[%s3 + $0x70] sm:$0xff]
  %v302 = vld [vmem:[%s3 + $0x78] sm:$0xff]
  %v303 = vld [vmem:[%s3 + $0x80] sm:$0xff]
  %v304 = vld [vmem:[%s3 + $0x88] sm:$0xff]
  %v305 = vld [vmem:[%s3 + $0x90] sm:$0xff]
  %v306 = vld [vmem:[%s3 + $0x98] sm:$0xff]
  %v307 = vld [vmem:[%s3 + $0xa0] sm:$0xff]
  %v308 = vld [vmem:[%s3 + $0xa8] sm:$0xff]
  %v309 = vld [vmem:[%s3 + $0xb0] sm:$0xff]
  %v310 = vld [vmem:[%s3 + $0xb8] sm:$0xff]
  %v311 = vld [vmem:[%s3 + $0xc0] sm:$0xff]
  %v312 = vld [vmem:[%s3 + $0xc8] sm:$0xff]
  %v313 = vld [vmem:[%s3 + $0xd0] sm:$0xff]
  %v314 = vld [vmem:[%s3 + $0xd8] sm:$0xff]
  %v315 = vld [vmem:[%s3 + $0xe0] sm:$0xff]
  %v316 = vld [vmem:[%s3 + $0xe8] sm:$0xff]
  %v317 = vld [vmem:[%s3 + $0xf0] sm:$0xff]
  %v318 = vld [vmem:[%s3 + $0xf8] sm:$0xff]
  %v319 = vld [vmem:[%s3 + $0x100] sm:$0xff]
  %v320 = vld [vmem:[%s3 + $0x108] sm:$0xff]
  %v321 = vld [vmem:[%s3 + $0x110] sm:$0xff]
  %v322 = vld [vmem:[%s3 + $0x118] sm:$0xff]
  %v323 = vld [vmem:[%s3 + $0x120] sm:$0xff]
  %v324 = vld [vmem:[%s3 + $0x128] sm:$0xff]
  %v325 = vld [vmem:[%s3 + $0x130] sm:$0xff]
  %v326 = vld [vmem:[%s3 + $0x138] sm:$0xff]
  %v327 = vld [vmem:[%s3 + $0x140] sm:$0xff]
  %v328 = vld [vmem:[%s3 + $0x148] sm:$0xff]
  %v329 = vld [vmem:[%s3 + $0x150] sm:$0xff]
  %v330 = vld [vmem:[%s3 + $0x158] sm:$0xff]
  %v331 = vld [vmem:[%s3 + $0x160] sm:$0xff]
  %v332 = vld [vmem:[%s3 + $0x168] sm:$0xff]
  %v333 = vld [vmem:[%s3 + $0x170] sm:$0xff]
  %v334 = vld [vmem:[%s3 + $0x178] sm:$0xff]
  %v335 = vld [vmem:[%s3 + $0x180] sm:$0xff]
  %v336 = vld [vmem:[%s3 + $0x188] sm:$0xff]
  %v337 = vld [vmem:[%s3 + $0x190] sm:$0xff]
  %v338 = vld [vmem:[%s3 + $0x198] sm:$0xff]
  %v339 = vld [vmem:[%s3 + $0x1a0] sm:$0xff]
  %v340 = vld [vmem:[%s3 + $0x1a8] sm:$0xff]
  %v341 = vld [vmem:[%s3 + $0x1b0] sm:$0xff]
  %v342 = vld [vmem:[%s3 + $0x1b8] sm:$0xff]
  %v343 = vld [vmem:[%s3 + $0x1c0] sm:$0xff]
  %v344 = vld [vmem:[%s3 + $0x1c8] sm:$0xff]
  %v345 = vld [vmem:[%s3 + $0x1d0] sm:$0xff]
  %v346 = vld [vmem:[%s3 + $0x1d8] sm:$0xff]
  %v347 = vld [vmem:[%s3 + $0x1e0] sm:$0xff]
  %v348 = vld [vmem:[%s3 + $0x1e8] sm:$0xff]
  %v349 = vld [vmem:[%s3 + $0x1f0] sm:$0xff]
  %v350 = vld [vmem:[%s3 + $0x1f8] sm:$0xff]
  %v351 = vadd.f32 %v223, %v287
  %v352 = vadd.f32 %v224, %v288
  %v353 = vadd.f32 %v225, %v289
  %v354 = vadd.f32 %v226, %v290
  %v355 = vadd.f32 %v227, %v291
  %v356 = vadd.f32 %v228, %v292
  %v357 = vadd.f32 %v229, %v293
  %v358 = vadd.f32 %v230, %v294
  %v359 = vadd.f32 %v231, %v295
  %v360 = vadd.f32 %v232, %v296
  %v361 = vadd.f32 %v233, %v297
  %v362 = vadd.f32 %v234, %v298
  %v363 = vadd.f32 %v235, %v299
  %v364 = vadd.f32 %v236, %v300
  %v365 = vadd.f32 %v237, %v301
  %v366 = vadd.f32 %v238, %v302
  %v367 = vadd.f32 %v239, %v303
  %v368 = vadd.f32 %v240, %v304
  %v369 = vadd.f32 %v241, %v305
  %v370 = vadd.f32 %v242, %v306
  %v371 = vadd.f32 %v243, %v307
  %v372 = vadd.f32 %v244, %v308
  %v373 = vadd.f32 %v245, %v309
  %v374 = vadd.f32 %v246, %v310
  %v375 = vadd.f32 %v247, %v311
  %v376 = vadd.f32 %v248, %v312
  %v377 = vadd.f32 %v249, %v313
  %v378 = vadd.f32 %v250, %v314
  %v379 = vadd.f32 %v251, %v315
  %v380 = vadd.f32 %v252, %v316
  %v381 = vadd.f32 %v253, %v317
  %v382 = vadd.f32 %v254, %v318
  %v383 = vadd.f32 %v255, %v319
  %v384 = vadd.f32 %v256, %v320
  %v385 = vadd.f32 %v257, %v321
  %v386 = vadd.f32 %v258, %v322
  %v387 = vadd.f32 %v259, %v323
  %v388 = vadd.f32 %v260, %v324
  %v389 = vadd.f32 %v261, %v325
  %v390 = vadd.f32 %v262, %v326
  %v391 = vadd.f32 %v263, %v327
  %v392 = vadd.f32 %v264, %v328
  %v393 = vadd.f32 %v265, %v329
  %v394 = vadd.f32 %v266, %v330
  %v395 = vadd.f32 %v267, %v331
  %v396 = vadd.f32 %v268, %v332
  %v397 = vadd.f32 %v269, %v333
  %v398 = vadd.f32 %v270, %v334
  %v399 = vadd.f32 %v271, %v335
  %v400 = vadd.f32 %v272, %v336
  %v401 = vadd.f32 %v273, %v337
  %v402 = vadd.f32 %v274, %v338
  %v403 = vadd.f32 %v275, %v339
  %v404 = vadd.f32 %v276, %v340
  %v405 = vadd.f32 %v277, %v341
  %v406 = vadd.f32 %v278, %v342
  %v407 = vadd.f32 %v279, %v343
  %v408 = vadd.f32 %v280, %v344
  %v409 = vadd.f32 %v281, %v345
  %v410 = vadd.f32 %v282, %v346
  %v411 = vadd.f32 %v283, %v347
  %v412 = vadd.f32 %v284, %v348
  %v413 = vadd.f32 %v285, %v349
  %v414 = vadd.f32 %v286, %v350
  %v415 = vmax.f32 %v351, 0.0
  %v416 = vmax.f32 %v352, 0.0
  %v417 = vmax.f32 %v353, 0.0
  %v418 = vmax.f32 %v354, 0.0
  %v419 = vmax.f32 %v355, 0.0
  %v420 = vmax.f32 %v356, 0.0
  %v421 = vmax.f32 %v357, 0.0
  %v422 = vmax.f32 %v358, 0.0
  %v423 = vmax.f32 %v359, 0.0
  %v424 = vmax.f32 %v360, 0.0
  %v425 = vmax.f32 %v361, 0.0
  %v426 = vmax.f32 %v362, 0.0
  %v427 = vmax.f32 %v363, 0.0
  %v428 = vmax.f32 %v364, 0.0
  %v429 = vmax.f32 %v365, 0.0
  %v430 = vmax.f32 %v366, 0.0
  %v431 = vmax.f32 %v367, 0.0
  %v432 = vmax.f32 %v368, 0.0
  %v433 = vmax.f32 %v369, 0.0
  %v434 = vmax.f32 %v370, 0.0
  %v435 = vmax.f32 %v371, 0.0
  %v436 = vmax.f32 %v372, 0.0
  %v437 = vmax.f32 %v373, 0.0
  %v438 = vmax.f32 %v374, 0.0
  %v439 = vmax.f32 %v375, 0.0
  %v440 = vmax.f32 %v376, 0.0
  %v441 = vmax.f32 %v377, 0.0
  %v442 = vmax.f32 %v378, 0.0
  %v443 = vmax.f32 %v379, 0.0
  %v444 = vmax.f32 %v380, 0.0
  %v445 = vmax.f32 %v381, 0.0
  %v446 = vmax.f32 %v382, 0.0
  %v447 = vmax.f32 %v383, 0.0
  %v448 = vmax.f32 %v384, 0.0
  %v449 = vmax.f32 %v385, 0.0
  %v450 = vmax.f32 %v386, 0.0
  %v451 = vmax.f32 %v387, 0.0
  %v452 = vmax.f32 %v388, 0.0
  %v453 = vmax.f32 %v389, 0.0
  %v454 = vmax.f32 %v390, 0.0
  %v455 = vmax.f32 %v391, 0.0
  %v456 = vmax.f32 %v392, 0.0
  %v457 = vmax.f32 %v393, 0.0
  %v458 = vmax.f32 %v394, 0.0
  %v459 = vmax.f32 %v395, 0.0
  %v460 = vmax.f32 %v396, 0.0
  %v461 = vmax.f32 %v397, 0.0
  %v462 = vmax.f32 %v398, 0.0
  %v463 = vmax.f32 %v399, 0.0
  %v464 = vmax.f32 %v400, 0.0
  %v465 = vmax.f32 %v401, 0.0
  %v466 = vmax.f32 %v402, 0.0
  %v467 = vmax.f32 %v403, 0.0
  %v468 = vmax.f32 %v404, 0.0
  %v469 = vmax.f32 %v405, 0.0
  %v470 = vmax.f32 %v406, 0.0
  %v471 = vmax.f32 %v407, 0.0
  %v472 = vmax.f32 %v408, 0.0
  %v473 = vmax.f32 %v409, 0.0
  %v474 = vmax.f32 %v410, 0.0
  %v475 = vmax.f32 %v411, 0.0
  %v476 = vmax.f32 %v412, 0.0
  %v477 = vmax.f32 %v413, 0.0
  %v478 = vmax.f32 %v414, 0.0
  %479 = vst [vmem:[%s4] sm:$0xff] %v415
  %480 = vst [vmem:[%s4 + $0x8] sm:$0xff] %v416
  %481 = vst [vmem:[%s4 + $0x10] sm:$0xff] %v417
  %482 = vst [vmem:[%s4 + $0x18] sm:$0xff] %v418
  %483 = vst [vmem:[%s4 + $0x20] sm:$0xff] %v419
  %484 = vst [vmem:[%s4 + $0x28] sm:$0xff] %v420
  %485 = vst [vmem:[%s4 + $0x30] sm:$0xff] %v421
  %486 = vst [vmem:[%s4 + $0x38] sm:$0xff] %v422
  %487 = vst [vmem:[%s4 + $0x40] sm:$0xff] %v423
  %488 = vst [vmem:[%s4 + $0x48] sm:$0xff] %v424
  %489 = vst [vmem:[%s4 + $0x50] sm:$0xff] %v425
  %490 = vst [vmem:[%s4 + $0x58] sm:$0xff] %v426
  %491 = vst [vmem:[%s4 + $0x60] sm:$0xff] %v427
  %492 = vst [vmem:[%s4 + $0x68] sm:$0xff] %v428
  %493 = vst [vmem:[%s4 + $0x70] sm:$0xff] %v429
  %494 = vst [vmem:[%s4 + $0x78] sm:$0xff] %v430
  %495 = vst [vmem:[%s4 + $0x80] sm:$0xff] %v431
  %496 = vst [vmem:[%s4 + $0x88] sm:$0xff] %v432
  %497 = vst [vmem:[%s4 + $0x90] sm:$0xff] %v433
  %498 = vst [vmem:[%s4 + $0x98] sm:$0xff] %v434
  %499 = vst [vmem:[%s4 + $0xa0] sm:$0xff] %v435
  %500 = vst [vmem:[%s4 + $0xa8] sm:$0xff] %v436
  %501 = vst [vmem:[%s4 + $0xb0] sm:$0xff] %v437
  %502 = vst [vmem:[%s4 + $0xb8] sm:$0xff] %v438
  %503 = vst [vmem:[%s4 + $0xc0] sm:$0xff] %v439
  %504 = vst [vmem:[%s4 + $0xc8] sm:$0xff] %v440
  %505 = vst [vmem:[%s4 + $0xd0] sm:$0xff] %v441
  %506 = vst [vmem:[%s4 + $0xd8] sm:$0xff] %v442
  %507 = vst [vmem:[%s4 + $0xe0] sm:$0xff] %v443
  %508 = vst [vmem:[%s4 + $0xe8] sm:$0xff] %v444
  %509 = vst [vmem:[%s4 + $0xf0] sm:$0xff] %v445
  %510 = vst [vmem:[%s4 + $0xf8] sm:$0xff] %v446
  %511 = vst [vmem:[%s4 + $0x100] sm:$0xff] %v447
  %512 = vst [vmem:[%s4 + $0x108] sm:$0xff] %v448
  %513 = vst [vmem:[%s4 + $0x110] sm:$0xff] %v449
  %514 = vst [vmem:[%s4 + $0x118] sm:$0xff] %v450
  %515 = vst [vmem:[%s4 + $0x120] sm:$0xff] %v451
  %516 = vst [vmem:[%s4 + $0x128] sm:$0xff] %v452
  %517 = vst [vmem:[%s4 + $0x130] sm:$0xff] %v453
  %518 = vst [vmem:[%s4 + $0x138] sm:$0xff] %v454
  %519 = vst [vmem:[%s4 + $0x140] sm:$0xff] %v455
  %520 = vst [vmem:[%s4 + $0x148] sm:$0xff] %v456
  %521 = vst [vmem:[%s4 + $0x150] sm:$0xff] %v457
  %522 = vst [vmem:[%s4 + $0x158] sm:$0xff] %v458
  %523 = vst [vmem:[%s4 + $0x160] sm:$0xff] %v459
  %524 = vst [vmem:[%s4 + $0x168] sm:$0xff] %v460
  %525 = vst [vmem:[%s4 + $0x170] sm:$0xff] %v461
  %526 = vst [vmem:[%s4 + $0x178] sm:$0xff] %v462
  %527 = vst [vmem:[%s4 + $0x180] sm:$0xff] %v463
  %528 = vst [vmem:[%s4 + $0x188] sm:$0xff] %v464
  %529 = vst [vmem:[%s4 + $0x190] sm:$0xff] %v465
  %530 = vst [vmem:[%s4 + $0x198] sm:$0xff] %v466
  %531 = vst [vmem:[%s4 + $0x1a0] sm:$0xff] %v467
  %532 = vst [vmem:[%s4 + $0x1a8] sm:$0xff] %v468
  %533 = vst [vmem:[%s4 + $0x1b0] sm:$0xff] %v469
  %534 = vst [vmem:[%s4 + $0x1b8] sm:$0xff] %v470
  %535 = vst [vmem:[%s4 + $0x1c0] sm:$0xff] %v471
  %536 = vst [vmem:[%s4 + $0x1c8] sm:$0xff] %v472
  %537 = vst [vmem:[%s4 + $0x1d0] sm:$0xff] %v473
  %538 = vst [vmem:[%s4 + $0x1d8] sm:$0xff] %v474
  %539 = vst [vmem:[%s4 + $0x1e0] sm:$0xff] %v475
  %540 = vst [vmem:[%s4 + $0x1e8] sm:$0xff] %v476
  %541 = vst [vmem:[%s4 + $0x1f0] sm:$0xff] %v477
  %542 = vst [vmem:[%s4 + $0x1f8] sm:$0xff] %v478
  // Predicated region
  $region18: #{basic_block_forward.7} parent=0 // pred_check
    _
  $region19: #{basic_block_forward.7} parent=0 // pred_check_branch
    %544 = sbr.rel (0) target = $region21
  $region20: #{basic_block_forward.7} parent=0 // pred_region
    _
  $region21: #{basic_block_forward.7} parent=0 // pred_fallthru
    _
  // Predicated region
  $region22: #{basic_block_forward.7} parent=0 // pred_check
    _
  $region23: #{basic_block_forward.7} parent=0 // pred_check_branch
    %546 = sbr.rel (0) target = $region25
  $region24: #{basic_block_forward.7} parent=0 // pred_region
    _
  $region25: #{basic_block_forward.7} parent=0 // pred_fallthru
    _

// kernel: basic_block_forward.4
$region0: #{basic_block_forward.4}
  #allocation0 [shape = 'u32[]', space=smem, size = 0x4, offset = 0x4, fixed_abs, tag = 'smem constant byte address 0x4 - core index']
  #allocation1 [shape = 'u32[144,128]{1,0:T(1,128)}', space=vmem, size = 0x12000, scoped, tag = 'internal scratch']
  %s0 = inlined_call_operand.vmem [shape: f32[512,128], index: 0, kind: input, shape index: {}]
  %s1 = inlined_call_operand.vmem [shape: bf16[128,128], index: 1, kind: input, shape index: {}]
  %s2 = inlined_call_operand.vmem [shape: f32[1,128], index: 2, kind: input, shape index: {}, may-alias: {2,3}]
  %s3 = inlined_call_operand.vmem [shape: f32[1,128], index: 3, kind: input, shape index: {}, may-alias: {2,3}]
  %s4 = inlined_call_operand.vmem [shape: bf16[512,128], index: 4, kind: output, shape index: {0}]
  %s5 = inlined_call_operand.vmem [shape: f32[1,2,128], index: 5, kind: output, shape index: {1}]
  %6 = xla_tuple %s4, %s5
  %s7 = sld [smem:[#allocation0]]
  $region34: #{basic_block_forward.4} parent=0
    _
  %s9 = ssub.s32 1, %s7
  %s10 = scalar_select 0, %s9, %s7
  // Predicated region
  $region2: #{basic_block_forward.4} parent=0 // pred_check
    _
  $region3: #{basic_block_forward.4} parent=0 // pred_check_branch
    %12 = sbr.rel (0) target = $region5
  $region4: #{basic_block_forward.4} parent=0 // pred_region
    _
  $region5: #{basic_block_forward.4} parent=0 // pred_fallthru
    _
  // Predicated region
  $region6: #{basic_block_forward.4} parent=0 // pred_check
    _
  $region7: #{basic_block_forward.4} parent=0 // pred_check_branch
    %14 = sbr.rel (0) target = $region9
  $region8: #{basic_block_forward.4} parent=0 // pred_region
    _
  $region9: #{basic_block_forward.4} parent=0 // pred_fallthru
    _
  // Predicated region
  $region10: #{basic_block_forward.4} parent=0 // pred_check
    _
  $region11: #{basic_block_forward.4} parent=0 // pred_check_branch
    %16 = sbr.rel (0) target = $region13
  $region12: #{basic_block_forward.4} parent=0 // pred_region
    _
  $region13: #{basic_block_forward.4} parent=0 // pred_fallthru
    _
  // Predicated region
  $region14: #{basic_block_forward.4} parent=0 // pred_check
    _
  $region15: #{basic_block_forward.4} parent=0 // pred_check_branch
    %18 = sbr.rel (0) target = $region17
  $region16: #{basic_block_forward.4} parent=0 // pred_region
    _
  $region17: #{basic_block_forward.4} parent=0 // pred_fallthru
    _
  %v20 = vld [vmem:[%s0] sm:$0xff]
  %v21 = vld [vmem:[%s0 + $0x8] sm:$0xff]
  %v22 = vld [vmem:[%s0 + $0x10] sm:$0xff]
  %v23 = vld [vmem:[%s0 + $0x18] sm:$0xff]
  %v24 = vld [vmem:[%s0 + $0x20] sm:$0xff]
  %v25 = vld [vmem:[%s0 + $0x28] sm:$0xff]
  %v26 = vld [vmem:[%s0 + $0x30] sm:$0xff]
  %v27 = vld [vmem:[%s0 + $0x38] sm:$0xff]
  %v28 = vld [vmem:[%s0 + $0x40] sm:$0xff]
  %v29 = vld [vmem:[%s0 + $0x48] sm:$0xff]
  %v30 = vld [vmem:[%s0 + $0x50] sm:$0xff]
  %v31 = vld [vmem:[%s0 + $0x58] sm:$0xff]
  %v32 = vld [vmem:[%s0 + $0x60] sm:$0xff]
  %v33 = vld [vmem:[%s0 + $0x68] sm:$0xff]
  %v34 = vld [vmem:[%s0 + $0x70] sm:$0xff]
  %v35 = vld [vmem:[%s0 + $0x78] sm:$0xff]
  %v36 = vld [vmem:[%s0 + $0x80] sm:$0xff]
  %v37 = vld [vmem:[%s0 + $0x88] sm:$0xff]
  %v38 = vld [vmem:[%s0 + $0x90] sm:$0xff]
  %v39 = vld [vmem:[%s0 + $0x98] sm:$0xff]
  %v40 = vld [vmem:[%s0 + $0xa0] sm:$0xff]
  %v41 = vld [vmem:[%s0 + $0xa8] sm:$0xff]
  %v42 = vld [vmem:[%s0 + $0xb0] sm:$0xff]
  %v43 = vld [vmem:[%s0 + $0xb8] sm:$0xff]
  %v44 = vld [vmem:[%s0 + $0xc0] sm:$0xff]
  %v45 = vld [vmem:[%s0 + $0xc8] sm:$0xff]
  %v46 = vld [vmem:[%s0 + $0xd0] sm:$0xff]
  %v47 = vld [vmem:[%s0 + $0xd8] sm:$0xff]
  %v48 = vld [vmem:[%s0 + $0xe0] sm:$0xff]
  %v49 = vld [vmem:[%s0 + $0xe8] sm:$0xff]
  %v50 = vld [vmem:[%s0 + $0xf0] sm:$0xff]
  %v51 = vld [vmem:[%s0 + $0xf8] sm:$0xff]
  %v52 = vld [vmem:[%s0 + $0x100] sm:$0xff]
  %v53 = vld [vmem:[%s0 + $0x108] sm:$0xff]
  %v54 = vld [vmem:[%s0 + $0x110] sm:$0xff]
  %v55 = vld [vmem:[%s0 + $0x118] sm:$0xff]
  %v56 = vld [vmem:[%s0 + $0x120] sm:$0xff]
  %v57 = vld [vmem:[%s0 + $0x128] sm:$0xff]
  %v58 = vld [vmem:[%s0 + $0x130] sm:$0xff]
  %v59 = vld [vmem:[%s0 + $0x138] sm:$0xff]
  %v60 = vld [vmem:[%s0 + $0x140] sm:$0xff]
  %v61 = vld [vmem:[%s0 + $0x148] sm:$0xff]
  %v62 = vld [vmem:[%s0 + $0x150] sm:$0xff]
  %v63 = vld [vmem:[%s0 + $0x158] sm:$0xff]
  %v64 = vld [vmem:[%s0 + $0x160] sm:$0xff]
  %v65 = vld [vmem:[%s0 + $0x168] sm:$0xff]
  %v66 = vld [vmem:[%s0 + $0x170] sm:$0xff]
  %v67 = vld [vmem:[%s0 + $0x178] sm:$0xff]
  %v68 = vld [vmem:[%s0 + $0x180] sm:$0xff]
  %v69 = vld [vmem:[%s0 + $0x188] sm:$0xff]
  %v70 = vld [vmem:[%s0 + $0x190] sm:$0xff]
  %v71 = vld [vmem:[%s0 + $0x198] sm:$0xff]
  %v72 = vld [vmem:[%s0 + $0x1a0] sm:$0xff]
  %v73 = vld [vmem:[%s0 + $0x1a8] sm:$0xff]
  %v74 = vld [vmem:[%s0 + $0x1b0] sm:$0xff]
  %v75 = vld [vmem:[%s0 + $0x1b8] sm:$0xff]
  %v76 = vld [vmem:[%s0 + $0x1c0] sm:$0xff]
  %v77 = vld [vmem:[%s0 + $0x1c8] sm:$0xff]
  %v78 = vld [vmem:[%s0 + $0x1d0] sm:$0xff]
  %v79 = vld [vmem:[%s0 + $0x1d8] sm:$0xff]
  %v80 = vld [vmem:[%s0 + $0x1e0] sm:$0xff]
  %v81 = vld [vmem:[%s0 + $0x1e8] sm:$0xff]
  %v82 = vld [vmem:[%s0 + $0x1f0] sm:$0xff]
  %v83 = vld [vmem:[%s0 + $0x1f8] sm:$0xff]
  %v84 = vpack.c.bf16 %v21, %v20
  %v85 = vpack.c.bf16 %v23, %v22
  %v86 = vpack.c.bf16 %v25, %v24
  %v87 = vpack.c.bf16 %v27, %v26
  %v88 = vpack.c.bf16 %v29, %v28
  %v89 = vpack.c.bf16 %v31, %v30
  %v90 = vpack.c.bf16 %v33, %v32
  %v91 = vpack.c.bf16 %v35, %v34
  %v92 = vpack.c.bf16 %v37, %v36
  %v93 = vpack.c.bf16 %v39, %v38
  %v94 = vpack.c.bf16 %v41, %v40
  %v95 = vpack.c.bf16 %v43, %v42
  %v96 = vpack.c.bf16 %v45, %v44
  %v97 = vpack.c.bf16 %v47, %v46
  %v98 = vpack.c.bf16 %v49, %v48
  %v99 = vpack.c.bf16 %v51, %v50
  %v100 = vpack.c.bf16 %v53, %v52
  %v101 = vpack.c.bf16 %v55, %v54
  %v102 = vpack.c.bf16 %v57, %v56
  %v103 = vpack.c.bf16 %v59, %v58
  %v104 = vpack.c.bf16 %v61, %v60
  %v105 = vpack.c.bf16 %v63, %v62
  %v106 = vpack.c.bf16 %v65, %v64
  %v107 = vpack.c.bf16 %v67, %v66
  %v108 = vpack.c.bf16 %v69, %v68
  %v109 = vpack.c.bf16 %v71, %v70
  %v110 = vpack.c.bf16 %v73, %v72
  %v111 = vpack.c.bf16 %v75, %v74
  %v112 = vpack.c.bf16 %v77, %v76
  %v113 = vpack.c.bf16 %v79, %v78
  %v114 = vpack.c.bf16 %v81, %v80
  %v115 = vpack.c.bf16 %v83, %v82
  %v116 = vld [vmem:[%s1] sm:$0xf]
  %v117 = vld [vmem:[%s1 + $0x4] sm:$0xf]
  %v118 = vld [vmem:[%s1 + $0x8] sm:$0xf]
  %v119 = vld [vmem:[%s1 + $0xc] sm:$0xf]
  %v120 = vld [vmem:[%s1 + $0x10] sm:$0xf]
  %v121 = vld [vmem:[%s1 + $0x14] sm:$0xf]
  %v122 = vld [vmem:[%s1 + $0x18] sm:$0xf]
  %v123 = vld [vmem:[%s1 + $0x1c] sm:$0xf]
  %v124 = vld [vmem:[%s1 + $0x20] sm:$0xf]
  %v125 = vld [vmem:[%s1 + $0x24] sm:$0xf]
  %v126 = vld [vmem:[%s1 + $0x28] sm:$0xf]
  %v127 = vld [vmem:[%s1 + $0x2c] sm:$0xf]
  %v128 = vld [vmem:[%s1 + $0x30] sm:$0xf]
  %v129 = vld [vmem:[%s1 + $0x34] sm:$0xf]
  %v130 = vld [vmem:[%s1 + $0x38] sm:$0xf]
  %v131 = vld [vmem:[%s1 + $0x3c] sm:$0xf]
  %v148 = vunpack.c.l.b16 %v116
  %v149 = vunpack.c.l.b16 %v117
  %v150 = vunpack.c.l.b16 %v118
  %v151 = vunpack.c.l.b16 %v119
  %v152 = vunpack.c.l.b16 %v120
  %v153 = vunpack.c.l.b16 %v121
  %v154 = vunpack.c.l.b16 %v122
  %v155 = vunpack.c.l.b16 %v123
  %v156 = vunpack.c.l.b16 %v124
  %v157 = vunpack.c.l.b16 %v125
  %v158 = vunpack.c.l.b16 %v126
  %v159 = vunpack.c.l.b16 %v127
  %v160 = vunpack.c.l.b16 %v128
  %v161 = vunpack.c.l.b16 %v129
  %v162 = vunpack.c.l.b16 %v130
  %v163 = vunpack.c.l.b16 %v131
  %v164 = vpack.c.b16 %v149, %v148
  %v165 = vpack.c.b16 %v151, %v150
  %v166 = vpack.c.b16 %v153, %v152
  %v167 = vpack.c.b16 %v155, %v154
  %v168 = vpack.c.b16 %v157, %v156
  %v169 = vpack.c.b16 %v159, %v158
  %v170 = vpack.c.b16 %v161, %v160
  %v171 = vpack.c.b16 %v163, %v162
  %180 = vmatprep.subr.bf16.mxu0 0
  %181 = vmatpush1.bf16.msra.mxu0 %v164
  %182 = vmatprep.subr.bf16.mxu0 0
  %183 = vmatpush1.bf16.msra.mxu0 %v165
  %184 = vmatprep.subr.bf16.mxu0 0
  %185 = vmatpush1.bf16.msra.mxu0 %v166
  %186 = vmatprep.subr.bf16.mxu0 0
  %187 = vmatpush1.bf16.msra.mxu0 %v167
  %188 = vmatprep.subr.bf16.mxu0 0
  %189 = vmatpush1.bf16.msra.mxu0 %v168
  %190 = vmatprep.subr.bf16.mxu0 0
  %191 = vmatpush1.bf16.msra.mxu0 %v169
  %192 = vmatprep.subr.bf16.mxu0 0
  %193 = vmatpush1.bf16.msra.mxu0 %v170
  %194 = vmatprep.subr.bf16.mxu0 0
  %195 = vmatpush1.bf16.msra.mxu0 %v171
  %196 = vmatprep.subr.bf16.mxu0 0
  %197 = vmatpush1.bf16.msra.mxu0 0
  %198 = vmatprep.subr.bf16.mxu0 0
  %199 = vmatpush1.bf16.msra.mxu0 0
  %200 = vmatprep.subr.bf16.mxu0 0
  %201 = vmatpush1.bf16.msra.mxu0 0
  %202 = vmatprep.subr.bf16.mxu0 0
  %203 = vmatpush1.bf16.msra.mxu0 0
  %204 = vmatprep.subr.bf16.mxu0 0
  %205 = vmatpush1.bf16.msra.mxu0 0
  %206 = vmatprep.subr.bf16.mxu0 0
  %207 = vmatpush1.bf16.msra.mxu0 0
  %208 = vmatprep.subr.bf16.mxu0 0
  %209 = vmatpush1.bf16.msra.mxu0 0
  %210 = vmatprep.subr.bf16.mxu0 0
  %211 = vmatpush1.bf16.msra.mxu0 0
  %212 = vmatprep.mubr.bf16.mxu0 0
  %213 = vmatmul.mubr.bf16.gmra.mrb[0].mxu0 %v84
  %v214 = vpop.f32.mrb[0].mxu0
  %v215 = vadd.f32 0.0, %v214
  %v216 = vpop.f32.mrb[0].mxu0
  %v217 = vpop.f32.mrb[0].mxu0
  %v218 = vadd.f32 0.0, %v217
  %v219 = vpop.f32.mrb[0].mxu0
  %220 = vmatprep.mubr.bf16.mxu0 0
  %221 = vmatmul.mubr.bf16.gmra.mrb[0].mxu0 %v85
  %v222 = vpop.f32.mrb[0].mxu0
  %v223 = vadd.f32 0.0, %v222
  %v224 = vpop.f32.mrb[0].mxu0
  %v225 = vpop.f32.mrb[0].mxu0
  %v226 = vadd.f32 0.0, %v225
  %v227 = vpop.f32.mrb[0].mxu0
  %228 = vmatprep.mubr.bf16.mxu0 0
  %229 = vmatmul.mubr.bf16.gmra.mrb[0].mxu0 %v86
  %v230 = vpop.f32.mrb[0].mxu0
  %v231 = vadd.f32 0.0, %v230
  %v232 = vpop.f32.mrb[0].mxu0
  %v233 = vpop.f32.mrb[0].mxu0
  %v234 = vadd.f32 0.0, %v233
  %v235 = vpop.f32.mrb[0].mxu0
  %236 = vmatprep.mubr.bf16.mxu0 0
  %237 = vmatmul.mubr.bf16.gmra.mrb[0].mxu0 %v87
  %v238 = vpop.f32.mrb[0].mxu0
  %v239 = vadd.f32 0.0, %v238
  %v240 = vpop.f32.mrb[0].mxu0
  %v241 = vpop.f32.mrb[0].mxu0
  %v242 = vadd.f32 0.0, %v241
  %v243 = vpop.f32.mrb[0].mxu0
  %244 = vmatprep.mubr.bf16.mxu0 0
  %245 = vmatmul.mubr.bf16.gmra.mrb[0].mxu0 %v88
  %v246 = vpop.f32.mrb[0].mxu0
  %v247 = vadd.f32 0.0, %v246
  %v248 = vpop.f32.mrb[0].mxu0
  %v249 = vpop.f32.mrb[0].mxu0
  %v250 = vadd.f32 0.0, %v249
  %v251 = vpop.f32.mrb[0].mxu0
  %252 = vmatprep.mubr.bf16.mxu0 0
  %253 = vmatmul.mubr.bf16.gmra.mrb[0].mxu0 %v89
  %v254 = vpop.f32.mrb[0].mxu0
  %v255 = vadd.f32 0.0, %v254
  %v256 = vpop.f32.mrb[0].mxu0
  %v257 = vpop.f32.mrb[0].mxu0
  %v258 = vadd.f32 0.0, %v257
  %v259 = vpop.f32.mrb[0].mxu0
  %260 = vmatprep.mubr.bf16.mxu0 0
  %261 = vmatmul.mubr.bf16.gmra.mrb[0].mxu0 %v90
  %v262 = vpop.f32.mrb[0].mxu0
  %v263 = vadd.f32 0.0, %v262
  %v264 = vpop.f32.mrb[0].mxu0
  %v265 = vpop.f32.mrb[0].mxu0
  %v266 = vadd.f32 0.0, %v265
  %v267 = vpop.f32.mrb[0].mxu0
  %268 = vmatprep.mubr.bf16.mxu0 0
  %269 = vmatmul.mubr.bf16.gmra.mrb[0].mxu0 %v91
  %v270 = vpop.f32.mrb[0].mxu0
  %v271 = vadd.f32 0.0, %v270
  %v272 = vpop.f32.mrb[0].mxu0
  %v273 = vpop.f32.mrb[0].mxu0
  %v274 = vadd.f32 0.0, %v273
  %v275 = vpop.f32.mrb[0].mxu0
  %276 = vmatprep.mubr.bf16.mxu0 0
  %277 = vmatmul.mubr.bf16.gmra.mrb[0].mxu0 %v92
  %v278 = vpop.f32.mrb[0].mxu0
  %v279 = vadd.f32 0.0, %v278
  %v280 = vpop.f32.mrb[0].mxu0
  %v281 = vpop.f32.mrb[0].mxu0
  %v282 = vadd.f32 0.0, %v281
  %v283 = vpop.f32.mrb[0].mxu0
  %284 = vmatprep.mubr.bf16.mxu0 0
  %285 = vmatmul.mubr.bf16.gmra.mrb[0].mxu0 %v93
  %v286 = vpop.f32.mrb[0].mxu0
  %v287 = vadd.f32 0.0, %v286
  %v288 = vpop.f32.mrb[0].mxu0
  %v289 = vpop.f32.mrb[0].mxu0
  %v290 = vadd.f32 0.0, %v289
  %v291 = vpop.f32.mrb[0].mxu0
  %292 = vmatprep.mubr.bf16.mxu0 0
  %293 = vmatmul.mubr.bf16.gmra.mrb[0].mxu0 %v94
  %v294 = vpop.f32.mrb[0].mxu0
  %v295 = vadd.f32 0.0, %v294
  %v296 = vpop.f32.mrb[0].mxu0
  %v297 = vpop.f32.mrb[0].mxu0
  %v298 = vadd.f32 0.0, %v297
  %v299 = vpop.f32.mrb[0].mxu0
  %300 = vmatprep.mubr.bf16.mxu0 0
  %301 = vmatmul.mubr.bf16.gmra.mrb[0].mxu0 %v95
  %v302 = vpop.f32.mrb[0].mxu0
  %v303 = vadd.f32 0.0, %v302
  %v304 = vpop.f32.mrb[0].mxu0
  %v305 = vpop.f32.mrb[0].mxu0
  %v306 = vadd.f32 0.0, %v305
  %v307 = vpop.f32.mrb[0].mxu0
  %308 = vmatprep.mubr.bf16.mxu0 0
  %309 = vmatmul.mubr.bf16.gmra.mrb[0].mxu0 %v96
  %v310 = vpop.f32.mrb[0].mxu0
  %v311 = vadd.f32 0.0, %v310
  %v312 = vpop.f32.mrb[0].mxu0
  %v313 = vpop.f32.mrb[0].mxu0
  %v314 = vadd.f32 0.0, %v313
  %v315 = vpop.f32.mrb[0].mxu0
  %316 = vmatprep.mubr.bf16.mxu0 0
  %317 = vmatmul.mubr.bf16.gmra.mrb[0].mxu0 %v97
  %v318 = vpop.f32.mrb[0].mxu0
  %v319 = vadd.f32 0.0, %v318
  %v320 = vpop.f32.mrb[0].mxu0
  %v321 = vpop.f32.mrb[0].mxu0
  %v322 = vadd.f32 0.0, %v321
  %v323 = vpop.f32.mrb[0].mxu0
  %324 = vmatprep.mubr.bf16.mxu0 0
  %325 = vmatmul.mubr.bf16.gmra.mrb[0].mxu0 %v98
  %v326 = vpop.f32.mrb[0].mxu0
  %v327 = vadd.f32 0.0, %v326
  %v328 = vpop.f32.mrb[0].mxu0
  %v329 = vpop.f32.mrb[0].mxu0
  %v330 = vadd.f32 0.0, %v329
  %v331 = vpop.f32.mrb[0].mxu0
  %332 = vmatprep.mubr.bf16.mxu0 0
  %333 = vmatmul.mubr.bf16.gmra.mrb[0].mxu0 %v99
  %v334 = vpop.f32.mrb[0].mxu0
  %v335 = vadd.f32 0.0, %v334
  %v336 = vpop.f32.mrb[0].mxu0
  %v337 = vpop.f32.mrb[0].mxu0
  %v338 = vadd.f32 0.0, %v337
  %v339 = vpop.f32.mrb[0].mxu0
  %340 = vmatprep.mubr.bf16.mxu0 0
  %341 = vmatmul.mubr.bf16.gmra.mrb[0].mxu0 %v100
  %v342 = vpop.f32.mrb[0].mxu0
  %v343 = vadd.f32 0.0, %v342
  %v344 = vpop.f32.mrb[0].mxu0
  %v345 = vpop.f32.mrb[0].mxu0
  %v346 = vadd.f32 0.0, %v345
  %v347 = vpop.f32.mrb[0].mxu0
  %348 = vmatprep.mubr.bf16.mxu0 0
  %349 = vmatmul.mubr.bf16.gmra.mrb[0].mxu0 %v101
  %v350 = vpop.f32.mrb[0].mxu0
  %v351 = vadd.f32 0.0, %v350
  %v352 = vpop.f32.mrb[0].mxu0
  %v353 = vpop.f32.mrb[0].mxu0
  %v354 = vadd.f32 0.0, %v353
  %v355 = vpop.f32.mrb[0].mxu0
  %356 = vmatprep.mubr.bf16.mxu0 0
  %357 = vmatmul.mubr.bf16.gmra.mrb[0].mxu0 %v102
  %v358 = vpop.f32.mrb[0].mxu0
  %v359 = vadd.f32 0.0, %v358
  %v360 = vpop.f32.mrb[0].mxu0
  %v361 = vpop.f32.mrb[0].mxu0
  %v362 = vadd.f32 0.0, %v361
  %v363 = vpop.f32.mrb[0].mxu0
  %364 = vmatprep.mubr.bf16.mxu0 0
  %365 = vmatmul.mubr.bf16.gmra.mrb[0].mxu0 %v103
  %v366 = vpop.f32.mrb[0].mxu0
  %v367 = vadd.f32 0.0, %v366
  %v368 = vpop.f32.mrb[0].mxu0
  %v369 = vpop.f32.mrb[0].mxu0
  %v370 = vadd.f32 0.0, %v369
  %v371 = vpop.f32.mrb[0].mxu0
  %372 = vmatprep.mubr.bf16.mxu0 0
  %373 = vmatmul.mubr.bf16.gmra.mrb[0].mxu0 %v104
  %v374 = vpop.f32.mrb[0].mxu0
  %v375 = vadd.f32 0.0, %v374
  %v376 = vpop.f32.mrb[0].mxu0
  %v377 = vpop.f32.mrb[0].mxu0
  %v378 = vadd.f32 0.0, %v377
  %v379 = vpop.f32.mrb[0].mxu0
  %380 = vmatprep.mubr.bf16.mxu0 0
  %381 = vmatmul.mubr.bf16.gmra.mrb[0].mxu0 %v105
  %v382 = vpop.f32.mrb[0].mxu0
  %v383 = vadd.f32 0.0, %v382
  %v384 = vpop.f32.mrb[0].mxu0
  %v385 = vpop.f32.mrb[0].mxu0
  %v386 = vadd.f32 0.0, %v385
  %v387 = vpop.f32.mrb[0].mxu0
  %388 = vmatprep.mubr.bf16.mxu0 0
  %389 = vmatmul.mubr.bf16.gmra.mrb[0].mxu0 %v106
  %v390 = vpop.f32.mrb[0].mxu0
  %v391 = vadd.f32 0.0, %v390
  %v392 = vpop.f32.mrb[0].mxu0
  %v393 = vpop.f32.mrb[0].mxu0
  %v394 = vadd.f32 0.0, %v393
  %v395 = vpop.f32.mrb[0].mxu0
  %396 = vmatprep.mubr.bf16.mxu0 0
  %397 = vmatmul.mubr.bf16.gmra.mrb[0].mxu0 %v107
  %v398 = vpop.f32.mrb[0].mxu0
  %v399 = vadd.f32 0.0, %v398
  %v400 = vpop.f32.mrb[0].mxu0
  %v401 = vpop.f32.mrb[0].mxu0
  %v402 = vadd.f32 0.0, %v401
  %v403 = vpop.f32.mrb[0].mxu0
  %404 = vmatprep.mubr.bf16.mxu0 0
  %405 = vmatmul.mubr.bf16.gmra.mrb[0].mxu0 %v108
  %v406 = vpop.f32.mrb[0].mxu0
  %v407 = vadd.f32 0.0, %v406
  %v408 = vpop.f32.mrb[0].mxu0
  %v409 = vpop.f32.mrb[0].mxu0
  %v410 = vadd.f32 0.0, %v409
  %v411 = vpop.f32.mrb[0].mxu0
  %412 = vmatprep.mubr.bf16.mxu0 0
  %413 = vmatmul.mubr.bf16.gmra.mrb[0].mxu0 %v109
  %v414 = vpop.f32.mrb[0].mxu0
  %v415 = vadd.f32 0.0, %v414
  %v416 = vpop.f32.mrb[0].mxu0
  %v417 = vpop.f32.mrb[0].mxu0
  %v418 = vadd.f32 0.0, %v417
  %v419 = vpop.f32.mrb[0].mxu0
  %420 = vmatprep.mubr.bf16.mxu0 0
  %421 = vmatmul.mubr.bf16.gmra.mrb[0].mxu0 %v110
  %v422 = vpop.f32.mrb[0].mxu0
  %v423 = vadd.f32 0.0, %v422
  %v424 = vpop.f32.mrb[0].mxu0
  %v425 = vpop.f32.mrb[0].mxu0
  %v426 = vadd.f32 0.0, %v425
  %v427 = vpop.f32.mrb[0].mxu0
  %428 = vmatprep.mubr.bf16.mxu0 0
  %429 = vmatmul.mubr.bf16.gmra.mrb[0].mxu0 %v111
  %v430 = vpop.f32.mrb[0].mxu0
  %v431 = vadd.f32 0.0, %v430
  %v432 = vpop.f32.mrb[0].mxu0
  %v433 = vpop.f32.mrb[0].mxu0
  %v434 = vadd.f32 0.0, %v433
  %v435 = vpop.f32.mrb[0].mxu0
  %436 = vmatprep.mubr.bf16.mxu0 0
  %437 = vmatmul.mubr.bf16.gmra.mrb[0].mxu0 %v112
  %v438 = vpop.f32.mrb[0].mxu0
  %v439 = vadd.f32 0.0, %v438
  %v440 = vpop.f32.mrb[0].mxu0
  %v441 = vpop.f32.mrb[0].mxu0
  %v442 = vadd.f32 0.0, %v441
  %v443 = vpop.f32.mrb[0].mxu0
  %444 = vmatprep.mubr.bf16.mxu0 0
  %445 = vmatmul.mubr.bf16.gmra.mrb[0].mxu0 %v113
  %v446 = vpop.f32.mrb[0].mxu0
  %v447 = vadd.f32 0.0, %v446
  %v448 = vpop.f32.mrb[0].mxu0
  %v449 = vpop.f32.mrb[0].mxu0
  %v450 = vadd.f32 0.0, %v449
  %v451 = vpop.f32.mrb[0].mxu0
  %452 = vmatprep.mubr.bf16.mxu0 0
  %453 = vmatmul.mubr.bf16.gmra.mrb[0].mxu0 %v114
  %v454 = vpop.f32.mrb[0].mxu0
  %v455 = vadd.f32 0.0, %v454
  %v456 = vpop.f32.mrb[0].mxu0
  %v457 = vpop.f32.mrb[0].mxu0
  %v458 = vadd.f32 0.0, %v457
  %v459 = vpop.f32.mrb[0].mxu0
  %460 = vmatprep.mubr.bf16.mxu0 0
  %461 = vmatmul.mubr.bf16.gmra.mrb[0].mxu0 %v115
  %v462 = vpop.f32.mrb[0].mxu0
  %v463 = vadd.f32 0.0, %v462
  %v464 = vpop.f32.mrb[0].mxu0
  %v465 = vpop.f32.mrb[0].mxu0
  %v466 = vadd.f32 0.0, %v465
  %v467 = vpop.f32.mrb[0].mxu0
  %468 = vdwg.mxu0
  %v469 = vpack.c.bf16 %v218, %v215
  %v470 = vpack.c.bf16 %v226, %v223
  %v471 = vpack.c.bf16 %v234, %v231
  %v472 = vpack.c.bf16 %v242, %v239
  %v473 = vpack.c.bf16 %v250, %v247
  %v474 = vpack.c.bf16 %v258, %v255
  %v475 = vpack.c.bf16 %v266, %v263
  %v476 = vpack.c.bf16 %v274, %v271
  %v477 = vpack.c.bf16 %v282, %v279
  %v478 = vpack.c.bf16 %v290, %v287
  %v479 = vpack.c.bf16 %v298, %v295
  %v480 = vpack.c.bf16 %v306, %v303
  %v481 = vpack.c.bf16 %v314, %v311
  %v482 = vpack.c.bf16 %v322, %v319
  %v483 = vpack.c.bf16 %v330, %v327
  %v484 = vpack.c.bf16 %v338, %v335
  %v485 = vpack.c.bf16 %v346, %v343
  %v486 = vpack.c.bf16 %v354, %v351
  %v487 = vpack.c.bf16 %v362, %v359
  %v488 = vpack.c.bf16 %v370, %v367
  %v489 = vpack.c.bf16 %v378, %v375
  %v490 = vpack.c.bf16 %v386, %v383
  %v491 = vpack.c.bf16 %v394, %v391
  %v492 = vpack.c.bf16 %v402, %v399
  %v493 = vpack.c.bf16 %v410, %v407
  %v494 = vpack.c.bf16 %v418, %v415
  %v495 = vpack.c.bf16 %v426, %v423
  %v496 = vpack.c.bf16 %v434, %v431
  %v497 = vpack.c.bf16 %v442, %v439
  %v498 = vpack.c.bf16 %v450, %v447
  %v499 = vpack.c.bf16 %v458, %v455
  %v500 = vpack.c.bf16 %v466, %v463
  %v533 = vunpack.c.l.b16 %v469
  %v534 = vunpack.c.h.b16 %v469
  %v535 = vunpack.c.l.b16 %v470
  %v536 = vunpack.c.h.b16 %v470
  %v537 = vunpack.c.l.b16 %v471
  %v538 = vunpack.c.h.b16 %v471
  %v539 = vunpack.c.l.b16 %v472
  %v540 = vunpack.c.h.b16 %v472
  %v541 = vunpack.c.l.b16 %v473
  %v542 = vunpack.c.h.b16 %v473
  %v543 = vunpack.c.l.b16 %v474
  %v544 = vunpack.c.h.b16 %v474
  %v545 = vunpack.c.l.b16 %v475
  %v546 = vunpack.c.h.b16 %v475
  %v547 = vunpack.c.l.b16 %v476
  %v548 = vunpack.c.h.b16 %v476
  %v549 = vunpack.c.l.b16 %v477
  %v550 = vunpack.c.h.b16 %v477
  %v551 = vunpack.c.l.b16 %v478
  %v552 = vunpack.c.h.b16 %v478
  %v553 = vunpack.c.l.b16 %v479
  %v554 = vunpack.c.h.b16 %v479
  %v555 = vunpack.c.l.b16 %v480
  %v556 = vunpack.c.h.b16 %v480
  %v557 = vunpack.c.l.b16 %v481
  %v558 = vunpack.c.h.b16 %v481
  %v559 = vunpack.c.l.b16 %v482
  %v560 = vunpack.c.h.b16 %v482
  %v561 = vunpack.c.l.b16 %v483
  %v562 = vunpack.c.h.b16 %v483
  %v563 = vunpack.c.l.b16 %v484
  %v564 = vunpack.c.h.b16 %v484
  %v565 = vunpack.c.l.b16 %v485
  %v566 = vunpack.c.h.b16 %v485
  %v567 = vunpack.c.l.b16 %v486
  %v568 = vunpack.c.h.b16 %v486
  %v569 = vunpack.c.l.b16 %v487
  %v570 = vunpack.c.h.b16 %v487
  %v571 = vunpack.c.l.b16 %v488
  %v572 = vunpack.c.h.b16 %v488
  %v573 = vunpack.c.l.b16 %v489
  %v574 = vunpack.c.h.b16 %v489
  %v575 = vunpack.c.l.b16 %v490
  %v576 = vunpack.c.h.b16 %v490
  %v577 = vunpack.c.l.b16 %v491
  %v578 = vunpack.c.h.b16 %v491
  %v579 = vunpack.c.l.b16 %v492
  %v580 = vunpack.c.h.b16 %v492
  %v581 = vunpack.c.l.b16 %v493
  %v582 = vunpack.c.h.b16 %v493
  %v583 = vunpack.c.l.b16 %v494
  %v584 = vunpack.c.h.b16 %v494
  %v585 = vunpack.c.l.b16 %v495
  %v586 = vunpack.c.h.b16 %v495
  %v587 = vunpack.c.l.b16 %v496
  %v588 = vunpack.c.h.b16 %v496
  %v589 = vunpack.c.l.b16 %v497
  %v590 = vunpack.c.h.b16 %v497
  %v591 = vunpack.c.l.b16 %v498
  %v592 = vunpack.c.h.b16 %v498
  %v593 = vunpack.c.l.b16 %v499
  %v594 = vunpack.c.h.b16 %v499
  %v595 = vunpack.c.l.b16 %v500
  %v596 = vunpack.c.h.b16 %v500
  %v597 = vpack.c.b16 %v533, %v533
  %v598 = vpack.c.b16 %v534, %v534
  %v599 = vpack.c.b16 %v535, %v535
  %v600 = vpack.c.b16 %v536, %v536
  %v601 = vpack.c.b16 %v537, %v537
  %v602 = vpack.c.b16 %v538, %v538
  %v603 = vpack.c.b16 %v539, %v539
  %v604 = vpack.c.b16 %v540, %v540
  %v605 = vpack.c.b16 %v541, %v541
  %v606 = vpack.c.b16 %v542, %v542
  %v607 = vpack.c.b16 %v543, %v543
  %v608 = vpack.c.b16 %v544, %v544
  %v609 = vpack.c.b16 %v545, %v545
  %v610 = vpack.c.b16 %v546, %v546
  %v611 = vpack.c.b16 %v547, %v547
  %v612 = vpack.c.b16 %v548, %v548
  %v613 = vpack.c.b16 %v549, %v549
  %v614 = vpack.c.b16 %v550, %v550
  %v615 = vpack.c.b16 %v551, %v551
  %v616 = vpack.c.b16 %v552, %v552
  %v617 = vpack.c.b16 %v553, %v553
  %v618 = vpack.c.b16 %v554, %v554
  %v619 = vpack.c.b16 %v555, %v555
  %v620 = vpack.c.b16 %v556, %v556
  %v621 = vpack.c.b16 %v557, %v557
  %v622 = vpack.c.b16 %v558, %v558
  %v623 = vpack.c.b16 %v559, %v559
  %v624 = vpack.c.b16 %v560, %v560
  %v625 = vpack.c.b16 %v561, %v561
  %v626 = vpack.c.b16 %v562, %v562
  %v627 = vpack.c.b16 %v563, %v563
  %v628 = vpack.c.b16 %v564, %v564
  %v629 = vpack.c.b16 %v565, %v565
  %v630 = vpack.c.b16 %v566, %v566
  %v631 = vpack.c.b16 %v567, %v567
  %v632 = vpack.c.b16 %v568, %v568
  %v633 = vpack.c.b16 %v569, %v569
  %v634 = vpack.c.b16 %v570, %v570
  %v635 = vpack.c.b16 %v571, %v571
  %v636 = vpack.c.b16 %v572, %v572
  %v637 = vpack.c.b16 %v573, %v573
  %v638 = vpack.c.b16 %v574, %v574
  %v639 = vpack.c.b16 %v575, %v575
  %v640 = vpack.c.b16 %v576, %v576
  %v641 = vpack.c.b16 %v577, %v577
  %v642 = vpack.c.b16 %v578, %v578
  %v643 = vpack.c.b16 %v579, %v579
  %v644 = vpack.c.b16 %v580, %v580
  %v645 = vpack.c.b16 %v581, %v581
  %v646 = vpack.c.b16 %v582, %v582
  %v647 = vpack.c.b16 %v583, %v583
  %v648 = vpack.c.b16 %v584, %v584
  %v649 = vpack.c.b16 %v585, %v585
  %v650 = vpack.c.b16 %v586, %v586
  %v651 = vpack.c.b16 %v587, %v587
  %v652 = vpack.c.b16 %v588, %v588
  %v653 = vpack.c.b16 %v589, %v589
  %v654 = vpack.c.b16 %v590, %v590
  %v655 = vpack.c.b16 %v591, %v591
  %v656 = vpack.c.b16 %v592, %v592
  %v657 = vpack.c.b16 %v593, %v593
  %v658 = vpack.c.b16 %v594, %v594
  %v659 = vpack.c.b16 %v595, %v595
  %v660 = vpack.c.b16 %v596, %v596
  %725 = vst [vmem:[%s4] sm:$0xf] %v597
  %726 = vst [vmem:[%s4 + $0x4] sm:$0xf] %v598
  %727 = vst [vmem:[%s4 + $0x8] sm:$0xf] %v599
  %728 = vst [vmem:[%s4 + $0xc] sm:$0xf] %v600
  %729 = vst [vmem:[%s4 + $0x10] sm:$0xf] %v601
  %730 = vst [vmem:[%s4 + $0x14] sm:$0xf] %v602
  %731 = vst [vmem:[%s4 + $0x18] sm:$0xf] %v603
  %732 = vst [vmem:[%s4 + $0x1c] sm:$0xf] %v604
  %733 = vst [vmem:[%s4 + $0x20] sm:$0xf] %v605
  %734 = vst [vmem:[%s4 + $0x24] sm:$0xf] %v606
  %735 = vst [vmem:[%s4 + $0x28] sm:$0xf] %v607
  %736 = vst [vmem:[%s4 + $0x2c] sm:$0xf] %v608
  %737 = vst [vmem:[%s4 + $0x30] sm:$0xf] %v609
  %738 = vst [vmem:[%s4 + $0x34] sm:$0xf] %v610
  %739 = vst [vmem:[%s4 + $0x38] sm:$0xf] %v611
  %740 = vst [vmem:[%s4 + $0x3c] sm:$0xf] %v612
  %741 = vst [vmem:[%s4 + $0x40] sm:$0xf] %v613
  %742 = vst [vmem:[%s4 + $0x44] sm:$0xf] %v614
  %743 = vst [vmem:[%s4 + $0x48] sm:$0xf] %v615
  %744 = vst [vmem:[%s4 + $0x4c] sm:$0xf] %v616
  %745 = vst [vmem:[%s4 + $0x50] sm:$0xf] %v617
  %746 = vst [vmem:[%s4 + $0x54] sm:$0xf] %v618
  %747 = vst [vmem:[%s4 + $0x58] sm:$0xf] %v619
  %748 = vst [vmem:[%s4 + $0x5c] sm:$0xf] %v620
  %749 = vst [vmem:[%s4 + $0x60] sm:$0xf] %v621
  %750 = vst [vmem:[%s4 + $0x64] sm:$0xf] %v622
  %751 = vst [vmem:[%s4 + $0x68] sm:$0xf] %v623
  %752 = vst [vmem:[%s4 + $0x6c] sm:$0xf] %v624
  %753 = vst [vmem:[%s4 + $0x70] sm:$0xf] %v625
  %754 = vst [vmem:[%s4 + $0x74] sm:$0xf] %v626
  %755 = vst [vmem:[%s4 + $0x78] sm:$0xf] %v627
  %756 = vst [vmem:[%s4 + $0x7c] sm:$0xf] %v628
  %757 = vst [vmem:[%s4 + $0x80] sm:$0xf] %v629
  %758 = vst [vmem:[%s4 + $0x84] sm:$0xf] %v630
  %759 = vst [vmem:[%s4 + $0x88] sm:$0xf] %v631
  %760 = vst [vmem:[%s4 + $0x8c] sm:$0xf] %v632
  %761 = vst [vmem:[%s4 + $0x90] sm:$0xf] %v633
  %762 = vst [vmem:[%s4 + $0x94] sm:$0xf] %v634
  %763 = vst [vmem:[%s4 + $0x98] sm:$0xf] %v635
  %764 = vst [vmem:[%s4 + $0x9c] sm:$0xf] %v636
  %765 = vst [vmem:[%s4 + $0xa0] sm:$0xf] %v637
  %766 = vst [vmem:[%s4 + $0xa4] sm:$0xf] %v638
  %767 = vst [vmem:[%s4 + $0xa8] sm:$0xf] %v639
  %768 = vst [vmem:[%s4 + $0xac] sm:$0xf] %v640
  %769 = vst [vmem:[%s4 + $0xb0] sm:$0xf] %v641
  %770 = vst [vmem:[%s4 + $0xb4] sm:$0xf] %v642
  %771 = vst [vmem:[%s4 + $0xb8] sm:$0xf] %v643
  %772 = vst [vmem:[%s4 + $0xbc] sm:$0xf] %v644
  %773 = vst [vmem:[%s4 + $0xc0] sm:$0xf] %v645
  %774 = vst [vmem:[%s4 + $0xc4] sm:$0xf] %v646
  %775 = vst [vmem:[%s4 + $0xc8] sm:$0xf] %v647
  %776 = vst [vmem:[%s4 + $0xcc] sm:$0xf] %v648
  %777 = vst [vmem:[%s4 + $0xd0] sm:$0xf] %v649
  %778 = vst [vmem:[%s4 + $0xd4] sm:$0xf] %v650
  %779 = vst [vmem:[%s4 + $0xd8] sm:$0xf] %v651
  %780 = vst [vmem:[%s4 + $0xdc] sm:$0xf] %v652
  %781 = vst [vmem:[%s4 + $0xe0] sm:$0xf] %v653
  %782 = vst [vmem:[%s4 + $0xe4] sm:$0xf] %v654
  %783 = vst [vmem:[%s4 + $0xe8] sm:$0xf] %v655
  %784 = vst [vmem:[%s4 + $0xec] sm:$0xf] %v656
  %785 = vst [vmem:[%s4 + $0xf0] sm:$0xf] %v657
  %786 = vst [vmem:[%s4 + $0xf4] sm:$0xf] %v658
  %787 = vst [vmem:[%s4 + $0xf8] sm:$0xf] %v659
  %788 = vst [vmem:[%s4 + $0xfc] sm:$0xf] %v660
  %v789 = vadd.f32 %v215, %v218
  %v790 = vadd.f32 %v789, %v223
  %v791 = vadd.f32 %v790, %v226
  %v792 = vadd.f32 %v791, %v231
  %v793 = vadd.f32 %v792, %v234
  %v794 = vadd.f32 %v793, %v239
  %v795 = vadd.f32 %v794, %v242
  %v796 = vadd.f32 %v795, %v247
  %v797 = vadd.f32 %v796, %v250
  %v798 = vadd.f32 %v797, %v255
  %v799 = vadd.f32 %v798, %v258
  %v800 = vadd.f32 %v799, %v263
  %v801 = vadd.f32 %v800, %v266
  %v802 = vadd.f32 %v801, %v271
  %v803 = vadd.f32 %v802, %v274
  %v804 = vadd.f32 %v803, %v279
  %v805 = vadd.f32 %v804, %v282
  %v806 = vadd.f32 %v805, %v287
  %v807 = vadd.f32 %v806, %v290
  %v808 = vadd.f32 %v807, %v295
  %v809 = vadd.f32 %v808, %v298
  %v810 = vadd.f32 %v809, %v303
  %v811 = vadd.f32 %v810, %v306
  %v812 = vadd.f32 %v811, %v311
  %v813 = vadd.f32 %v812, %v314
  %v814 = vadd.f32 %v813, %v319
  %v815 = vadd.f32 %v814, %v322
  %v816 = vadd.f32 %v815, %v327
  %v817 = vadd.f32 %v816, %v330
  %v818 = vadd.f32 %v817, %v335
  %v819 = vadd.f32 %v818, %v338
  %v820 = vadd.f32 %v819, %v343
  %v821 = vadd.f32 %v820, %v346
  %v822 = vadd.f32 %v821, %v351
  %v823 = vadd.f32 %v822, %v354
  %v824 = vadd.f32 %v823, %v359
  %v825 = vadd.f32 %v824, %v362
  %v826 = vadd.f32 %v825, %v367
  %v827 = vadd.f32 %v826, %v370
  %v828 = vadd.f32 %v827, %v375
  %v829 = vadd.f32 %v828, %v378
  %v830 = vadd.f32 %v829, %v383
  %v831 = vadd.f32 %v830, %v386
  %v832 = vadd.f32 %v831, %v391
  %v833 = vadd.f32 %v832, %v394
  %v834 = vadd.f32 %v833, %v399
  %v835 = vadd.f32 %v834, %v402
  %v836 = vadd.f32 %v835, %v407
  %v837 = vadd.f32 %v836, %v410
  %v838 = vadd.f32 %v837, %v415
  %v839 = vadd.f32 %v838, %v418
  %v840 = vadd.f32 %v839, %v423
  %v841 = vadd.f32 %v840, %v426
  %v842 = vadd.f32 %v841, %v431
  %v843 = vadd.f32 %v842, %v434
  %v844 = vadd.f32 %v843, %v439
  %v845 = vadd.f32 %v844, %v442
  %v846 = vadd.f32 %v845, %v447
  %v847 = vadd.f32 %v846, %v450
  %v848 = vadd.f32 %v847, %v455
  %v849 = vadd.f32 %v848, %v458
  %v850 = vadd.f32 %v849, %v463
  %v851 = vadd.f32 %v850, %v466
  %v852 = vrot.slane %v851, 4
  %v853 = vadd.f32 %v851, %v852
  %v854 = vrot.slane %v853, 2
  %v855 = vadd.f32 %v853, %v854
  %v856 = vrot.slane %v855, 1
  %v857 = vadd.f32 %v855, %v856
  %v858 = vmul.f32 %v215, %v215
  %v859 = vmul.f32 %v218, %v218
  %v860 = vmul.f32 %v223, %v223
  %v861 = vmul.f32 %v226, %v226
  %v862 = vmul.f32 %v231, %v231
  %v863 = vmul.f32 %v234, %v234
  %v864 = vmul.f32 %v239, %v239
  %v865 = vmul.f32 %v242, %v242
  %v866 = vmul.f32 %v247, %v247
  %v867 = vmul.f32 %v250, %v250
  %v868 = vmul.f32 %v255, %v255
  %v869 = vmul.f32 %v258, %v258
  %v870 = vmul.f32 %v263, %v263
  %v871 = vmul.f32 %v266, %v266
  %v872 = vmul.f32 %v271, %v271
  %v873 = vmul.f32 %v274, %v274
  %v874 = vmul.f32 %v279, %v279
  %v875 = vmul.f32 %v282, %v282
  %v876 = vmul.f32 %v287, %v287
  %v877 = vmul.f32 %v290, %v290
  %v878 = vmul.f32 %v295, %v295
  %v879 = vmul.f32 %v298, %v298
  %v880 = vmul.f32 %v303, %v303
  %v881 = vmul.f32 %v306, %v306
  %v882 = vmul.f32 %v311, %v311
  %v883 = vmul.f32 %v314, %v314
  %v884 = vmul.f32 %v319, %v319
  %v885 = vmul.f32 %v322, %v322
  %v886 = vmul.f32 %v327, %v327
  %v887 = vmul.f32 %v330, %v330
  %v888 = vmul.f32 %v335, %v335
  %v889 = vmul.f32 %v338, %v338
  %v890 = vmul.f32 %v343, %v343
  %v891 = vmul.f32 %v346, %v346
  %v892 = vmul.f32 %v351, %v351
  %v893 = vmul.f32 %v354, %v354
  %v894 = vmul.f32 %v359, %v359
  %v895 = vmul.f32 %v362, %v362
  %v896 = vmul.f32 %v367, %v367
  %v897 = vmul.f32 %v370, %v370
  %v898 = vmul.f32 %v375, %v375
  %v899 = vmul.f32 %v378, %v378
  %v900 = vmul.f32 %v383, %v383
  %v901 = vmul.f32 %v386, %v386
  %v902 = vmul.f32 %v391, %v391
  %v903 = vmul.f32 %v394, %v394
  %v904 = vmul.f32 %v399, %v399
  %v905 = vmul.f32 %v402, %v402
  %v906 = vmul.f32 %v407, %v407
  %v907 = vmul.f32 %v410, %v410
  %v908 = vmul.f32 %v415, %v415
  %v909 = vmul.f32 %v418, %v418
  %v910 = vmul.f32 %v423, %v423
  %v911 = vmul.f32 %v426, %v426
  %v912 = vmul.f32 %v431, %v431
  %v913 = vmul.f32 %v434, %v434
  %v914 = vmul.f32 %v439, %v439
  %v915 = vmul.f32 %v442, %v442
  %v916 = vmul.f32 %v447, %v447
  %v917 = vmul.f32 %v450, %v450
  %v918 = vmul.f32 %v455, %v455
  %v919 = vmul.f32 %v458, %v458
  %v920 = vmul.f32 %v463, %v463
  %v921 = vmul.f32 %v466, %v466
  %v922 = vadd.f32 %v858, %v859
  %v923 = vadd.f32 %v922, %v860
  %v924 = vadd.f32 %v923, %v861
  %v925 = vadd.f32 %v924, %v862
  %v926 = vadd.f32 %v925, %v863
  %v927 = vadd.f32 %v926, %v864
  %v928 = vadd.f32 %v927, %v865
  %v929 = vadd.f32 %v928, %v866
  %v930 = vadd.f32 %v929, %v867
  %v931 = vadd.f32 %v930, %v868
  %v932 = vadd.f32 %v931, %v869
  %v933 = vadd.f32 %v932, %v870
  %v934 = vadd.f32 %v933, %v871
  %v935 = vadd.f32 %v934, %v872
  %v936 = vadd.f32 %v935, %v873
  %v937 = vadd.f32 %v936, %v874
  %v938 = vadd.f32 %v937, %v875
  %v939 = vadd.f32 %v938, %v876
  %v940 = vadd.f32 %v939, %v877
  %v941 = vadd.f32 %v940, %v878
  %v942 = vadd.f32 %v941, %v879
  %v943 = vadd.f32 %v942, %v880
  %v944 = vadd.f32 %v943, %v881
  %v945 = vadd.f32 %v944, %v882
  %v946 = vadd.f32 %v945, %v883
  %v947 = vadd.f32 %v946, %v884
  %v948 = vadd.f32 %v947, %v885
  %v949 = vadd.f32 %v948, %v886
  %v950 = vadd.f32 %v949, %v887
  %v951 = vadd.f32 %v950, %v888
  %v952 = vadd.f32 %v951, %v889
  %v953 = vadd.f32 %v952, %v890
  %v954 = vadd.f32 %v953, %v891
  %v955 = vadd.f32 %v954, %v892
  %v956 = vadd.f32 %v955, %v893
  %v957 = vadd.f32 %v956, %v894
  %v958 = vadd.f32 %v957, %v895
  %v959 = vadd.f32 %v958, %v896
  %v960 = vadd.f32 %v959, %v897
  %v961 = vadd.f32 %v960, %v898
  %v962 = vadd.f32 %v961, %v899
  %v963 = vadd.f32 %v962, %v900
  %v964 = vadd.f32 %v963, %v901
  %v965 = vadd.f32 %v964, %v902
  %v966 = vadd.f32 %v965, %v903
  %v967 = vadd.f32 %v966, %v904
  %v968 = vadd.f32 %v967, %v905
  %v969 = vadd.f32 %v968, %v906
  %v970 = vadd.f32 %v969, %v907
  %v971 = vadd.f32 %v970, %v908
  %v972 = vadd.f32 %v971, %v909
  %v973 = vadd.f32 %v972, %v910
  %v974 = vadd.f32 %v973, %v911
  %v975 = vadd.f32 %v974, %v912
  %v976 = vadd.f32 %v975, %v913
  %v977 = vadd.f32 %v976, %v914
  %v978 = vadd.f32 %v977, %v915
  %v979 = vadd.f32 %v978, %v916
  %v980 = vadd.f32 %v979, %v917
  %v981 = vadd.f32 %v980, %v918
  %v982 = vadd.f32 %v981, %v919
  %v983 = vadd.f32 %v982, %v920
  %v984 = vadd.f32 %v983, %v921
  %v985 = vrot.slane %v984, 4
  %v986 = vadd.f32 %v984, %v985
  %v987 = vrot.slane %v986, 2
  %v988 = vadd.f32 %v986, %v987
  %v989 = vrot.slane %v988, 1
  %v990 = vadd.f32 %v988, %v989
  %vm991 = vcmask 1040384
  %v992 = vsel %vm991, %v857, %v990
  %993 = vst [vmem:[%s5] sm:$0x3] %v992
  // Predicated region
  $region18: #{basic_block_forward.4} parent=0 // pred_check
    _
  $region19: #{basic_block_forward.4} parent=0 // pred_check_branch
    %995 = sbr.rel (0) target = $region21
  $region20: #{basic_block_forward.4} parent=0 // pred_region
    _
  $region21: #{basic_block_forward.4} parent=0 // pred_fallthru
    _
  // Predicated region
  $region22: #{basic_block_forward.4} parent=0 // pred_check
    _
  $region23: #{basic_block_forward.4} parent=0 // pred_check_branch
    %997 = sbr.rel (0) target = $region25
  $region24: #{basic_block_forward.4} parent=0 // pred_region
    _
  $region25: #{basic_block_forward.4} parent=0 // pred_fallthru
    _
  // Predicated region
  $region26: #{basic_block_forward.4} parent=0 // pred_check
    _
  $region27: #{basic_block_forward.4} parent=0 // pred_check_branch
    %999 = sbr.rel (0) target = $region29
  $region28: #{basic_block_forward.4} parent=0 // pred_region
    _
  $region29: #{basic_block_forward.4} parent=0 // pred_fallthru
    _
  // Predicated region
  $region30: #{basic_block_forward.4} parent=0 // pred_check
    _
  $region31: #{basic_block_forward.4} parent=0 // pred_check_branch
    %1001 = sbr.rel (0) target = $region33
  $region32: #{basic_block_forward.4} parent=0 // pred_region
    _
  $region33: #{basic_block_forward.4} parent=0 // pred_fallthru
    _

// kernel: basic_block_forward.6
$region0: #{basic_block_forward.6}
  #allocation0 [shape = 'u32[]', space=smem, size = 0x4, offset = 0x4, fixed_abs, tag = 'smem constant byte address 0x4 - core index']
  #allocation1 [shape = 'u32[144,128]{1,0:T(1,128)}', space=vmem, size = 0x12000, scoped, tag = 'internal scratch']
  %s0 = inlined_call_operand.vmem [shape: bf16[512,128], index: 0, kind: input, shape index: {}]
  %s1 = inlined_call_operand.vmem [shape: bf16[128,128], index: 1, kind: input, shape index: {}]
  %s2 = inlined_call_operand.vmem [shape: f32[1,128], index: 2, kind: input, shape index: {}]
  %s3 = inlined_call_operand.vmem [shape: f32[1,128], index: 3, kind: input, shape index: {}]
  %s4 = inlined_call_operand.vmem [shape: bf16[512,128], index: 4, kind: output, shape index: {0}]
  %s5 = inlined_call_operand.vmem [shape: f32[1,2,128], index: 5, kind: output, shape index: {1}]
  %6 = xla_tuple %s4, %s5
  %s7 = sld [smem:[#allocation0]]
  $region34: #{basic_block_forward.6} parent=0
    _
  %s9 = ssub.s32 1, %s7
  %s10 = scalar_select 0, %s9, %s7
  // Predicated region
  $region2: #{basic_block_forward.6} parent=0 // pred_check
    _
  $region3: #{basic_block_forward.6} parent=0 // pred_check_branch
    %12 = sbr.rel (0) target = $region5
  $region4: #{basic_block_forward.6} parent=0 // pred_region
    _
  $region5: #{basic_block_forward.6} parent=0 // pred_fallthru
    _
  // Predicated region
  $region6: #{basic_block_forward.6} parent=0 // pred_check
    _
  $region7: #{basic_block_forward.6} parent=0 // pred_check_branch
    %14 = sbr.rel (0) target = $region9
  $region8: #{basic_block_forward.6} parent=0 // pred_region
    _
  $region9: #{basic_block_forward.6} parent=0 // pred_fallthru
    _
  // Predicated region
  $region10: #{basic_block_forward.6} parent=0 // pred_check
    _
  $region11: #{basic_block_forward.6} parent=0 // pred_check_branch
    %16 = sbr.rel (0) target = $region13
  $region12: #{basic_block_forward.6} parent=0 // pred_region
    _
  $region13: #{basic_block_forward.6} parent=0 // pred_fallthru
    _
  // Predicated region
  $region14: #{basic_block_forward.6} parent=0 // pred_check
    _
  $region15: #{basic_block_forward.6} parent=0 // pred_check_branch
    %18 = sbr.rel (0) target = $region17
  $region16: #{basic_block_forward.6} parent=0 // pred_region
    _
  $region17: #{basic_block_forward.6} parent=0 // pred_fallthru
    _
  %v20 = vld [vmem:[%s0] sm:$0xf]
  %v21 = vld [vmem:[%s0 + $0x4] sm:$0xf]
  %v22 = vld [vmem:[%s0 + $0x8] sm:$0xf]
  %v23 = vld [vmem:[%s0 + $0xc] sm:$0xf]
  %v24 = vld [vmem:[%s0 + $0x10] sm:$0xf]
  %v25 = vld [vmem:[%s0 + $0x14] sm:$0xf]
  %v26 = vld [vmem:[%s0 + $0x18] sm:$0xf]
  %v27 = vld [vmem:[%s0 + $0x1c] sm:$0xf]
  %v28 = vld [vmem:[%s0 + $0x20] sm:$0xf]
  %v29 = vld [vmem:[%s0 + $0x24] sm:$0xf]
  %v30 = vld [vmem:[%s0 + $0x28] sm:$0xf]
  %v31 = vld [vmem:[%s0 + $0x2c] sm:$0xf]
  %v32 = vld [vmem:[%s0 + $0x30] sm:$0xf]
  %v33 = vld [vmem:[%s0 + $0x34] sm:$0xf]
  %v34 = vld [vmem:[%s0 + $0x38] sm:$0xf]
  %v35 = vld [vmem:[%s0 + $0x3c] sm:$0xf]
  %v36 = vld [vmem:[%s0 + $0x40] sm:$0xf]
  %v37 = vld [vmem:[%s0 + $0x44] sm:$0xf]
  %v38 = vld [vmem:[%s0 + $0x48] sm:$0xf]
  %v39 = vld [vmem:[%s0 + $0x4c] sm:$0xf]
  %v40 = vld [vmem:[%s0 + $0x50] sm:$0xf]
  %v41 = vld [vmem:[%s0 + $0x54] sm:$0xf]
  %v42 = vld [vmem:[%s0 + $0x58] sm:$0xf]
  %v43 = vld [vmem:[%s0 + $0x5c] sm:$0xf]
  %v44 = vld [vmem:[%s0 + $0x60] sm:$0xf]
  %v45 = vld [vmem:[%s0 + $0x64] sm:$0xf]
  %v46 = vld [vmem:[%s0 + $0x68] sm:$0xf]
  %v47 = vld [vmem:[%s0 + $0x6c] sm:$0xf]
  %v48 = vld [vmem:[%s0 + $0x70] sm:$0xf]
  %v49 = vld [vmem:[%s0 + $0x74] sm:$0xf]
  %v50 = vld [vmem:[%s0 + $0x78] sm:$0xf]
  %v51 = vld [vmem:[%s0 + $0x7c] sm:$0xf]
  %v52 = vld [vmem:[%s0 + $0x80] sm:$0xf]
  %v53 = vld [vmem:[%s0 + $0x84] sm:$0xf]
  %v54 = vld [vmem:[%s0 + $0x88] sm:$0xf]
  %v55 = vld [vmem:[%s0 + $0x8c] sm:$0xf]
  %v56 = vld [vmem:[%s0 + $0x90] sm:$0xf]
  %v57 = vld [vmem:[%s0 + $0x94] sm:$0xf]
  %v58 = vld [vmem:[%s0 + $0x98] sm:$0xf]
  %v59 = vld [vmem:[%s0 + $0x9c] sm:$0xf]
  %v60 = vld [vmem:[%s0 + $0xa0] sm:$0xf]
  %v61 = vld [vmem:[%s0 + $0xa4] sm:$0xf]
  %v62 = vld [vmem:[%s0 + $0xa8] sm:$0xf]
  %v63 = vld [vmem:[%s0 + $0xac] sm:$0xf]
  %v64 = vld [vmem:[%s0 + $0xb0] sm:$0xf]
  %v65 = vld [vmem:[%s0 + $0xb4] sm:$0xf]
  %v66 = vld [vmem:[%s0 + $0xb8] sm:$0xf]
  %v67 = vld [vmem:[%s0 + $0xbc] sm:$0xf]
  %v68 = vld [vmem:[%s0 + $0xc0] sm:$0xf]
  %v69 = vld [vmem:[%s0 + $0xc4] sm:$0xf]
  %v70 = vld [vmem:[%s0 + $0xc8] sm:$0xf]
  %v71 = vld [vmem:[%s0 + $0xcc] sm:$0xf]
  %v72 = vld [vmem:[%s0 + $0xd0] sm:$0xf]
  %v73 = vld [vmem:[%s0 + $0xd4] sm:$0xf]
  %v74 = vld [vmem:[%s0 + $0xd8] sm:$0xf]
  %v75 = vld [vmem:[%s0 + $0xdc] sm:$0xf]
  %v76 = vld [vmem:[%s0 + $0xe0] sm:$0xf]
  %v77 = vld [vmem:[%s0 + $0xe4] sm:$0xf]
  %v78 = vld [vmem:[%s0 + $0xe8] sm:$0xf]
  %v79 = vld [vmem:[%s0 + $0xec] sm:$0xf]
  %v80 = vld [vmem:[%s0 + $0xf0] sm:$0xf]
  %v81 = vld [vmem:[%s0 + $0xf4] sm:$0xf]
  %v82 = vld [vmem:[%s0 + $0xf8] sm:$0xf]
  %v83 = vld [vmem:[%s0 + $0xfc] sm:$0xf]
  %v84 = vunpack.c.l.bf16 %v20
  %v85 = vunpack.c.l.bf16 %v21
  %v86 = vunpack.c.l.bf16 %v22
  %v87 = vunpack.c.l.bf16 %v23
  %v88 = vunpack.c.l.bf16 %v24
  %v89 = vunpack.c.l.bf16 %v25
  %v90 = vunpack.c.l.bf16 %v26
  %v91 = vunpack.c.l.bf16 %v27
  %v92 = vunpack.c.l.bf16 %v28
  %v93 = vunpack.c.l.bf16 %v29
  %v94 = vunpack.c.l.bf16 %v30
  %v95 = vunpack.c.l.bf16 %v31
  %v96 = vunpack.c.l.bf16 %v32
  %v97 = vunpack.c.l.bf16 %v33
  %v98 = vunpack.c.l.bf16 %v34
  %v99 = vunpack.c.l.bf16 %v35
  %v100 = vunpack.c.l.bf16 %v36
  %v101 = vunpack.c.l.bf16 %v37
  %v102 = vunpack.c.l.bf16 %v38
  %v103 = vunpack.c.l.bf16 %v39
  %v104 = vunpack.c.l.bf16 %v40
  %v105 = vunpack.c.l.bf16 %v41
  %v106 = vunpack.c.l.bf16 %v42
  %v107 = vunpack.c.l.bf16 %v43
  %v108 = vunpack.c.l.bf16 %v44
  %v109 = vunpack.c.l.bf16 %v45
  %v110 = vunpack.c.l.bf16 %v46
  %v111 = vunpack.c.l.bf16 %v47
  %v112 = vunpack.c.l.bf16 %v48
  %v113 = vunpack.c.l.bf16 %v49
  %v114 = vunpack.c.l.bf16 %v50
  %v115 = vunpack.c.l.bf16 %v51
  %v116 = vunpack.c.l.bf16 %v52
  %v117 = vunpack.c.l.bf16 %v53
  %v118 = vunpack.c.l.bf16 %v54
  %v119 = vunpack.c.l.bf16 %v55
  %v120 = vunpack.c.l.bf16 %v56
  %v121 = vunpack.c.l.bf16 %v57
  %v122 = vunpack.c.l.bf16 %v58
  %v123 = vunpack.c.l.bf16 %v59
  %v124 = vunpack.c.l.bf16 %v60
  %v125 = vunpack.c.l.bf16 %v61
  %v126 = vunpack.c.l.bf16 %v62
  %v127 = vunpack.c.l.bf16 %v63
  %v128 = vunpack.c.l.bf16 %v64
  %v129 = vunpack.c.l.bf16 %v65
  %v130 = vunpack.c.l.bf16 %v66
  %v131 = vunpack.c.l.bf16 %v67
  %v132 = vunpack.c.l.bf16 %v68
  %v133 = vunpack.c.l.bf16 %v69
  %v134 = vunpack.c.l.bf16 %v70
  %v135 = vunpack.c.l.bf16 %v71
  %v136 = vunpack.c.l.bf16 %v72
  %v137 = vunpack.c.l.bf16 %v73
  %v138 = vunpack.c.l.bf16 %v74
  %v139 = vunpack.c.l.bf16 %v75
  %v140 = vunpack.c.l.bf16 %v76
  %v141 = vunpack.c.l.bf16 %v77
  %v142 = vunpack.c.l.bf16 %v78
  %v143 = vunpack.c.l.bf16 %v79
  %v144 = vunpack.c.l.bf16 %v80
  %v145 = vunpack.c.l.bf16 %v81
  %v146 = vunpack.c.l.bf16 %v82
  %v147 = vunpack.c.l.bf16 %v83
  %v148 = vld [vmem:[%s2] sm:$0x1]
  %v150 = vlaneseq
  %v151 = vshrl.u32 %v150, 7
  %v152 = vsub.s32 0, %v151
  %v153 = vrot.slane %v148, %v152
  %v155 = vmul.f32 %v84, %v153
  %v156 = vmul.f32 %v85, %v153
  %v157 = vmul.f32 %v86, %v153
  %v158 = vmul.f32 %v87, %v153
  %v159 = vmul.f32 %v88, %v153
  %v160 = vmul.f32 %v89, %v153
  %v161 = vmul.f32 %v90, %v153
  %v162 = vmul.f32 %v91, %v153
  %v163 = vmul.f32 %v92, %v153
  %v164 = vmul.f32 %v93, %v153
  %v165 = vmul.f32 %v94, %v153
  %v166 = vmul.f32 %v95, %v153
  %v167 = vmul.f32 %v96, %v153
  %v168 = vmul.f32 %v97, %v153
  %v169 = vmul.f32 %v98, %v153
  %v170 = vmul.f32 %v99, %v153
  %v171 = vmul.f32 %v100, %v153
  %v172 = vmul.f32 %v101, %v153
  %v173 = vmul.f32 %v102, %v153
  %v174 = vmul.f32 %v103, %v153
  %v175 = vmul.f32 %v104, %v153
  %v176 = vmul.f32 %v105, %v153
  %v177 = vmul.f32 %v106, %v153
  %v178 = vmul.f32 %v107, %v153
  %v179 = vmul.f32 %v108, %v153
  %v180 = vmul.f32 %v109, %v153
  %v181 = vmul.f32 %v110, %v153
  %v182 = vmul.f32 %v111, %v153
  %v183 = vmul.f32 %v112, %v153
  %v184 = vmul.f32 %v113, %v153
  %v185 = vmul.f32 %v114, %v153
  %v186 = vmul.f32 %v115, %v153
  %v187 = vmul.f32 %v116, %v153
  %v188 = vmul.f32 %v117, %v153
  %v189 = vmul.f32 %v118, %v153
  %v190 = vmul.f32 %v119, %v153
  %v191 = vmul.f32 %v120, %v153
  %v192 = vmul.f32 %v121, %v153
  %v193 = vmul.f32 %v122, %v153
  %v194 = vmul.f32 %v123, %v153
  %v195 = vmul.f32 %v124, %v153
  %v196 = vmul.f32 %v125, %v153
  %v197 = vmul.f32 %v126, %v153
  %v198 = vmul.f32 %v127, %v153
  %v199 = vmul.f32 %v128, %v153
  %v200 = vmul.f32 %v129, %v153
  %v201 = vmul.f32 %v130, %v153
  %v202 = vmul.f32 %v131, %v153
  %v203 = vmul.f32 %v132, %v153
  %v204 = vmul.f32 %v133, %v153
  %v205 = vmul.f32 %v134, %v153
  %v206 = vmul.f32 %v135, %v153
  %v207 = vmul.f32 %v136, %v153
  %v208 = vmul.f32 %v137, %v153
  %v209 = vmul.f32 %v138, %v153
  %v210 = vmul.f32 %v139, %v153
  %v211 = vmul.f32 %v140, %v153
  %v212 = vmul.f32 %v141, %v153
  %v213 = vmul.f32 %v142, %v153
  %v214 = vmul.f32 %v143, %v153
  %v215 = vmul.f32 %v144, %v153
  %v216 = vmul.f32 %v145, %v153
  %v217 = vmul.f32 %v146, %v153
  %v218 = vmul.f32 %v147, %v153
  %v219 = vld [vmem:[%s3] sm:$0x1]
  %v221 = vlaneseq
  %v222 = vshrl.u32 %v221, 7
  %v223 = vsub.s32 0, %v222
  %v224 = vrot.slane %v219, %v223
  %v226 = vadd.f32 %v155, %v224
  %v227 = vadd.f32 %v156, %v224
  %v228 = vadd.f32 %v157, %v224
  %v229 = vadd.f32 %v158, %v224
  %v230 = vadd.f32 %v159, %v224
  %v231 = vadd.f32 %v160, %v224
  %v232 = vadd.f32 %v161, %v224
  %v233 = vadd.f32 %v162, %v224
  %v234 = vadd.f32 %v163, %v224
  %v235 = vadd.f32 %v164, %v224
  %v236 = vadd.f32 %v165, %v224
  %v237 = vadd.f32 %v166, %v224
  %v238 = vadd.f32 %v167, %v224
  %v239 = vadd.f32 %v168, %v224
  %v240 = vadd.f32 %v169, %v224
  %v241 = vadd.f32 %v170, %v224
  %v242 = vadd.f32 %v171, %v224
  %v243 = vadd.f32 %v172, %v224
  %v244 = vadd.f32 %v173, %v224
  %v245 = vadd.f32 %v174, %v224
  %v246 = vadd.f32 %v175, %v224
  %v247 = vadd.f32 %v176, %v224
  %v248 = vadd.f32 %v177, %v224
  %v249 = vadd.f32 %v178, %v224
  %v250 = vadd.f32 %v179, %v224
  %v251 = vadd.f32 %v180, %v224
  %v252 = vadd.f32 %v181, %v224
  %v253 = vadd.f32 %v182, %v224
  %v254 = vadd.f32 %v183, %v224
  %v255 = vadd.f32 %v184, %v224
  %v256 = vadd.f32 %v185, %v224
  %v257 = vadd.f32 %v186, %v224
  %v258 = vadd.f32 %v187, %v224
  %v259 = vadd.f32 %v188, %v224
  %v260 = vadd.f32 %v189, %v224
  %v261 = vadd.f32 %v190, %v224
  %v262 = vadd.f32 %v191, %v224
  %v263 = vadd.f32 %v192, %v224
  %v264 = vadd.f32 %v193, %v224
  %v265 = vadd.f32 %v194, %v224
  %v266 = vadd.f32 %v195, %v224
  %v267 = vadd.f32 %v196, %v224
  %v268 = vadd.f32 %v197, %v224
  %v269 = vadd.f32 %v198, %v224
  %v270 = vadd.f32 %v199, %v224
  %v271 = vadd.f32 %v200, %v224
  %v272 = vadd.f32 %v201, %v224
  %v273 = vadd.f32 %v202, %v224
  %v274 = vadd.f32 %v203, %v224
  %v275 = vadd.f32 %v204, %v224
  %v276 = vadd.f32 %v205, %v224
  %v277 = vadd.f32 %v206, %v224
  %v278 = vadd.f32 %v207, %v224
  %v279 = vadd.f32 %v208, %v224
  %v280 = vadd.f32 %v209, %v224
  %v281 = vadd.f32 %v210, %v224
  %v282 = vadd.f32 %v211, %v224
  %v283 = vadd.f32 %v212, %v224
  %v284 = vadd.f32 %v213, %v224
  %v285 = vadd.f32 %v214, %v224
  %v286 = vadd.f32 %v215, %v224
  %v287 = vadd.f32 %v216, %v224
  %v288 = vadd.f32 %v217, %v224
  %v289 = vadd.f32 %v218, %v224
  %v290 = vmax.f32 %v226, 0.0
  %v291 = vmax.f32 %v227, 0.0
  %v292 = vmax.f32 %v228, 0.0
  %v293 = vmax.f32 %v229, 0.0
  %v294 = vmax.f32 %v230, 0.0
  %v295 = vmax.f32 %v231, 0.0
  %v296 = vmax.f32 %v232, 0.0
  %v297 = vmax.f32 %v233, 0.0
  %v298 = vmax.f32 %v234, 0.0
  %v299 = vmax.f32 %v235, 0.0
  %v300 = vmax.f32 %v236, 0.0
  %v301 = vmax.f32 %v237, 0.0
  %v302 = vmax.f32 %v238, 0.0
  %v303 = vmax.f32 %v239, 0.0
  %v304 = vmax.f32 %v240, 0.0
  %v305 = vmax.f32 %v241, 0.0
  %v306 = vmax.f32 %v242, 0.0
  %v307 = vmax.f32 %v243, 0.0
  %v308 = vmax.f32 %v244, 0.0
  %v309 = vmax.f32 %v245, 0.0
  %v310 = vmax.f32 %v246, 0.0
  %v311 = vmax.f32 %v247, 0.0
  %v312 = vmax.f32 %v248, 0.0
  %v313 = vmax.f32 %v249, 0.0
  %v314 = vmax.f32 %v250, 0.0
  %v315 = vmax.f32 %v251, 0.0
  %v316 = vmax.f32 %v252, 0.0
  %v317 = vmax.f32 %v253, 0.0
  %v318 = vmax.f32 %v254, 0.0
  %v319 = vmax.f32 %v255, 0.0
  %v320 = vmax.f32 %v256, 0.0
  %v321 = vmax.f32 %v257, 0.0
  %v322 = vmax.f32 %v258, 0.0
  %v323 = vmax.f32 %v259, 0.0
  %v324 = vmax.f32 %v260, 0.0
  %v325 = vmax.f32 %v261, 0.0
  %v326 = vmax.f32 %v262, 0.0
  %v327 = vmax.f32 %v263, 0.0
  %v328 = vmax.f32 %v264, 0.0
  %v329 = vmax.f32 %v265, 0.0
  %v330 = vmax.f32 %v266, 0.0
  %v331 = vmax.f32 %v267, 0.0
  %v332 = vmax.f32 %v268, 0.0
  %v333 = vmax.f32 %v269, 0.0
  %v334 = vmax.f32 %v270, 0.0
  %v335 = vmax.f32 %v271, 0.0
  %v336 = vmax.f32 %v272, 0.0
  %v337 = vmax.f32 %v273, 0.0
  %v338 = vmax.f32 %v274, 0.0
  %v339 = vmax.f32 %v275, 0.0
  %v340 = vmax.f32 %v276, 0.0
  %v341 = vmax.f32 %v277, 0.0
  %v342 = vmax.f32 %v278, 0.0
  %v343 = vmax.f32 %v279, 0.0
  %v344 = vmax.f32 %v280, 0.0
  %v345 = vmax.f32 %v281, 0.0
  %v346 = vmax.f32 %v282, 0.0
  %v347 = vmax.f32 %v283, 0.0
  %v348 = vmax.f32 %v284, 0.0
  %v349 = vmax.f32 %v285, 0.0
  %v350 = vmax.f32 %v286, 0.0
  %v351 = vmax.f32 %v287, 0.0
  %v352 = vmax.f32 %v288, 0.0
  %v353 = vmax.f32 %v289, 0.0
  %v354 = vpack.c.bf16 %v291, %v290
  %v355 = vpack.c.bf16 %v293, %v292
  %v356 = vpack.c.bf16 %v295, %v294
  %v357 = vpack.c.bf16 %v297, %v296
  %v358 = vpack.c.bf16 %v299, %v298
  %v359 = vpack.c.bf16 %v301, %v300
  %v360 = vpack.c.bf16 %v303, %v302
  %v361 = vpack.c.bf16 %v305, %v304
  %v362 = vpack.c.bf16 %v307, %v306
  %v363 = vpack.c.bf16 %v309, %v308
  %v364 = vpack.c.bf16 %v311, %v310
  %v365 = vpack.c.bf16 %v313, %v312
  %v366 = vpack.c.bf16 %v315, %v314
  %v367 = vpack.c.bf16 %v317, %v316
  %v368 = vpack.c.bf16 %v319, %v318
  %v369 = vpack.c.bf16 %v321, %v320
  %v370 = vpack.c.bf16 %v323, %v322
  %v371 = vpack.c.bf16 %v325, %v324
  %v372 = vpack.c.bf16 %v327, %v326
  %v373 = vpack.c.bf16 %v329, %v328
  %v374 = vpack.c.bf16 %v331, %v330
  %v375 = vpack.c.bf16 %v333, %v332
  %v376 = vpack.c.bf16 %v335, %v334
  %v377 = vpack.c.bf16 %v337, %v336
  %v378 = vpack.c.bf16 %v339, %v338
  %v379 = vpack.c.bf16 %v341, %v340
  %v380 = vpack.c.bf16 %v343, %v342
  %v381 = vpack.c.bf16 %v345, %v344
  %v382 = vpack.c.bf16 %v347, %v346
  %v383 = vpack.c.bf16 %v349, %v348
  %v384 = vpack.c.bf16 %v351, %v350
  %v385 = vpack.c.bf16 %v353, %v352
  %v386 = vld [vmem:[%s1] sm:$0xf]
  %v387 = vld [vmem:[%s1 + $0x4] sm:$0xf]
  %v388 = vld [vmem:[%s1 + $0x8] sm:$0xf]
  %v389 = vld [vmem:[%s1 + $0xc] sm:$0xf]
  %v390 = vld [vmem:[%s1 + $0x10] sm:$0xf]
  %v391 = vld [vmem:[%s1 + $0x14] sm:$0xf]
  %v392 = vld [vmem:[%s1 + $0x18] sm:$0xf]
  %v393 = vld [vmem:[%s1 + $0x1c] sm:$0xf]
  %v394 = vld [vmem:[%s1 + $0x20] sm:$0xf]
  %v395 = vld [vmem:[%s1 + $0x24] sm:$0xf]
  %v396 = vld [vmem:[%s1 + $0x28] sm:$0xf]
  %v397 = vld [vmem:[%s1 + $0x2c] sm:$0xf]
  %v398 = vld [vmem:[%s1 + $0x30] sm:$0xf]
  %v399 = vld [vmem:[%s1 + $0x34] sm:$0xf]
  %v400 = vld [vmem:[%s1 + $0x38] sm:$0xf]
  %v401 = vld [vmem:[%s1 + $0x3c] sm:$0xf]
  %v418 = vunpack.c.l.b16 %v386
  %v419 = vunpack.c.l.b16 %v387
  %v420 = vunpack.c.l.b16 %v388
  %v421 = vunpack.c.l.b16 %v389
  %v422 = vunpack.c.l.b16 %v390
  %v423 = vunpack.c.l.b16 %v391
  %v424 = vunpack.c.l.b16 %v392
  %v425 = vunpack.c.l.b16 %v393
  %v426 = vunpack.c.l.b16 %v394
  %v427 = vunpack.c.l.b16 %v395
  %v428 = vunpack.c.l.b16 %v396
  %v429 = vunpack.c.l.b16 %v397
  %v430 = vunpack.c.l.b16 %v398
  %v431 = vunpack.c.l.b16 %v399
  %v432 = vunpack.c.l.b16 %v400
  %v433 = vunpack.c.l.b16 %v401
  %v434 = vpack.c.b16 %v419, %v418
  %v435 = vpack.c.b16 %v421, %v420
  %v436 = vpack.c.b16 %v423, %v422
  %v437 = vpack.c.b16 %v425, %v424
  %v438 = vpack.c.b16 %v427, %v426
  %v439 = vpack.c.b16 %v429, %v428
  %v440 = vpack.c.b16 %v431, %v430
  %v441 = vpack.c.b16 %v433, %v432
  %450 = vmatprep.subr.bf16.mxu0 0
  %451 = vmatpush1.bf16.msra.mxu0 %v434
  %452 = vmatprep.subr.bf16.mxu0 0
  %453 = vmatpush1.bf16.msra.mxu0 %v435
  %454 = vmatprep.subr.bf16.mxu0 0
  %455 = vmatpush1.bf16.msra.mxu0 %v436
  %456 = vmatprep.subr.bf16.mxu0 0
  %457 = vmatpush1.bf16.msra.mxu0 %v437
  %458 = vmatprep.subr.bf16.mxu0 0
  %459 = vmatpush1.bf16.msra.mxu0 %v438
  %460 = vmatprep.subr.bf16.mxu0 0
  %461 = vmatpush1.bf16.msra.mxu0 %v439
  %462 = vmatprep.subr.bf16.mxu0 0
  %463 = vmatpush1.bf16.msra.mxu0 %v440
  %464 = vmatprep.subr.bf16.mxu0 0
  %465 = vmatpush1.bf16.msra.mxu0 %v441
  %466 = vmatprep.subr.bf16.mxu0 0
  %467 = vmatpush1.bf16.msra.mxu0 0
  %468 = vmatprep.subr.bf16.mxu0 0
  %469 = vmatpush1.bf16.msra.mxu0 0
  %470 = vmatprep.subr.bf16.mxu0 0
  %471 = vmatpush1.bf16.msra.mxu0 0
  %472 = vmatprep.subr.bf16.mxu0 0
  %473 = vmatpush1.bf16.msra.mxu0 0
  %474 = vmatprep.subr.bf16.mxu0 0
  %475 = vmatpush1.bf16.msra.mxu0 0
  %476 = vmatprep.subr.bf16.mxu0 0
  %477 = vmatpush1.bf16.msra.mxu0 0
  %478 = vmatprep.subr.bf16.mxu0 0
  %479 = vmatpush1.bf16.msra.mxu0 0
  %480 = vmatprep.subr.bf16.mxu0 0
  %481 = vmatpush1.bf16.msra.mxu0 0
  %482 = vmatprep.mubr.bf16.mxu0 0
  %483 = vmatmul.mubr.bf16.gmra.mrb[0].mxu0 %v354
  %v484 = vpop.f32.mrb[0].mxu0
  %v485 = vadd.f32 0.0, %v484
  %v486 = vpop.f32.mrb[0].mxu0
  %v487 = vpop.f32.mrb[0].mxu0
  %v488 = vadd.f32 0.0, %v487
  %v489 = vpop.f32.mrb[0].mxu0
  %490 = vmatprep.mubr.bf16.mxu0 0
  %491 = vmatmul.mubr.bf16.gmra.mrb[0].mxu0 %v355
  %v492 = vpop.f32.mrb[0].mxu0
  %v493 = vadd.f32 0.0, %v492
  %v494 = vpop.f32.mrb[0].mxu0
  %v495 = vpop.f32.mrb[0].mxu0
  %v496 = vadd.f32 0.0, %v495
  %v497 = vpop.f32.mrb[0].mxu0
  %498 = vmatprep.mubr.bf16.mxu0 0
  %499 = vmatmul.mubr.bf16.gmra.mrb[0].mxu0 %v356
  %v500 = vpop.f32.mrb[0].mxu0
  %v501 = vadd.f32 0.0, %v500
  %v502 = vpop.f32.mrb[0].mxu0
  %v503 = vpop.f32.mrb[0].mxu0
  %v504 = vadd.f32 0.0, %v503
  %v505 = vpop.f32.mrb[0].mxu0
  %506 = vmatprep.mubr.bf16.mxu0 0
  %507 = vmatmul.mubr.bf16.gmra.mrb[0].mxu0 %v357
  %v508 = vpop.f32.mrb[0].mxu0
  %v509 = vadd.f32 0.0, %v508
  %v510 = vpop.f32.mrb[0].mxu0
  %v511 = vpop.f32.mrb[0].mxu0
  %v512 = vadd.f32 0.0, %v511
  %v513 = vpop.f32.mrb[0].mxu0
  %514 = vmatprep.mubr.bf16.mxu0 0
  %515 = vmatmul.mubr.bf16.gmra.mrb[0].mxu0 %v358
  %v516 = vpop.f32.mrb[0].mxu0
  %v517 = vadd.f32 0.0, %v516
  %v518 = vpop.f32.mrb[0].mxu0
  %v519 = vpop.f32.mrb[0].mxu0
  %v520 = vadd.f32 0.0, %v519
  %v521 = vpop.f32.mrb[0].mxu0
  %522 = vmatprep.mubr.bf16.mxu0 0
  %523 = vmatmul.mubr.bf16.gmra.mrb[0].mxu0 %v359
  %v524 = vpop.f32.mrb[0].mxu0
  %v525 = vadd.f32 0.0, %v524
  %v526 = vpop.f32.mrb[0].mxu0
  %v527 = vpop.f32.mrb[0].mxu0
  %v528 = vadd.f32 0.0, %v527
  %v529 = vpop.f32.mrb[0].mxu0
  %530 = vmatprep.mubr.bf16.mxu0 0
  %531 = vmatmul.mubr.bf16.gmra.mrb[0].mxu0 %v360
  %v532 = vpop.f32.mrb[0].mxu0
  %v533 = vadd.f32 0.0, %v532
  %v534 = vpop.f32.mrb[0].mxu0
  %v535 = vpop.f32.mrb[0].mxu0
  %v536 = vadd.f32 0.0, %v535
  %v537 = vpop.f32.mrb[0].mxu0
  %538 = vmatprep.mubr.bf16.mxu0 0
  %539 = vmatmul.mubr.bf16.gmra.mrb[0].mxu0 %v361
  %v540 = vpop.f32.mrb[0].mxu0
  %v541 = vadd.f32 0.0, %v540
  %v542 = vpop.f32.mrb[0].mxu0
  %v543 = vpop.f32.mrb[0].mxu0
  %v544 = vadd.f32 0.0, %v543
  %v545 = vpop.f32.mrb[0].mxu0
  %546 = vmatprep.mubr.bf16.mxu0 0
  %547 = vmatmul.mubr.bf16.gmra.mrb[0].mxu0 %v362
  %v548 = vpop.f32.mrb[0].mxu0
  %v549 = vadd.f32 0.0, %v548
  %v550 = vpop.f32.mrb[0].mxu0
  %v551 = vpop.f32.mrb[0].mxu0
  %v552 = vadd.f32 0.0, %v551
  %v553 = vpop.f32.mrb[0].mxu0
  %554 = vmatprep.mubr.bf16.mxu0 0
  %555 = vmatmul.mubr.bf16.gmra.mrb[0].mxu0 %v363
  %v556 = vpop.f32.mrb[0].mxu0
  %v557 = vadd.f32 0.0, %v556
  %v558 = vpop.f32.mrb[0].mxu0
  %v559 = vpop.f32.mrb[0].mxu0
  %v560 = vadd.f32 0.0, %v559
  %v561 = vpop.f32.mrb[0].mxu0
  %562 = vmatprep.mubr.bf16.mxu0 0
  %563 = vmatmul.mubr.bf16.gmra.mrb[0].mxu0 %v364
  %v564 = vpop.f32.mrb[0].mxu0
  %v565 = vadd.f32 0.0, %v564
  %v566 = vpop.f32.mrb[0].mxu0
  %v567 = vpop.f32.mrb[0].mxu0
  %v568 = vadd.f32 0.0, %v567
  %v569 = vpop.f32.mrb[0].mxu0
  %570 = vmatprep.mubr.bf16.mxu0 0
  %571 = vmatmul.mubr.bf16.gmra.mrb[0].mxu0 %v365
  %v572 = vpop.f32.mrb[0].mxu0
  %v573 = vadd.f32 0.0, %v572
  %v574 = vpop.f32.mrb[0].mxu0
  %v575 = vpop.f32.mrb[0].mxu0
  %v576 = vadd.f32 0.0, %v575
  %v577 = vpop.f32.mrb[0].mxu0
  %578 = vmatprep.mubr.bf16.mxu0 0
  %579 = vmatmul.mubr.bf16.gmra.mrb[0].mxu0 %v366
  %v580 = vpop.f32.mrb[0].mxu0
  %v581 = vadd.f32 0.0, %v580
  %v582 = vpop.f32.mrb[0].mxu0
  %v583 = vpop.f32.mrb[0].mxu0
  %v584 = vadd.f32 0.0, %v583
  %v585 = vpop.f32.mrb[0].mxu0
  %586 = vmatprep.mubr.bf16.mxu0 0
  %587 = vmatmul.mubr.bf16.gmra.mrb[0].mxu0 %v367
  %v588 = vpop.f32.mrb[0].mxu0
  %v589 = vadd.f32 0.0, %v588
  %v590 = vpop.f32.mrb[0].mxu0
  %v591 = vpop.f32.mrb[0].mxu0
  %v592 = vadd.f32 0.0, %v591
  %v593 = vpop.f32.mrb[0].mxu0
  %594 = vmatprep.mubr.bf16.mxu0 0
  %595 = vmatmul.mubr.bf16.gmra.mrb[0].mxu0 %v368
  %v596 = vpop.f32.mrb[0].mxu0
  %v597 = vadd.f32 0.0, %v596
  %v598 = vpop.f32.mrb[0].mxu0
  %v599 = vpop.f32.mrb[0].mxu0
  %v600 = vadd.f32 0.0, %v599
  %v601 = vpop.f32.mrb[0].mxu0
  %602 = vmatprep.mubr.bf16.mxu0 0
  %603 = vmatmul.mubr.bf16.gmra.mrb[0].mxu0 %v369
  %v604 = vpop.f32.mrb[0].mxu0
  %v605 = vadd.f32 0.0, %v604
  %v606 = vpop.f32.mrb[0].mxu0
  %v607 = vpop.f32.mrb[0].mxu0
  %v608 = vadd.f32 0.0, %v607
  %v609 = vpop.f32.mrb[0].mxu0
  %610 = vmatprep.mubr.bf16.mxu0 0
  %611 = vmatmul.mubr.bf16.gmra.mrb[0].mxu0 %v370
  %v612 = vpop.f32.mrb[0].mxu0
  %v613 = vadd.f32 0.0, %v612
  %v614 = vpop.f32.mrb[0].mxu0
  %v615 = vpop.f32.mrb[0].mxu0
  %v616 = vadd.f32 0.0, %v615
  %v617 = vpop.f32.mrb[0].mxu0
  %618 = vmatprep.mubr.bf16.mxu0 0
  %619 = vmatmul.mubr.bf16.gmra.mrb[0].mxu0 %v371
  %v620 = vpop.f32.mrb[0].mxu0
  %v621 = vadd.f32 0.0, %v620
  %v622 = vpop.f32.mrb[0].mxu0
  %v623 = vpop.f32.mrb[0].mxu0
  %v624 = vadd.f32 0.0, %v623
  %v625 = vpop.f32.mrb[0].mxu0
  %626 = vmatprep.mubr.bf16.mxu0 0
  %627 = vmatmul.mubr.bf16.gmra.mrb[0].mxu0 %v372
  %v628 = vpop.f32.mrb[0].mxu0
  %v629 = vadd.f32 0.0, %v628
  %v630 = vpop.f32.mrb[0].mxu0
  %v631 = vpop.f32.mrb[0].mxu0
  %v632 = vadd.f32 0.0, %v631
  %v633 = vpop.f32.mrb[0].mxu0
  %634 = vmatprep.mubr.bf16.mxu0 0
  %635 = vmatmul.mubr.bf16.gmra.mrb[0].mxu0 %v373
  %v636 = vpop.f32.mrb[0].mxu0
  %v637 = vadd.f32 0.0, %v636
  %v638 = vpop.f32.mrb[0].mxu0
  %v639 = vpop.f32.mrb[0].mxu0
  %v640 = vadd.f32 0.0, %v639
  %v641 = vpop.f32.mrb[0].mxu0
  %642 = vmatprep.mubr.bf16.mxu0 0
  %643 = vmatmul.mubr.bf16.gmra.mrb[0].mxu0 %v374
  %v644 = vpop.f32.mrb[0].mxu0
  %v645 = vadd.f32 0.0, %v644
  %v646 = vpop.f32.mrb[0].mxu0
  %v647 = vpop.f32.mrb[0].mxu0
  %v648 = vadd.f32 0.0, %v647
  %v649 = vpop.f32.mrb[0].mxu0
  %650 = vmatprep.mubr.bf16.mxu0 0
  %651 = vmatmul.mubr.bf16.gmra.mrb[0].mxu0 %v375
  %v652 = vpop.f32.mrb[0].mxu0
  %v653 = vadd.f32 0.0, %v652
  %v654 = vpop.f32.mrb[0].mxu0
  %v655 = vpop.f32.mrb[0].mxu0
  %v656 = vadd.f32 0.0, %v655
  %v657 = vpop.f32.mrb[0].mxu0
  %658 = vmatprep.mubr.bf16.mxu0 0
  %659 = vmatmul.mubr.bf16.gmra.mrb[0].mxu0 %v376
  %v660 = vpop.f32.mrb[0].mxu0
  %v661 = vadd.f32 0.0, %v660
  %v662 = vpop.f32.mrb[0].mxu0
  %v663 = vpop.f32.mrb[0].mxu0
  %v664 = vadd.f32 0.0, %v663
  %v665 = vpop.f32.mrb[0].mxu0
  %666 = vmatprep.mubr.bf16.mxu0 0
  %667 = vmatmul.mubr.bf16.gmra.mrb[0].mxu0 %v377
  %v668 = vpop.f32.mrb[0].mxu0
  %v669 = vadd.f32 0.0, %v668
  %v670 = vpop.f32.mrb[0].mxu0
  %v671 = vpop.f32.mrb[0].mxu0
  %v672 = vadd.f32 0.0, %v671
  %v673 = vpop.f32.mrb[0].mxu0
  %674 = vmatprep.mubr.bf16.mxu0 0
  %675 = vmatmul.mubr.bf16.gmra.mrb[0].mxu0 %v378
  %v676 = vpop.f32.mrb[0].mxu0
  %v677 = vadd.f32 0.0, %v676
  %v678 = vpop.f32.mrb[0].mxu0
  %v679 = vpop.f32.mrb[0].mxu0
  %v680 = vadd.f32 0.0, %v679
  %v681 = vpop.f32.mrb[0].mxu0
  %682 = vmatprep.mubr.bf16.mxu0 0
  %683 = vmatmul.mubr.bf16.gmra.mrb[0].mxu0 %v379
  %v684 = vpop.f32.mrb[0].mxu0
  %v685 = vadd.f32 0.0, %v684
  %v686 = vpop.f32.mrb[0].mxu0
  %v687 = vpop.f32.mrb[0].mxu0
  %v688 = vadd.f32 0.0, %v687
  %v689 = vpop.f32.mrb[0].mxu0
  %690 = vmatprep.mubr.bf16.mxu0 0
  %691 = vmatmul.mubr.bf16.gmra.mrb[0].mxu0 %v380
  %v692 = vpop.f32.mrb[0].mxu0
  %v693 = vadd.f32 0.0, %v692
  %v694 = vpop.f32.mrb[0].mxu0
  %v695 = vpop.f32.mrb[0].mxu0
  %v696 = vadd.f32 0.0, %v695
  %v697 = vpop.f32.mrb[0].mxu0
  %698 = vmatprep.mubr.bf16.mxu0 0
  %699 = vmatmul.mubr.bf16.gmra.mrb[0].mxu0 %v381
  %v700 = vpop.f32.mrb[0].mxu0
  %v701 = vadd.f32 0.0, %v700
  %v702 = vpop.f32.mrb[0].mxu0
  %v703 = vpop.f32.mrb[0].mxu0
  %v704 = vadd.f32 0.0, %v703
  %v705 = vpop.f32.mrb[0].mxu0
  %706 = vmatprep.mubr.bf16.mxu0 0
  %707 = vmatmul.mubr.bf16.gmra.mrb[0].mxu0 %v382
  %v708 = vpop.f32.mrb[0].mxu0
  %v709 = vadd.f32 0.0, %v708
  %v710 = vpop.f32.mrb[0].mxu0
  %v711 = vpop.f32.mrb[0].mxu0
  %v712 = vadd.f32 0.0, %v711
  %v713 = vpop.f32.mrb[0].mxu0
  %714 = vmatprep.mubr.bf16.mxu0 0
  %715 = vmatmul.mubr.bf16.gmra.mrb[0].mxu0 %v383
  %v716 = vpop.f32.mrb[0].mxu0
  %v717 = vadd.f32 0.0, %v716
  %v718 = vpop.f32.mrb[0].mxu0
  %v719 = vpop.f32.mrb[0].mxu0
  %v720 = vadd.f32 0.0, %v719
  %v721 = vpop.f32.mrb[0].mxu0
  %722 = vmatprep.mubr.bf16.mxu0 0
  %723 = vmatmul.mubr.bf16.gmra.mrb[0].mxu0 %v384
  %v724 = vpop.f32.mrb[0].mxu0
  %v725 = vadd.f32 0.0, %v724
  %v726 = vpop.f32.mrb[0].mxu0
  %v727 = vpop.f32.mrb[0].mxu0
  %v728 = vadd.f32 0.0, %v727
  %v729 = vpop.f32.mrb[0].mxu0
  %730 = vmatprep.mubr.bf16.mxu0 0
  %731 = vmatmul.mubr.bf16.gmra.mrb[0].mxu0 %v385
  %v732 = vpop.f32.mrb[0].mxu0
  %v733 = vadd.f32 0.0, %v732
  %v734 = vpop.f32.mrb[0].mxu0
  %v735 = vpop.f32.mrb[0].mxu0
  %v736 = vadd.f32 0.0, %v735
  %v737 = vpop.f32.mrb[0].mxu0
  %738 = vdwg.mxu0
  %v739 = vpack.c.bf16 %v488, %v485
  %v740 = vpack.c.bf16 %v496, %v493
  %v741 = vpack.c.bf16 %v504, %v501
  %v742 = vpack.c.bf16 %v512, %v509
  %v743 = vpack.c.bf16 %v520, %v517
  %v744 = vpack.c.bf16 %v528, %v525
  %v745 = vpack.c.bf16 %v536, %v533
  %v746 = vpack.c.bf16 %v544, %v541
  %v747 = vpack.c.bf16 %v552, %v549
  %v748 = vpack.c.bf16 %v560, %v557
  %v749 = vpack.c.bf16 %v568, %v565
  %v750 = vpack.c.bf16 %v576, %v573
  %v751 = vpack.c.bf16 %v584, %v581
  %v752 = vpack.c.bf16 %v592, %v589
  %v753 = vpack.c.bf16 %v600, %v597
  %v754 = vpack.c.bf16 %v608, %v605
  %v755 = vpack.c.bf16 %v616, %v613
  %v756 = vpack.c.bf16 %v624, %v621
  %v757 = vpack.c.bf16 %v632, %v629
  %v758 = vpack.c.bf16 %v640, %v637
  %v759 = vpack.c.bf16 %v648, %v645
  %v760 = vpack.c.bf16 %v656, %v653
  %v761 = vpack.c.bf16 %v664, %v661
  %v762 = vpack.c.bf16 %v672, %v669
  %v763 = vpack.c.bf16 %v680, %v677
  %v764 = vpack.c.bf16 %v688, %v685
  %v765 = vpack.c.bf16 %v696, %v693
  %v766 = vpack.c.bf16 %v704, %v701
  %v767 = vpack.c.bf16 %v712, %v709
  %v768 = vpack.c.bf16 %v720, %v717
  %v769 = vpack.c.bf16 %v728, %v725
  %v770 = vpack.c.bf16 %v736, %v733
  %v803 = vunpack.c.l.b16 %v739
  %v804 = vunpack.c.h.b16 %v739
  %v805 = vunpack.c.l.b16 %v740
  %v806 = vunpack.c.h.b16 %v740
  %v807 = vunpack.c.l.b16 %v741
  %v808 = vunpack.c.h.b16 %v741
  %v809 = vunpack.c.l.b16 %v742
  %v810 = vunpack.c.h.b16 %v742
  %v811 = vunpack.c.l.b16 %v743
  %v812 = vunpack.c.h.b16 %v743
  %v813 = vunpack.c.l.b16 %v744
  %v814 = vunpack.c.h.b16 %v744
  %v815 = vunpack.c.l.b16 %v745
  %v816 = vunpack.c.h.b16 %v745
  %v817 = vunpack.c.l.b16 %v746
  %v818 = vunpack.c.h.b16 %v746
  %v819 = vunpack.c.l.b16 %v747
  %v820 = vunpack.c.h.b16 %v747
  %v821 = vunpack.c.l.b16 %v748
  %v822 = vunpack.c.h.b16 %v748
  %v823 = vunpack.c.l.b16 %v749
  %v824 = vunpack.c.h.b16 %v749
  %v825 = vunpack.c.l.b16 %v750
  %v826 = vunpack.c.h.b16 %v750
  %v827 = vunpack.c.l.b16 %v751
  %v828 = vunpack.c.h.b16 %v751
  %v829 = vunpack.c.l.b16 %v752
  %v830 = vunpack.c.h.b16 %v752
  %v831 = vunpack.c.l.b16 %v753
  %v832 = vunpack.c.h.b16 %v753
  %v833 = vunpack.c.l.b16 %v754
  %v834 = vunpack.c.h.b16 %v754
  %v835 = vunpack.c.l.b16 %v755
  %v836 = vunpack.c.h.b16 %v755
  %v837 = vunpack.c.l.b16 %v756
  %v838 = vunpack.c.h.b16 %v756
  %v839 = vunpack.c.l.b16 %v757
  %v840 = vunpack.c.h.b16 %v757
  %v841 = vunpack.c.l.b16 %v758
  %v842 = vunpack.c.h.b16 %v758
  %v843 = vunpack.c.l.b16 %v759
  %v844 = vunpack.c.h.b16 %v759
  %v845 = vunpack.c.l.b16 %v760
  %v846 = vunpack.c.h.b16 %v760
  %v847 = vunpack.c.l.b16 %v761
  %v848 = vunpack.c.h.b16 %v761
  %v849 = vunpack.c.l.b16 %v762
  %v850 = vunpack.c.h.b16 %v762
  %v851 = vunpack.c.l.b16 %v763
  %v852 = vunpack.c.h.b16 %v763
  %v853 = vunpack.c.l.b16 %v764
  %v854 = vunpack.c.h.b16 %v764
  %v855 = vunpack.c.l.b16 %v765
  %v856 = vunpack.c.h.b16 %v765
  %v857 = vunpack.c.l.b16 %v766
  %v858 = vunpack.c.h.b16 %v766
  %v859 = vunpack.c.l.b16 %v767
  %v860 = vunpack.c.h.b16 %v767
  %v861 = vunpack.c.l.b16 %v768
  %v862 = vunpack.c.h.b16 %v768
  %v863 = vunpack.c.l.b16 %v769
  %v864 = vunpack.c.h.b16 %v769
  %v865 = vunpack.c.l.b16 %v770
  %v866 = vunpack.c.h.b16 %v770
  %v867 = vpack.c.b16 %v803, %v803
  %v868 = vpack.c.b16 %v804, %v804
  %v869 = vpack.c.b16 %v805, %v805
  %v870 = vpack.c.b16 %v806, %v806
  %v871 = vpack.c.b16 %v807, %v807
  %v872 = vpack.c.b16 %v808, %v808
  %v873 = vpack.c.b16 %v809, %v809
  %v874 = vpack.c.b16 %v810, %v810
  %v875 = vpack.c.b16 %v811, %v811
  %v876 = vpack.c.b16 %v812, %v812
  %v877 = vpack.c.b16 %v813, %v813
  %v878 = vpack.c.b16 %v814, %v814
  %v879 = vpack.c.b16 %v815, %v815
  %v880 = vpack.c.b16 %v816, %v816
  %v881 = vpack.c.b16 %v817, %v817
  %v882 = vpack.c.b16 %v818, %v818
  %v883 = vpack.c.b16 %v819, %v819
  %v884 = vpack.c.b16 %v820, %v820
  %v885 = vpack.c.b16 %v821, %v821
  %v886 = vpack.c.b16 %v822, %v822
  %v887 = vpack.c.b16 %v823, %v823
  %v888 = vpack.c.b16 %v824, %v824
  %v889 = vpack.c.b16 %v825, %v825
  %v890 = vpack.c.b16 %v826, %v826
  %v891 = vpack.c.b16 %v827, %v827
  %v892 = vpack.c.b16 %v828, %v828
  %v893 = vpack.c.b16 %v829, %v829
  %v894 = vpack.c.b16 %v830, %v830
  %v895 = vpack.c.b16 %v831, %v831
  %v896 = vpack.c.b16 %v832, %v832
  %v897 = vpack.c.b16 %v833, %v833
  %v898 = vpack.c.b16 %v834, %v834
  %v899 = vpack.c.b16 %v835, %v835
  %v900 = vpack.c.b16 %v836, %v836
  %v901 = vpack.c.b16 %v837, %v837
  %v902 = vpack.c.b16 %v838, %v838
  %v903 = vpack.c.b16 %v839, %v839
  %v904 = vpack.c.b16 %v840, %v840
  %v905 = vpack.c.b16 %v841, %v841
  %v906 = vpack.c.b16 %v842, %v842
  %v907 = vpack.c.b16 %v843, %v843
  %v908 = vpack.c.b16 %v844, %v844
  %v909 = vpack.c.b16 %v845, %v845
  %v910 = vpack.c.b16 %v846, %v846
  %v911 = vpack.c.b16 %v847, %v847
  %v912 = vpack.c.b16 %v848, %v848
  %v913 = vpack.c.b16 %v849, %v849
  %v914 = vpack.c.b16 %v850, %v850
  %v915 = vpack.c.b16 %v851, %v851
  %v916 = vpack.c.b16 %v852, %v852
  %v917 = vpack.c.b16 %v853, %v853
  %v918 = vpack.c.b16 %v854, %v854
  %v919 = vpack.c.b16 %v855, %v855
  %v920 = vpack.c.b16 %v856, %v856
  %v921 = vpack.c.b16 %v857, %v857
  %v922 = vpack.c.b16 %v858, %v858
  %v923 = vpack.c.b16 %v859, %v859
  %v924 = vpack.c.b16 %v860, %v860
  %v925 = vpack.c.b16 %v861, %v861
  %v926 = vpack.c.b16 %v862, %v862
  %v927 = vpack.c.b16 %v863, %v863
  %v928 = vpack.c.b16 %v864, %v864
  %v929 = vpack.c.b16 %v865, %v865
  %v930 = vpack.c.b16 %v866, %v866
  %995 = vst [vmem:[%s4] sm:$0xf] %v867
  %996 = vst [vmem:[%s4 + $0x4] sm:$0xf] %v868
  %997 = vst [vmem:[%s4 + $0x8] sm:$0xf] %v869
  %998 = vst [vmem:[%s4 + $0xc] sm:$0xf] %v870
  %999 = vst [vmem:[%s4 + $0x10] sm:$0xf] %v871
  %1000 = vst [vmem:[%s4 + $0x14] sm:$0xf] %v872
  %1001 = vst [vmem:[%s4 + $0x18] sm:$0xf] %v873
  %1002 = vst [vmem:[%s4 + $0x1c] sm:$0xf] %v874
  %1003 = vst [vmem:[%s4 + $0x20] sm:$0xf] %v875
  %1004 = vst [vmem:[%s4 + $0x24] sm:$0xf] %v876
  %1005 = vst [vmem:[%s4 + $0x28] sm:$0xf] %v877
  %1006 = vst [vmem:[%s4 + $0x2c] sm:$0xf] %v878
  %1007 = vst [vmem:[%s4 + $0x30] sm:$0xf] %v879
  %1008 = vst [vmem:[%s4 + $0x34] sm:$0xf] %v880
  %1009 = vst [vmem:[%s4 + $0x38] sm:$0xf] %v881
  %1010 = vst [vmem:[%s4 + $0x3c] sm:$0xf] %v882
  %1011 = vst [vmem:[%s4 + $0x40] sm:$0xf] %v883
  %1012 = vst [vmem:[%s4 + $0x44] sm:$0xf] %v884
  %1013 = vst [vmem:[%s4 + $0x48] sm:$0xf] %v885
  %1014 = vst [vmem:[%s4 + $0x4c] sm:$0xf] %v886
  %1015 = vst [vmem:[%s4 + $0x50] sm:$0xf] %v887
  %1016 = vst [vmem:[%s4 + $0x54] sm:$0xf] %v888
  %1017 = vst [vmem:[%s4 + $0x58] sm:$0xf] %v889
  %1018 = vst [vmem:[%s4 + $0x5c] sm:$0xf] %v890
  %1019 = vst [vmem:[%s4 + $0x60] sm:$0xf] %v891
  %1020 = vst [vmem:[%s4 + $0x64] sm:$0xf] %v892
  %1021 = vst [vmem:[%s4 + $0x68] sm:$0xf] %v893
  %1022 = vst [vmem:[%s4 + $0x6c] sm:$0xf] %v894
  %1023 = vst [vmem:[%s4 + $0x70] sm:$0xf] %v895
  %1024 = vst [vmem:[%s4 + $0x74] sm:$0xf] %v896
  %1025 = vst [vmem:[%s4 + $0x78] sm:$0xf] %v897
  %1026 = vst [vmem:[%s4 + $0x7c] sm:$0xf] %v898
  %1027 = vst [vmem:[%s4 + $0x80] sm:$0xf] %v899
  %1028 = vst [vmem:[%s4 + $0x84] sm:$0xf] %v900
  %1029 = vst [vmem:[%s4 + $0x88] sm:$0xf] %v901
  %1030 = vst [vmem:[%s4 + $0x8c] sm:$0xf] %v902
  %1031 = vst [vmem:[%s4 + $0x90] sm:$0xf] %v903
  %1032 = vst [vmem:[%s4 + $0x94] sm:$0xf] %v904
  %1033 = vst [vmem:[%s4 + $0x98] sm:$0xf] %v905
  %1034 = vst [vmem:[%s4 + $0x9c] sm:$0xf] %v906
  %1035 = vst [vmem:[%s4 + $0xa0] sm:$0xf] %v907
  %1036 = vst [vmem:[%s4 + $0xa4] sm:$0xf] %v908
  %1037 = vst [vmem:[%s4 + $0xa8] sm:$0xf] %v909
  %1038 = vst [vmem:[%s4 + $0xac] sm:$0xf] %v910
  %1039 = vst [vmem:[%s4 + $0xb0] sm:$0xf] %v911
  %1040 = vst [vmem:[%s4 + $0xb4] sm:$0xf] %v912
  %1041 = vst [vmem:[%s4 + $0xb8] sm:$0xf] %v913
  %1042 = vst [vmem:[%s4 + $0xbc] sm:$0xf] %v914
  %1043 = vst [vmem:[%s4 + $0xc0] sm:$0xf] %v915
  %1044 = vst [vmem:[%s4 + $0xc4] sm:$0xf] %v916
  %1045 = vst [vmem:[%s4 + $0xc8] sm:$0xf] %v917
  %1046 = vst [vmem:[%s4 + $0xcc] sm:$0xf] %v918
  %1047 = vst [vmem:[%s4 + $0xd0] sm:$0xf] %v919
  %1048 = vst [vmem:[%s4 + $0xd4] sm:$0xf] %v920
  %1049 = vst [vmem:[%s4 + $0xd8] sm:$0xf] %v921
  %1050 = vst [vmem:[%s4 + $0xdc] sm:$0xf] %v922
  %1051 = vst [vmem:[%s4 + $0xe0] sm:$0xf] %v923
  %1052 = vst [vmem:[%s4 + $0xe4] sm:$0xf] %v924
  %1053 = vst [vmem:[%s4 + $0xe8] sm:$0xf] %v925
  %1054 = vst [vmem:[%s4 + $0xec] sm:$0xf] %v926
  %1055 = vst [vmem:[%s4 + $0xf0] sm:$0xf] %v927
  %1056 = vst [vmem:[%s4 + $0xf4] sm:$0xf] %v928
  %1057 = vst [vmem:[%s4 + $0xf8] sm:$0xf] %v929
  %1058 = vst [vmem:[%s4 + $0xfc] sm:$0xf] %v930
  %v1059 = vadd.f32 %v485, %v488
  %v1060 = vadd.f32 %v1059, %v493
  %v1061 = vadd.f32 %v1060, %v496
  %v1062 = vadd.f32 %v1061, %v501
  %v1063 = vadd.f32 %v1062, %v504
  %v1064 = vadd.f32 %v1063, %v509
  %v1065 = vadd.f32 %v1064, %v512
  %v1066 = vadd.f32 %v1065, %v517
  %v1067 = vadd.f32 %v1066, %v520
  %v1068 = vadd.f32 %v1067, %v525
  %v1069 = vadd.f32 %v1068, %v528
  %v1070 = vadd.f32 %v1069, %v533
  %v1071 = vadd.f32 %v1070, %v536
  %v1072 = vadd.f32 %v1071, %v541
  %v1073 = vadd.f32 %v1072, %v544
  %v1074 = vadd.f32 %v1073, %v549
  %v1075 = vadd.f32 %v1074, %v552
  %v1076 = vadd.f32 %v1075, %v557
  %v1077 = vadd.f32 %v1076, %v560
  %v1078 = vadd.f32 %v1077, %v565
  %v1079 = vadd.f32 %v1078, %v568
  %v1080 = vadd.f32 %v1079, %v573
  %v1081 = vadd.f32 %v1080, %v576
  %v1082 = vadd.f32 %v1081, %v581
  %v1083 = vadd.f32 %v1082, %v584
  %v1084 = vadd.f32 %v1083, %v589
  %v1085 = vadd.f32 %v1084, %v592
  %v1086 = vadd.f32 %v1085, %v597
  %v1087 = vadd.f32 %v1086, %v600
  %v1088 = vadd.f32 %v1087, %v605
  %v1089 = vadd.f32 %v1088, %v608
  %v1090 = vadd.f32 %v1089, %v613
  %v1091 = vadd.f32 %v1090, %v616
  %v1092 = vadd.f32 %v1091, %v621
  %v1093 = vadd.f32 %v1092, %v624
  %v1094 = vadd.f32 %v1093, %v629
  %v1095 = vadd.f32 %v1094, %v632
  %v1096 = vadd.f32 %v1095, %v637
  %v1097 = vadd.f32 %v1096, %v640
  %v1098 = vadd.f32 %v1097, %v645
  %v1099 = vadd.f32 %v1098, %v648
  %v1100 = vadd.f32 %v1099, %v653
  %v1101 = vadd.f32 %v1100, %v656
  %v1102 = vadd.f32 %v1101, %v661
  %v1103 = vadd.f32 %v1102, %v664
  %v1104 = vadd.f32 %v1103, %v669
  %v1105 = vadd.f32 %v1104, %v672
  %v1106 = vadd.f32 %v1105, %v677
  %v1107 = vadd.f32 %v1106, %v680
  %v1108 = vadd.f32 %v1107, %v685
  %v1109 = vadd.f32 %v1108, %v688
  %v1110 = vadd.f32 %v1109, %v693
  %v1111 = vadd.f32 %v1110, %v696
  %v1112 = vadd.f32 %v1111, %v701
  %v1113 = vadd.f32 %v1112, %v704
  %v1114 = vadd.f32 %v1113, %v709
  %v1115 = vadd.f32 %v1114, %v712
  %v1116 = vadd.f32 %v1115, %v717
  %v1117 = vadd.f32 %v1116, %v720
  %v1118 = vadd.f32 %v1117, %v725
  %v1119 = vadd.f32 %v1118, %v728
  %v1120 = vadd.f32 %v1119, %v733
  %v1121 = vadd.f32 %v1120, %v736
  %v1122 = vrot.slane %v1121, 4
  %v1123 = vadd.f32 %v1121, %v1122
  %v1124 = vrot.slane %v1123, 2
  %v1125 = vadd.f32 %v1123, %v1124
  %v1126 = vrot.slane %v1125, 1
  %v1127 = vadd.f32 %v1125, %v1126
  %v1128 = vmul.f32 %v485, %v485
  %v1129 = vmul.f32 %v488, %v488
  %v1130 = vmul.f32 %v493, %v493
  %v1131 = vmul.f32 %v496, %v496
  %v1132 = vmul.f32 %v501, %v501
  %v1133 = vmul.f32 %v504, %v504
  %v1134 = vmul.f32 %v509, %v509
  %v1135 = vmul.f32 %v512, %v512
  %v1136 = vmul.f32 %v517, %v517
  %v1137 = vmul.f32 %v520, %v520
  %v1138 = vmul.f32 %v525, %v525
  %v1139 = vmul.f32 %v528, %v528
  %v1140 = vmul.f32 %v533, %v533
  %v1141 = vmul.f32 %v536, %v536
  %v1142 = vmul.f32 %v541, %v541
  %v1143 = vmul.f32 %v544, %v544
  %v1144 = vmul.f32 %v549, %v549
  %v1145 = vmul.f32 %v552, %v552
  %v1146 = vmul.f32 %v557, %v557
  %v1147 = vmul.f32 %v560, %v560
  %v1148 = vmul.f32 %v565, %v565
  %v1149 = vmul.f32 %v568, %v568
  %v1150 = vmul.f32 %v573, %v573
  %v1151 = vmul.f32 %v576, %v576
  %v1152 = vmul.f32 %v581, %v581
  %v1153 = vmul.f32 %v584, %v584
  %v1154 = vmul.f32 %v589, %v589
  %v1155 = vmul.f32 %v592, %v592
  %v1156 = vmul.f32 %v597, %v597
  %v1157 = vmul.f32 %v600, %v600
  %v1158 = vmul.f32 %v605, %v605
  %v1159 = vmul.f32 %v608, %v608
  %v1160 = vmul.f32 %v613, %v613
  %v1161 = vmul.f32 %v616, %v616
  %v1162 = vmul.f32 %v621, %v621
  %v1163 = vmul.f32 %v624, %v624
  %v1164 = vmul.f32 %v629, %v629
  %v1165 = vmul.f32 %v632, %v632
  %v1166 = vmul.f32 %v637, %v637
  %v1167 = vmul.f32 %v640, %v640
  %v1168 = vmul.f32 %v645, %v645
  %v1169 = vmul.f32 %v648, %v648
  %v1170 = vmul.f32 %v653, %v653
  %v1171 = vmul.f32 %v656, %v656
  %v1172 = vmul.f32 %v661, %v661
  %v1173 = vmul.f32 %v664, %v664
  %v1174 = vmul.f32 %v669, %v669
  %v1175 = vmul.f32 %v672, %v672
  %v1176 = vmul.f32 %v677, %v677
  %v1177 = vmul.f32 %v680, %v680
  %v1178 = vmul.f32 %v685, %v685
  %v1179 = vmul.f32 %v688, %v688
  %v1180 = vmul.f32 %v693, %v693
  %v1181 = vmul.f32 %v696, %v696
  %v1182 = vmul.f32 %v701, %v701
  %v1183 = vmul.f32 %v704, %v704
  %v1184 = vmul.f32 %v709, %v709
  %v1185 = vmul.f32 %v712, %v712
  %v1186 = vmul.f32 %v717, %v717
  %v1187 = vmul.f32 %v720, %v720
  %v1188 = vmul.f32 %v725, %v725
  %v1189 = vmul.f32 %v728, %v728
  %v1190 = vmul.f32 %v733, %v733
  %v1191 = vmul.f32 %v736, %v736
  %v1192 = vadd.f32 %v1128, %v1129
  %v1193 = vadd.f32 %v1192, %v1130
  %v1194 = vadd.f32 %v1193, %v1131
  %v1195 = vadd.f32 %v1194, %v1132
  %v1196 = vadd.f32 %v1195, %v1133
  %v1197 = vadd.f32 %v1196, %v1134
  %v1198 = vadd.f32 %v1197, %v1135
  %v1199 = vadd.f32 %v1198, %v1136
  %v1200 = vadd.f32 %v1199, %v1137
  %v1201 = vadd.f32 %v1200, %v1138
  %v1202 = vadd.f32 %v1201, %v1139
  %v1203 = vadd.f32 %v1202, %v1140
  %v1204 = vadd.f32 %v1203, %v1141
  %v1205 = vadd.f32 %v1204, %v1142
  %v1206 = vadd.f32 %v1205, %v1143
  %v1207 = vadd.f32 %v1206, %v1144
  %v1208 = vadd.f32 %v1207, %v1145
  %v1209 = vadd.f32 %v1208, %v1146
  %v1210 = vadd.f32 %v1209, %v1147
  %v1211 = vadd.f32 %v1210, %v1148
  %v1212 = vadd.f32 %v1211, %v1149
  %v1213 = vadd.f32 %v1212, %v1150
  %v1214 = vadd.f32 %v1213, %v1151
  %v1215 = vadd.f32 %v1214, %v1152
  %v1216 = vadd.f32 %v1215, %v1153
  %v1217 = vadd.f32 %v1216, %v1154
  %v1218 = vadd.f32 %v1217, %v1155
  %v1219 = vadd.f32 %v1218, %v1156
  %v1220 = vadd.f32 %v1219, %v1157
  %v1221 = vadd.f32 %v1220, %v1158
  %v1222 = vadd.f32 %v1221, %v1159
  %v1223 = vadd.f32 %v1222, %v1160
  %v1224 = vadd.f32 %v1223, %v1161
  %v1225 = vadd.f32 %v1224, %v1162
  %v1226 = vadd.f32 %v1225, %v1163
  %v1227 = vadd.f32 %v1226, %v1164
  %v1228 = vadd.f32 %v1227, %v1165
  %v1229 = vadd.f32 %v1228, %v1166
  %v1230 = vadd.f32 %v1229, %v1167
  %v1231 = vadd.f32 %v1230, %v1168
  %v1232 = vadd.f32 %v1231, %v1169
  %v1233 = vadd.f32 %v1232, %v1170
  %v1234 = vadd.f32 %v1233, %v1171
  %v1235 = vadd.f32 %v1234, %v1172
  %v1236 = vadd.f32 %v1235, %v1173
  %v1237 = vadd.f32 %v1236, %v1174
  %v1238 = vadd.f32 %v1237, %v1175
  %v1239 = vadd.f32 %v1238, %v1176
  %v1240 = vadd.f32 %v1239, %v1177
  %v1241 = vadd.f32 %v1240, %v1178
  %v1242 = vadd.f32 %v1241, %v1179
  %v1243 = vadd.f32 %v1242, %v1180
  %v1244 = vadd.f32 %v1243, %v1181
  %v1245 = vadd.f32 %v1244, %v1182
  %v1246 = vadd.f32 %v1245, %v1183
  %v1247 = vadd.f32 %v1246, %v1184
  %v1248 = vadd.f32 %v1247, %v1185
  %v1249 = vadd.f32 %v1248, %v1186
  %v1250 = vadd.f32 %v1249, %v1187
  %v1251 = vadd.f32 %v1250, %v1188
  %v1252 = vadd.f32 %v1251, %v1189
  %v1253 = vadd.f32 %v1252, %v1190
  %v1254 = vadd.f32 %v1253, %v1191
  %v1255 = vrot.slane %v1254, 4
  %v1256 = vadd.f32 %v1254, %v1255
  %v1257 = vrot.slane %v1256, 2
  %v1258 = vadd.f32 %v1256, %v1257
  %v1259 = vrot.slane %v1258, 1
  %v1260 = vadd.f32 %v1258, %v1259
  %vm1261 = vcmask 1040384
  %v1262 = vsel %vm1261, %v1127, %v1260
  %1263 = vst [vmem:[%s5] sm:$0x3] %v1262
  // Predicated region
  $region18: #{basic_block_forward.6} parent=0 // pred_check
    _
  $region19: #{basic_block_forward.6} parent=0 // pred_check_branch
    %1265 = sbr.rel (0) target = $region21
  $region20: #{basic_block_forward.6} parent=0 // pred_region
    _
  $region21: #{basic_block_forward.6} parent=0 // pred_fallthru
    _
  // Predicated region
  $region22: #{basic_block_forward.6} parent=0 // pred_check
    _
  $region23: #{basic_block_forward.6} parent=0 // pred_check_branch
    %1267 = sbr.rel (0) target = $region25
  $region24: #{basic_block_forward.6} parent=0 // pred_region
    _
  $region25: #{basic_block_forward.6} parent=0 // pred_fallthru
    _
  // Predicated region
  $region26: #{basic_block_forward.6} parent=0 // pred_check
    _
  $region27: #{basic_block_forward.6} parent=0 // pred_check_branch
    %1269 = sbr.rel (0) target = $region29
  $region28: #{basic_block_forward.6} parent=0 // pred_region
    _
  $region29: #{basic_block_forward.6} parent=0 // pred_fallthru
    _
  // Predicated region
  $region30: #{basic_block_forward.6} parent=0 // pred_check
    _
  $region31: #{basic_block_forward.6} parent=0 // pred_check_branch
    %1271 = sbr.rel (0) target = $region33
  $region32: #{basic_block_forward.6} parent=0 // pred_region
    _
  $region33: #{basic_block_forward.6} parent=0 // pred_fallthru
    _

// kernel: basic_block_forward.5
$region0: #{basic_block_forward.5}
  #allocation0 [shape = 'u32[]', space=smem, size = 0x4, offset = 0x4, fixed_abs, tag = 'smem constant byte address 0x4 - core index']
  #allocation1 [shape = 'u32[144,128]{1,0:T(1,128)}', space=vmem, size = 0x12000, scoped, tag = 'internal scratch']
  %s0 = inlined_call_operand.vmem [shape: bf16[2,256,128], index: 0, kind: input, shape index: {}]
  %s1 = inlined_call_operand.vmem [shape: bf16[1152,128], index: 1, kind: input, shape index: {}]
  %s2 = inlined_call_operand.vmem [shape: f32[1,128], index: 2, kind: input, shape index: {}]
  %s3 = inlined_call_operand.vmem [shape: f32[1,128], index: 3, kind: input, shape index: {}]
  %s4 = inlined_call_operand.vmem [shape: bf16[2,256,128], index: 4, kind: output, shape index: {0}]
  %s5 = inlined_call_operand.vmem [shape: f32[2,2,128], index: 5, kind: output, shape index: {1}]
  %6 = xla_tuple %s4, %s5
  %s7 = sld [smem:[#allocation0]]
  $region57: #{basic_block_forward.5} parent=0
    _
  %s9 = ssub.s32 1, %s7
  %s10 = scalar_select 0, %s9, %s7
  loop: start=0, step=1, limit=4
  $region2: #{basic_block_forward.5} parent=0 // loop_pre_header
    _
  $region3: #{basic_block_forward.5} parent=0 // loop_header
    %s12 = sphi 0, %s16
    %p13 = scmp.ge.s32.totalorder %s12, 4
    %s22 = sphi 0, %s24
    %s25 = sphi 0, %s22
    %s26 = sphi 0, %s25
    %s42 = sphi 0, %s26
    %s46 = sphi 0, %s46
    %s48 = sphi 0, %s46
    %s49 = sphi 0, %s48
    %s63 = sphi 0, %s49
    %s67 = sphi 0, %s67
    %s69 = sphi 0, %s67
    %s70 = sphi 0, %s69
    %s84 = sphi 0, %s70
    %s88 = sphi 0, %s88
    %s90 = sphi 0, %s88
    %s91 = sphi 0, %s90
    %s105 = sphi 0, %s91
    %s111 = sphi 0, %s113
    %s114 = sphi 0, %s111
    %s115 = sphi 0, %s114
    %s131 = sphi 0, %s115
    %s137 = sphi 0, %s139
    %s140 = sphi 0, %s137
    %s141 = sphi 0, %s140
    %s157 = sphi 0, %s141
  $region4: #{basic_block_forward.5} parent=0 // loop_header_branch
    %15 = sbr.rel (%p13) target = $region8
  $region5: #{basic_block_forward.5} parent=0 // loop_body
    %s17 = ssub.s32 %s12, 1
    %s18 = ssub.s32 %s12, 2
    %s19 = sadd.s32 %s12, 1
    %s20 = ssub.s32 %s12, %s19
    %p21 = scmp.eq.s32.totalorder %s20, 0
    %s23 = sadd.s32 %s22, 1
    %s24 = scalar_select %p21, %s22, %s23
    %p27 = pneg %p21
    %p28 = scmp.eq.s32.totalorder %s12, 1
    %p29 = por %p27, %p28
    %p30 = scmp.ne.s32.totalorder %s22, %s25
    %p31 = scmp.eq.s32.totalorder %s12, 0
    %p32 = por %p30, %p31
    %p33 = scmp.ne.s32.totalorder %s22, %s25
    %p34 = scmp.eq.s32.totalorder %s17, 1
    %p35 = por %p33, %p34
    %p36 = scmp.ne.s32.totalorder %s25, %s26
    %p37 = scmp.eq.s32.totalorder %s17, 0
    %p38 = por %p36, %p37
    %p39 = scmp.ne.s32.totalorder %s25, %s26
    %p40 = scmp.eq.s32.totalorder %s18, 1
    %p41 = por %p39, %p40
    %p43 = scmp.ne.s32.totalorder %s26, %s42
    %p44 = scmp.eq.s32.totalorder %s18, 0
    %p45 = por %p43, %p44
    %s47 = sadd.s32 %s46, 1
    %p50 = scmp.eq.s32.totalorder %s12, 1
    %p51 = scmp.ne.s32.totalorder %s46, %s48
    %p52 = scmp.eq.s32.totalorder %s12, 0
    %p53 = por %p51, %p52
    %p54 = scmp.ne.s32.totalorder %s46, %s48
    %p55 = scmp.eq.s32.totalorder %s17, 1
    %p56 = por %p54, %p55
    %p57 = scmp.ne.s32.totalorder %s48, %s49
    %p58 = scmp.eq.s32.totalorder %s17, 0
    %p59 = por %p57, %p58
    %p60 = scmp.ne.s32.totalorder %s48, %s49
    %p61 = scmp.eq.s32.totalorder %s18, 1
    %p62 = por %p60, %p61
    %p64 = scmp.ne.s32.totalorder %s49, %s63
    %p65 = scmp.eq.s32.totalorder %s18, 0
    %p66 = por %p64, %p65
    %s68 = sadd.s32 %s67, 1
    %p71 = scmp.eq.s32.totalorder %s12, 1
    %p72 = scmp.ne.s32.totalorder %s67, %s69
    %p73 = scmp.eq.s32.totalorder %s12, 0
    %p74 = por %p72, %p73
    %p75 = scmp.ne.s32.totalorder %s67, %s69
    %p76 = scmp.eq.s32.totalorder %s17, 1
    %p77 = por %p75, %p76
    %p78 = scmp.ne.s32.totalorder %s69, %s70
    %p79 = scmp.eq.s32.totalorder %s17, 0
    %p80 = por %p78, %p79
    %p81 = scmp.ne.s32.totalorder %s69, %s70
    %p82 = scmp.eq.s32.totalorder %s18, 1
    %p83 = por %p81, %p82
    %p85 = scmp.ne.s32.totalorder %s70, %s84
    %p86 = scmp.eq.s32.totalorder %s18, 0
    %p87 = por %p85, %p86
    %s89 = sadd.s32 %s88, 1
    %p92 = scmp.eq.s32.totalorder %s12, 1
    %p93 = scmp.ne.s32.totalorder %s88, %s90
    %p94 = scmp.eq.s32.totalorder %s12, 0
    %p95 = por %p93, %p94
    %p96 = scmp.ne.s32.totalorder %s88, %s90
    %p97 = scmp.eq.s32.totalorder %s17, 1
    %p98 = por %p96, %p97
    %p99 = scmp.ne.s32.totalorder %s90, %s91
    %p100 = scmp.eq.s32.totalorder %s17, 0
    %p101 = por %p99, %p100
    %p102 = scmp.ne.s32.totalorder %s90, %s91
    %p103 = scmp.eq.s32.totalorder %s18, 1
    %p104 = por %p102, %p103
    %p106 = scmp.ne.s32.totalorder %s91, %s105
    %p107 = scmp.eq.s32.totalorder %s18, 0
    %p108 = por %p106, %p107
    %s109 = ssub.s32 %s12, %s19
    %p110 = scmp.eq.s32.totalorder %s109, 0
    %s112 = sadd.s32 %s111, 1
    %s113 = scalar_select %p110, %s111, %s112
    %p116 = pneg %p110
    %p117 = scmp.eq.s32.totalorder %s12, 1
    %p118 = por %p116, %p117
    %p119 = scmp.ne.s32.totalorder %s111, %s114
    %p120 = scmp.eq.s32.totalorder %s12, 0
    %p121 = por %p119, %p120
    %p122 = scmp.ne.s32.totalorder %s111, %s114
    %p123 = scmp.eq.s32.totalorder %s17, 1
    %p124 = por %p122, %p123
    %p125 = scmp.ne.s32.totalorder %s114, %s115
    %p126 = scmp.eq.s32.totalorder %s17, 0
    %p127 = por %p125, %p126
    %p128 = scmp.ne.s32.totalorder %s114, %s115
    %p129 = scmp.eq.s32.totalorder %s18, 1
    %p130 = por %p128, %p129
    %p132 = scmp.ne.s32.totalorder %s115, %s131
    %p133 = scmp.eq.s32.totalorder %s18, 0
    %p134 = por %p132, %p133
    %s135 = ssub.s32 %s12, %s19
    %p136 = scmp.eq.s32.totalorder %s135, 0
    %s138 = sadd.s32 %s137, 1
    %s139 = scalar_select %p136, %s137, %s138
    %p142 = pneg %p136
    %p143 = scmp.eq.s32.totalorder %s12, 1
    %p144 = por %p142, %p143
    %p145 = scmp.ne.s32.totalorder %s137, %s140
    %p146 = scmp.eq.s32.totalorder %s12, 0
    %p147 = por %p145, %p146
    %p148 = scmp.ne.s32.totalorder %s137, %s140
    %p149 = scmp.eq.s32.totalorder %s17, 1
    %p150 = por %p148, %p149
    %p151 = scmp.ne.s32.totalorder %s140, %s141
    %p152 = scmp.eq.s32.totalorder %s17, 0
    %p153 = por %p151, %p152
    %p154 = scmp.ne.s32.totalorder %s140, %s141
    %p155 = scmp.eq.s32.totalorder %s18, 1
    %p156 = por %p154, %p155
    %p158 = scmp.ne.s32.totalorder %s141, %s157
    %p159 = scmp.eq.s32.totalorder %s18, 0
    %p160 = por %p158, %p159
    %p161 = scmp.le.s32.totalorder 1, %s12
    %p162 = scmp.lt.s32.totalorder %s12, 3
    %p163 = pnand %p161, %p162
    %p164 = pneg %p163
    // Predicated region
    $region9: #{basic_block_forward.5} parent=5 // pred_check
      _
    $region10: #{basic_block_forward.5} parent=5 // pred_check_branch
      %166 = sbr.rel (%p163) target = $region12
    $region11: #{basic_block_forward.5} parent=5 // pred_region
      %s167 = ssub.s32 %s12, 1
      // Predicated region
      $region13: #{basic_block_forward.5} parent=11 // pred_check
        %p168 = pneg %p59
      $region14: #{basic_block_forward.5} parent=11 // pred_check_branch
        %170 = sbr.rel (%p168) target = $region16
      $region15: #{basic_block_forward.5} parent=11 // pred_region
        _
      $region16: #{basic_block_forward.5} parent=11 // pred_fallthru
        _
      // Predicated region
      $region17: #{basic_block_forward.5} parent=11 // pred_check
        %p171 = pneg %p80
      $region18: #{basic_block_forward.5} parent=11 // pred_check_branch
        %173 = sbr.rel (%p171) target = $region20
      $region19: #{basic_block_forward.5} parent=11 // pred_region
        _
      $region20: #{basic_block_forward.5} parent=11 // pred_fallthru
        _
      // Predicated region
      $region21: #{basic_block_forward.5} parent=11 // pred_check
        %p174 = pneg %p101
      $region22: #{basic_block_forward.5} parent=11 // pred_check_branch
        %176 = sbr.rel (%p174) target = $region24
      $region23: #{basic_block_forward.5} parent=11 // pred_region
        _
      $region24: #{basic_block_forward.5} parent=11 // pred_fallthru
        _
    $region12: #{basic_block_forward.5} parent=5 // pred_fallthru
      _
    %p177 = scmp.lt.s32.totalorder %s12, 2
    // Predicated region
    $region25: #{basic_block_forward.5} parent=5 // pred_check
      %p178 = pneg %p177
    $region26: #{basic_block_forward.5} parent=5 // pred_check_branch
      %180 = sbr.rel (%p178) target = $region28
    $region27: #{basic_block_forward.5} parent=5 // pred_region
      // Predicated region
      $region29: #{basic_block_forward.5} parent=27 // pred_check
        %p181 = pneg %p32
      $region30: #{basic_block_forward.5} parent=27 // pred_check_branch
        %183 = sbr.rel (%p181) target = $region32
      $region31: #{basic_block_forward.5} parent=27 // pred_region
        %p184 = scmp.lt.s32.totalorder %s12, 1
        %s185 = scalar_select %p184, %s12, 1
        %s186 = smul.addr %s185, 32
        %s187 = smul.addr %s186, 4
        %s188 = scalar_lea.vmem %s0, %s187
      $region32: #{basic_block_forward.5} parent=27 // pred_fallthru
        _
    $region28: #{basic_block_forward.5} parent=5 // pred_fallthru
      _
    %p189 = scmp.le.s32.totalorder 1, %s12
    %p190 = scmp.lt.s32.totalorder %s12, 3
    %p191 = pnand %p189, %p190
    %p192 = pneg %p191
    // Predicated region
    $region33: #{basic_block_forward.5} parent=5 // pred_check
      _
    $region34: #{basic_block_forward.5} parent=5 // pred_check_branch
      %194 = sbr.rel (%p191) target = $region36
    $region35: #{basic_block_forward.5} parent=5 // pred_region
      %s195 = ssub.s32 %s12, 1
      %p196 = scmp.lt.s32.totalorder %s17, 1
      %s197 = scalar_select %p196, %s17, 1
      %s198 = smul.addr %s197, 32
      %s199 = smul.addr %s198, 4
      %s200 = scalar_lea.vmem %s0, %s199
      %p201 = pneg %p38
      %p202 = pneg %p35
      %p203 = pneg %p59
      %p204 = pneg %p56
      %p205 = pneg %p80
      %p206 = pneg %p77
      %p207 = pneg %p101
      %p208 = pneg %p98
      %p209 = pneg %p127
      %p210 = pneg %p124
      %p211 = scmp.lt.s32.totalorder %s17, 1
      %s212 = scalar_select %p211, %s17, 1
      %s213 = smul.addr %s212, 32
      %s214 = smul.addr %s213, 4
      %s215 = scalar_lea.vmem %s4, %s214
      %p216 = pneg %p153
      %p217 = pneg %p150
      %p218 = scmp.lt.s32.totalorder %s17, 1
      %s219 = scalar_select %p218, %s17, 1
      %s220 = smul.addr %s219, 2
      %s221 = scalar_lea.vmem %s5, %s220
      %p222 = scmp.lt.s32.totalorder %s17, 1
      %s223 = scalar_select %p222, %s17, 1
      %s224 = smul.addr %s223, 32
      %s225 = smul.addr %s224, 4
      %s226 = scalar_lea.vmem %s0, %s225
      %p227 = scmp.lt.s32.totalorder %s17, 1
      %s228 = scalar_select %p227, %s17, 1
      %s229 = smul.addr %s228, 32
      %s230 = smul.addr %s229, 4
      %s231 = scalar_lea.vmem %s4, %s230
      %p232 = scmp.lt.s32.totalorder %s17, 1
      %s233 = scalar_select %p232, %s17, 1
      %s234 = smul.addr %s233, 2
      %s235 = scalar_lea.vmem %s5, %s234
      %v237 = vld [vmem:[%s226] sm:$0xf]
      %v238 = vld [vmem:[%s226 + $0x4] sm:$0xf]
      %v239 = vld [vmem:[%s226 + $0x8] sm:$0xf]
      %v240 = vld [vmem:[%s226 + $0xc] sm:$0xf]
      %v241 = vld [vmem:[%s226 + $0x10] sm:$0xf]
      %v242 = vld [vmem:[%s226 + $0x14] sm:$0xf]
      %v243 = vld [vmem:[%s226 + $0x18] sm:$0xf]
      %v244 = vld [vmem:[%s226 + $0x1c] sm:$0xf]
      %v245 = vld [vmem:[%s226 + $0x20] sm:$0xf]
      %v246 = vld [vmem:[%s226 + $0x24] sm:$0xf]
      %v247 = vld [vmem:[%s226 + $0x28] sm:$0xf]
      %v248 = vld [vmem:[%s226 + $0x2c] sm:$0xf]
      %v249 = vld [vmem:[%s226 + $0x30] sm:$0xf]
      %v250 = vld [vmem:[%s226 + $0x34] sm:$0xf]
      %v251 = vld [vmem:[%s226 + $0x38] sm:$0xf]
      %v252 = vld [vmem:[%s226 + $0x3c] sm:$0xf]
      %v253 = vld [vmem:[%s226 + $0x40] sm:$0xf]
      %v254 = vld [vmem:[%s226 + $0x44] sm:$0xf]
      %v255 = vld [vmem:[%s226 + $0x48] sm:$0xf]
      %v256 = vld [vmem:[%s226 + $0x4c] sm:$0xf]
      %v257 = vld [vmem:[%s226 + $0x50] sm:$0xf]
      %v258 = vld [vmem:[%s226 + $0x54] sm:$0xf]
      %v259 = vld [vmem:[%s226 + $0x58] sm:$0xf]
      %v260 = vld [vmem:[%s226 + $0x5c] sm:$0xf]
      %v261 = vld [vmem:[%s226 + $0x60] sm:$0xf]
      %v262 = vld [vmem:[%s226 + $0x64] sm:$0xf]
      %v263 = vld [vmem:[%s226 + $0x68] sm:$0xf]
      %v264 = vld [vmem:[%s226 + $0x6c] sm:$0xf]
      %v265 = vld [vmem:[%s226 + $0x70] sm:$0xf]
      %v266 = vld [vmem:[%s226 + $0x74] sm:$0xf]
      %v267 = vld [vmem:[%s226 + $0x78] sm:$0xf]
      %v268 = vld [vmem:[%s226 + $0x7c] sm:$0xf]
      %v269 = vunpack.c.l.bf16 %v237
      %v270 = vunpack.c.l.bf16 %v238
      %v271 = vunpack.c.l.bf16 %v239
      %v272 = vunpack.c.l.bf16 %v240
      %v273 = vunpack.c.l.bf16 %v241
      %v274 = vunpack.c.l.bf16 %v242
      %v275 = vunpack.c.l.bf16 %v243
      %v276 = vunpack.c.l.bf16 %v244
      %v277 = vunpack.c.l.bf16 %v245
      %v278 = vunpack.c.l.bf16 %v246
      %v279 = vunpack.c.l.bf16 %v247
      %v280 = vunpack.c.l.bf16 %v248
      %v281 = vunpack.c.l.bf16 %v249
      %v282 = vunpack.c.l.bf16 %v250
      %v283 = vunpack.c.l.bf16 %v251
      %v284 = vunpack.c.l.bf16 %v252
      %v285 = vunpack.c.l.bf16 %v253
      %v286 = vunpack.c.l.bf16 %v254
      %v287 = vunpack.c.l.bf16 %v255
      %v288 = vunpack.c.l.bf16 %v256
      %v289 = vunpack.c.l.bf16 %v257
      %v290 = vunpack.c.l.bf16 %v258
      %v291 = vunpack.c.l.bf16 %v259
      %v292 = vunpack.c.l.bf16 %v260
      %v293 = vunpack.c.l.bf16 %v261
      %v294 = vunpack.c.l.bf16 %v262
      %v295 = vunpack.c.l.bf16 %v263
      %v296 = vunpack.c.l.bf16 %v264
      %v297 = vunpack.c.l.bf16 %v265
      %v298 = vunpack.c.l.bf16 %v266
      %v299 = vunpack.c.l.bf16 %v267
      %v300 = vunpack.c.l.bf16 %v268
      %v301 = vld [vmem:[%s2] sm:$0x1]
      %v303 = vlaneseq
      %v304 = vshrl.u32 %v303, 7
      %v305 = vsub.s32 0, %v304
      %v306 = vrot.slane %v301, %v305
      %v308 = vmul.f32 %v269, %v306
      %v309 = vmul.f32 %v270, %v306
      %v310 = vmul.f32 %v271, %v306
      %v311 = vmul.f32 %v272, %v306
      %v312 = vmul.f32 %v273, %v306
      %v313 = vmul.f32 %v274, %v306
      %v314 = vmul.f32 %v275, %v306
      %v315 = vmul.f32 %v276, %v306
      %v316 = vmul.f32 %v277, %v306
      %v317 = vmul.f32 %v278, %v306
      %v318 = vmul.f32 %v279, %v306
      %v319 = vmul.f32 %v280, %v306
      %v320 = vmul.f32 %v281, %v306
      %v321 = vmul.f32 %v282, %v306
      %v322 = vmul.f32 %v283, %v306
      %v323 = vmul.f32 %v284, %v306
      %v324 = vmul.f32 %v285, %v306
      %v325 = vmul.f32 %v286, %v306
      %v326 = vmul.f32 %v287, %v306
      %v327 = vmul.f32 %v288, %v306
      %v328 = vmul.f32 %v289, %v306
      %v329 = vmul.f32 %v290, %v306
      %v330 = vmul.f32 %v291, %v306
      %v331 = vmul.f32 %v292, %v306
      %v332 = vmul.f32 %v293, %v306
      %v333 = vmul.f32 %v294, %v306
      %v334 = vmul.f32 %v295, %v306
      %v335 = vmul.f32 %v296, %v306
      %v336 = vmul.f32 %v297, %v306
      %v337 = vmul.f32 %v298, %v306
      %v338 = vmul.f32 %v299, %v306
      %v339 = vmul.f32 %v300, %v306
      %v340 = vld [vmem:[%s3] sm:$0x1]
      %v342 = vlaneseq
      %v343 = vshrl.u32 %v342, 7
      %v344 = vsub.s32 0, %v343
      %v345 = vrot.slane %v340, %v344
      %v347 = vadd.f32 %v308, %v345
      %v348 = vadd.f32 %v309, %v345
      %v349 = vadd.f32 %v310, %v345
      %v350 = vadd.f32 %v311, %v345
      %v351 = vadd.f32 %v312, %v345
      %v352 = vadd.f32 %v313, %v345
      %v353 = vadd.f32 %v314, %v345
      %v354 = vadd.f32 %v315, %v345
      %v355 = vadd.f32 %v316, %v345
      %v356 = vadd.f32 %v317, %v345
      %v357 = vadd.f32 %v318, %v345
      %v358 = vadd.f32 %v319, %v345
      %v359 = vadd.f32 %v320, %v345
      %v360 = vadd.f32 %v321, %v345
      %v361 = vadd.f32 %v322, %v345
      %v362 = vadd.f32 %v323, %v345
      %v363 = vadd.f32 %v324, %v345
      %v364 = vadd.f32 %v325, %v345
      %v365 = vadd.f32 %v326, %v345
      %v366 = vadd.f32 %v327, %v345
      %v367 = vadd.f32 %v328, %v345
      %v368 = vadd.f32 %v329, %v345
      %v369 = vadd.f32 %v330, %v345
      %v370 = vadd.f32 %v331, %v345
      %v371 = vadd.f32 %v332, %v345
      %v372 = vadd.f32 %v333, %v345
      %v373 = vadd.f32 %v334, %v345
      %v374 = vadd.f32 %v335, %v345
      %v375 = vadd.f32 %v336, %v345
      %v376 = vadd.f32 %v337, %v345
      %v377 = vadd.f32 %v338, %v345
      %v378 = vadd.f32 %v339, %v345
      %v379 = vmax.f32 %v347, 0.0
      %v380 = vmax.f32 %v348, 0.0
      %v381 = vmax.f32 %v349, 0.0
      %v382 = vmax.f32 %v350, 0.0
      %v383 = vmax.f32 %v351, 0.0
      %v384 = vmax.f32 %v352, 0.0
      %v385 = vmax.f32 %v353, 0.0
      %v386 = vmax.f32 %v354, 0.0
      %v387 = vmax.f32 %v355, 0.0
      %v388 = vmax.f32 %v356, 0.0
      %v389 = vmax.f32 %v357, 0.0
      %v390 = vmax.f32 %v358, 0.0
      %v391 = vmax.f32 %v359, 0.0
      %v392 = vmax.f32 %v360, 0.0
      %v393 = vmax.f32 %v361, 0.0
      %v394 = vmax.f32 %v362, 0.0
      %v395 = vmax.f32 %v363, 0.0
      %v396 = vmax.f32 %v364, 0.0
      %v397 = vmax.f32 %v365, 0.0
      %v398 = vmax.f32 %v366, 0.0
      %v399 = vmax.f32 %v367, 0.0
      %v400 = vmax.f32 %v368, 0.0
      %v401 = vmax.f32 %v369, 0.0
      %v402 = vmax.f32 %v370, 0.0
      %v403 = vmax.f32 %v371, 0.0
      %v404 = vmax.f32 %v372, 0.0
      %v405 = vmax.f32 %v373, 0.0
      %v406 = vmax.f32 %v374, 0.0
      %v407 = vmax.f32 %v375, 0.0
      %v408 = vmax.f32 %v376, 0.0
      %v409 = vmax.f32 %v377, 0.0
      %v410 = vmax.f32 %v378, 0.0
      %v411 = vlaneseq
      %v412 = vshrl.u32 %v411, 7
      %v413 = vadd.s32 %v412, 8
      %v414 = vadd.s32 %v412, 16
      %v415 = vadd.s32 %v412, 24
      %v416 = vadd.s32 %v412, 32
      %v417 = vadd.s32 %v412, 40
      %v418 = vadd.s32 %v412, 48
      %v419 = vadd.s32 %v412, 56
      %v420 = vadd.s32 %v412, 64
      %v421 = vadd.s32 %v412, 72
      %v422 = vadd.s32 %v412, 80
      %v423 = vadd.s32 %v412, 88
      %v424 = vadd.s32 %v412, 96
      %v425 = vadd.s32 %v412, 104
      %v426 = vadd.s32 %v412, 112
      %v427 = vadd.s32 %v412, 120
      %v428 = vadd.s32 %v412, 128
      %v429 = vadd.s32 %v412, 136
      %v430 = vadd.s32 %v412, 144
      %v431 = vadd.s32 %v412, 152
      %v432 = vadd.s32 %v412, 160
      %v433 = vadd.s32 %v412, 168
      %v434 = vadd.s32 %v412, 176
      %v435 = vadd.s32 %v412, 184
      %v436 = vadd.s32 %v412, 192
      %v437 = vadd.s32 %v412, 200
      %v438 = vadd.s32 %v412, 208
      %v439 = vadd.s32 %v412, 216
      %v440 = vadd.s32 %v412, 224
      %v441 = vadd.s32 %v412, 232
      %v442 = vadd.s32 %v412, 240
      %v443 = vadd.s32 %v412, 248
      %v444 = vadd.s32 %v412, 256
      %v445 = vadd.s32 %v412, 264
      %v446 = vadd.s32 %v412, 272
      %v447 = vadd.s32 %v412, 280
      %vm448 = vcmp.lt.s32.totalorder %v412, 0
      %v449 = vsub.s32 0, %v412
      %v450 = vsel %vm448, %v449, %v412
      %v451 = vshrl.u32 %v450, 4
      %v452 = vand.u32 %v450, 15
      %v453 = vsub.s32 0, %v452
      %v454 = vsel %vm448, %v453, %v452
      %vm455 = vcmp.lt.s32.totalorder %v413, 0
      %v456 = vsub.s32 0, %v413
      %v457 = vsel %vm455, %v456, %v413
      %v458 = vshrl.u32 %v457, 4
      %v459 = vand.u32 %v457, 15
      %v460 = vsub.s32 0, %v459
      %v461 = vsel %vm455, %v460, %v459
      %vm462 = vcmp.lt.s32.totalorder %v414, 0
      %v463 = vsub.s32 0, %v414
      %v464 = vsel %vm462, %v463, %v414
      %v465 = vshrl.u32 %v464, 4
      %v466 = vand.u32 %v464, 15
      %v467 = vsub.s32 0, %v466
      %v468 = vsel %vm462, %v467, %v466
      %vm469 = vcmp.lt.s32.totalorder %v415, 0
      %v470 = vsub.s32 0, %v415
      %v471 = vsel %vm469, %v470, %v415
      %v472 = vshrl.u32 %v471, 4
      %v473 = vand.u32 %v471, 15
      %v474 = vsub.s32 0, %v473
      %v475 = vsel %vm469, %v474, %v473
      %vm476 = vcmp.lt.s32.totalorder %v416, 0
      %v477 = vsub.s32 0, %v416
      %v478 = vsel %vm476, %v477, %v416
      %v479 = vshrl.u32 %v478, 4
      %v480 = vand.u32 %v478, 15
      %v481 = vsub.s32 0, %v480
      %v482 = vsel %vm476, %v481, %v480
      %vm483 = vcmp.lt.s32.totalorder %v417, 0
      %v484 = vsub.s32 0, %v417
      %v485 = vsel %vm483, %v484, %v417
      %v486 = vshrl.u32 %v485, 4
      %v487 = vand.u32 %v485, 15
      %v488 = vsub.s32 0, %v487
      %v489 = vsel %vm483, %v488, %v487
      %vm490 = vcmp.lt.s32.totalorder %v418, 0
      %v491 = vsub.s32 0, %v418
      %v492 = vsel %vm490, %v491, %v418
      %v493 = vshrl.u32 %v492, 4
      %v494 = vand.u32 %v492, 15
      %v495 = vsub.s32 0, %v494
      %v496 = vsel %vm490, %v495, %v494
      %vm497 = vcmp.lt.s32.totalorder %v419, 0
      %v498 = vsub.s32 0, %v419
      %v499 = vsel %vm497, %v498, %v419
      %v500 = vshrl.u32 %v499, 4
      %v501 = vand.u32 %v499, 15
      %v502 = vsub.s32 0, %v501
      %v503 = vsel %vm497, %v502, %v501
      %vm504 = vcmp.lt.s32.totalorder %v420, 0
      %v505 = vsub.s32 0, %v420
      %v506 = vsel %vm504, %v505, %v420
      %v507 = vshrl.u32 %v506, 4
      %v508 = vand.u32 %v506, 15
      %v509 = vsub.s32 0, %v508
      %v510 = vsel %vm504, %v509, %v508
      %vm511 = vcmp.lt.s32.totalorder %v421, 0
      %v512 = vsub.s32 0, %v421
      %v513 = vsel %vm511, %v512, %v421
      %v514 = vshrl.u32 %v513, 4
      %v515 = vand.u32 %v513, 15
      %v516 = vsub.s32 0, %v515
      %v517 = vsel %vm511, %v516, %v515
      %vm518 = vcmp.lt.s32.totalorder %v422, 0
      %v519 = vsub.s32 0, %v422
      %v520 = vsel %vm518, %v519, %v422
      %v521 = vshrl.u32 %v520, 4
      %v522 = vand.u32 %v520, 15
      %v523 = vsub.s32 0, %v522
      %v524 = vsel %vm518, %v523, %v522
      %vm525 = vcmp.lt.s32.totalorder %v423, 0
      %v526 = vsub.s32 0, %v423
      %v527 = vsel %vm525, %v526, %v423
      %v528 = vshrl.u32 %v527, 4
      %v529 = vand.u32 %v527, 15
      %v530 = vsub.s32 0, %v529
      %v531 = vsel %vm525, %v530, %v529
      %vm532 = vcmp.lt.s32.totalorder %v424, 0
      %v533 = vsub.s32 0, %v424
      %v534 = vsel %vm532, %v533, %v424
      %v535 = vshrl.u32 %v534, 4
      %v536 = vand.u32 %v534, 15
      %v537 = vsub.s32 0, %v536
      %v538 = vsel %vm532, %v537, %v536
      %vm539 = vcmp.lt.s32.totalorder %v425, 0
      %v540 = vsub.s32 0, %v425
      %v541 = vsel %vm539, %v540, %v425
      %v542 = vshrl.u32 %v541, 4
      %v543 = vand.u32 %v541, 15
      %v544 = vsub.s32 0, %v543
      %v545 = vsel %vm539, %v544, %v543
      %vm546 = vcmp.lt.s32.totalorder %v426, 0
      %v547 = vsub.s32 0, %v426
      %v548 = vsel %vm546, %v547, %v426
      %v549 = vshrl.u32 %v548, 4
      %v550 = vand.u32 %v548, 15
      %v551 = vsub.s32 0, %v550
      %v552 = vsel %vm546, %v551, %v550
      %vm553 = vcmp.lt.s32.totalorder %v427, 0
      %v554 = vsub.s32 0, %v427
      %v555 = vsel %vm553, %v554, %v427
      %v556 = vshrl.u32 %v555, 4
      %v557 = vand.u32 %v555, 15
      %v558 = vsub.s32 0, %v557
      %v559 = vsel %vm553, %v558, %v557
      %vm560 = vcmp.lt.s32.totalorder %v428, 0
      %v561 = vsub.s32 0, %v428
      %v562 = vsel %vm560, %v561, %v428
      %v563 = vshrl.u32 %v562, 4
      %v564 = vand.u32 %v562, 15
      %v565 = vsub.s32 0, %v564
      %v566 = vsel %vm560, %v565, %v564
      %vm567 = vcmp.lt.s32.totalorder %v429, 0
      %v568 = vsub.s32 0, %v429
      %v569 = vsel %vm567, %v568, %v429
      %v570 = vshrl.u32 %v569, 4
      %v571 = vand.u32 %v569, 15
      %v572 = vsub.s32 0, %v571
      %v573 = vsel %vm567, %v572, %v571
      %vm574 = vcmp.lt.s32.totalorder %v430, 0
      %v575 = vsub.s32 0, %v430
      %v576 = vsel %vm574, %v575, %v430
      %v577 = vshrl.u32 %v576, 4
      %v578 = vand.u32 %v576, 15
      %v579 = vsub.s32 0, %v578
      %v580 = vsel %vm574, %v579, %v578
      %vm581 = vcmp.lt.s32.totalorder %v431, 0
      %v582 = vsub.s32 0, %v431
      %v583 = vsel %vm581, %v582, %v431
      %v584 = vshrl.u32 %v583, 4
      %v585 = vand.u32 %v583, 15
      %v586 = vsub.s32 0, %v585
      %v587 = vsel %vm581, %v586, %v585
      %vm588 = vcmp.lt.s32.totalorder %v432, 0
      %v589 = vsub.s32 0, %v432
      %v590 = vsel %vm588, %v589, %v432
      %v591 = vshrl.u32 %v590, 4
      %v592 = vand.u32 %v590, 15
      %v593 = vsub.s32 0, %v592
      %v594 = vsel %vm588, %v593, %v592
      %vm595 = vcmp.lt.s32.totalorder %v433, 0
      %v596 = vsub.s32 0, %v433
      %v597 = vsel %vm595, %v596, %v433
      %v598 = vshrl.u32 %v597, 4
      %v599 = vand.u32 %v597, 15
      %v600 = vsub.s32 0, %v599
      %v601 = vsel %vm595, %v600, %v599
      %vm602 = vcmp.lt.s32.totalorder %v434, 0
      %v603 = vsub.s32 0, %v434
      %v604 = vsel %vm602, %v603, %v434
      %v605 = vshrl.u32 %v604, 4
      %v606 = vand.u32 %v604, 15
      %v607 = vsub.s32 0, %v606
      %v608 = vsel %vm602, %v607, %v606
      %vm609 = vcmp.lt.s32.totalorder %v435, 0
      %v610 = vsub.s32 0, %v435
      %v611 = vsel %vm609, %v610, %v435
      %v612 = vshrl.u32 %v611, 4
      %v613 = vand.u32 %v611, 15
      %v614 = vsub.s32 0, %v613
      %v615 = vsel %vm609, %v614, %v613
      %vm616 = vcmp.lt.s32.totalorder %v436, 0
      %v617 = vsub.s32 0, %v436
      %v618 = vsel %vm616, %v617, %v436
      %v619 = vshrl.u32 %v618, 4
      %v620 = vand.u32 %v618, 15
      %v621 = vsub.s32 0, %v620
      %v622 = vsel %vm616, %v621, %v620
      %vm623 = vcmp.lt.s32.totalorder %v437, 0
      %v624 = vsub.s32 0, %v437
      %v625 = vsel %vm623, %v624, %v437
      %v626 = vshrl.u32 %v625, 4
      %v627 = vand.u32 %v625, 15
      %v628 = vsub.s32 0, %v627
      %v629 = vsel %vm623, %v628, %v627
      %vm630 = vcmp.lt.s32.totalorder %v438, 0
      %v631 = vsub.s32 0, %v438
      %v632 = vsel %vm630, %v631, %v438
      %v633 = vshrl.u32 %v632, 4
      %v634 = vand.u32 %v632, 15
      %v635 = vsub.s32 0, %v634
      %v636 = vsel %vm630, %v635, %v634
      %vm637 = vcmp.lt.s32.totalorder %v439, 0
      %v638 = vsub.s32 0, %v439
      %v639 = vsel %vm637, %v638, %v439
      %v640 = vshrl.u32 %v639, 4
      %v641 = vand.u32 %v639, 15
      %v642 = vsub.s32 0, %v641
      %v643 = vsel %vm637, %v642, %v641
      %vm644 = vcmp.lt.s32.totalorder %v440, 0
      %v645 = vsub.s32 0, %v440
      %v646 = vsel %vm644, %v645, %v440
      %v647 = vshrl.u32 %v646, 4
      %v648 = vand.u32 %v646, 15
      %v649 = vsub.s32 0, %v648
      %v650 = vsel %vm644, %v649, %v648
      %vm651 = vcmp.lt.s32.totalorder %v441, 0
      %v652 = vsub.s32 0, %v441
      %v653 = vsel %vm651, %v652, %v441
      %v654 = vshrl.u32 %v653, 4
      %v655 = vand.u32 %v653, 15
      %v656 = vsub.s32 0, %v655
      %v657 = vsel %vm651, %v656, %v655
      %vm658 = vcmp.lt.s32.totalorder %v442, 0
      %v659 = vsub.s32 0, %v442
      %v660 = vsel %vm658, %v659, %v442
      %v661 = vshrl.u32 %v660, 4
      %v662 = vand.u32 %v660, 15
      %v663 = vsub.s32 0, %v662
      %v664 = vsel %vm658, %v663, %v662
      %vm665 = vcmp.lt.s32.totalorder %v443, 0
      %v666 = vsub.s32 0, %v443
      %v667 = vsel %vm665, %v666, %v443
      %v668 = vshrl.u32 %v667, 4
      %v669 = vand.u32 %v667, 15
      %v670 = vsub.s32 0, %v669
      %v671 = vsel %vm665, %v670, %v669
      %vm672 = vcmp.lt.s32.totalorder %v444, 0
      %v673 = vsub.s32 0, %v444
      %v674 = vsel %vm672, %v673, %v444
      %v675 = vshrl.u32 %v674, 4
      %v676 = vand.u32 %v674, 15
      %v677 = vsub.s32 0, %v676
      %v678 = vsel %vm672, %v677, %v676
      %vm679 = vcmp.lt.s32.totalorder %v445, 0
      %v680 = vsub.s32 0, %v445
      %v681 = vsel %vm679, %v680, %v445
      %v682 = vshrl.u32 %v681, 4
      %v683 = vand.u32 %v681, 15
      %v684 = vsub.s32 0, %v683
      %v685 = vsel %vm679, %v684, %v683
      %vm686 = vcmp.lt.s32.totalorder %v446, 0
      %v687 = vsub.s32 0, %v446
      %v688 = vsel %vm686, %v687, %v446
      %v689 = vshrl.u32 %v688, 4
      %v690 = vand.u32 %v688, 15
      %v691 = vsub.s32 0, %v690
      %v692 = vsel %vm686, %v691, %v690
      %vm693 = vcmp.lt.s32.totalorder %v447, 0
      %v694 = vsub.s32 0, %v447
      %v695 = vsel %vm693, %v694, %v447
      %v696 = vshrl.u32 %v695, 4
      %v697 = vand.u32 %v695, 15
      %v698 = vsub.s32 0, %v697
      %v699 = vsel %vm693, %v698, %v697
      %vm700 = vcmp.ne.s32.totalorder %v454, 0
      %vm701 = vcmp.ne.s32.totalorder %v461, 0
      %vm702 = vcmp.ne.s32.totalorder %v468, 0
      %vm703 = vcmp.ne.s32.totalorder %v475, 0
      %vm704 = vcmp.ne.s32.totalorder %v482, 0
      %vm705 = vcmp.ne.s32.totalorder %v489, 0
      %vm706 = vcmp.ne.s32.totalorder %v496, 0
      %vm707 = vcmp.ne.s32.totalorder %v503, 0
      %vm708 = vcmp.ne.s32.totalorder %v510, 0
      %vm709 = vcmp.ne.s32.totalorder %v517, 0
      %vm710 = vcmp.ne.s32.totalorder %v524, 0
      %vm711 = vcmp.ne.s32.totalorder %v531, 0
      %vm712 = vcmp.ne.s32.totalorder %v538, 0
      %vm713 = vcmp.ne.s32.totalorder %v545, 0
      %vm714 = vcmp.ne.s32.totalorder %v552, 0
      %vm715 = vcmp.ne.s32.totalorder %v559, 0
      %vm716 = vcmp.ne.s32.totalorder %v566, 0
      %vm717 = vcmp.ne.s32.totalorder %v573, 0
      %vm718 = vcmp.ne.s32.totalorder %v580, 0
      %vm719 = vcmp.ne.s32.totalorder %v587, 0
      %vm720 = vcmp.ne.s32.totalorder %v594, 0
      %vm721 = vcmp.ne.s32.totalorder %v601, 0
      %vm722 = vcmp.ne.s32.totalorder %v608, 0
      %vm723 = vcmp.ne.s32.totalorder %v615, 0
      %vm724 = vcmp.ne.s32.totalorder %v622, 0
      %vm725 = vcmp.ne.s32.totalorder %v629, 0
      %vm726 = vcmp.ne.s32.totalorder %v636, 0
      %vm727 = vcmp.ne.s32.totalorder %v643, 0
      %vm728 = vcmp.ne.s32.totalorder %v650, 0
      %vm729 = vcmp.ne.s32.totalorder %v657, 0
      %vm730 = vcmp.ne.s32.totalorder %v664, 0
      %vm731 = vcmp.ne.s32.totalorder %v671, 0
      %vm732 = vcmp.ne.s32.totalorder %v678, 0
      %vm733 = vcmp.ne.s32.totalorder %v685, 0
      %vm734 = vcmp.ne.s32.totalorder %v692, 0
      %vm735 = vcmp.ne.s32.totalorder %v699, 0
      %vm736 = vcmp.lt.s32.totalorder %v454, 0
      %vm737 = vcmp.lt.s32.totalorder %v461, 0
      %vm738 = vcmp.lt.s32.totalorder %v468, 0
      %vm739 = vcmp.lt.s32.totalorder %v475, 0
      %vm740 = vcmp.lt.s32.totalorder %v482, 0
      %vm741 = vcmp.lt.s32.totalorder %v489, 0
      %vm742 = vcmp.lt.s32.totalorder %v496, 0
      %vm743 = vcmp.lt.s32.totalorder %v503, 0
      %vm744 = vcmp.lt.s32.totalorder %v510, 0
      %vm745 = vcmp.lt.s32.totalorder %v517, 0
      %vm746 = vcmp.lt.s32.totalorder %v524, 0
      %vm747 = vcmp.lt.s32.totalorder %v531, 0
      %vm748 = vcmp.lt.s32.totalorder %v538, 0
      %vm749 = vcmp.lt.s32.totalorder %v545, 0
      %vm750 = vcmp.lt.s32.totalorder %v552, 0
      %vm751 = vcmp.lt.s32.totalorder %v559, 0
      %vm752 = vcmp.lt.s32.totalorder %v566, 0
      %vm753 = vcmp.lt.s32.totalorder %v573, 0
      %vm754 = vcmp.lt.s32.totalorder %v580, 0
      %vm755 = vcmp.lt.s32.totalorder %v587, 0
      %vm756 = vcmp.lt.s32.totalorder %v594, 0
      %vm757 = vcmp.lt.s32.totalorder %v601, 0
      %vm758 = vcmp.lt.s32.totalorder %v608, 0
      %vm759 = vcmp.lt.s32.totalorder %v615, 0
      %vm760 = vcmp.lt.s32.totalorder %v622, 0
      %vm761 = vcmp.lt.s32.totalorder %v629, 0
      %vm762 = vcmp.lt.s32.totalorder %v636, 0
      %vm763 = vcmp.lt.s32.totalorder %v643, 0
      %vm764 = vcmp.lt.s32.totalorder %v650, 0
      %vm765 = vcmp.lt.s32.totalorder %v657, 0
      %vm766 = vcmp.lt.s32.totalorder %v664, 0
      %vm767 = vcmp.lt.s32.totalorder %v671, 0
      %vm768 = vcmp.lt.s32.totalorder %v678, 0
      %vm769 = vcmp.lt.s32.totalorder %v685, 0
      %vm770 = vcmp.lt.s32.totalorder %v692, 0
      %vm771 = vcmp.lt.s32.totalorder %v699, 0
      %vm772 = vmand %vm736, %vm700
      %vm773 = vmand %vm737, %vm701
      %vm774 = vmand %vm738, %vm702
      %vm775 = vmand %vm739, %vm703
      %vm776 = vmand %vm740, %vm704
      %vm777 = vmand %vm741, %vm705
      %vm778 = vmand %vm742, %vm706
      %vm779 = vmand %vm743, %vm707
      %vm780 = vmand %vm744, %vm708
      %vm781 = vmand %vm745, %vm709
      %vm782 = vmand %vm746, %vm710
      %vm783 = vmand %vm747, %vm711
      %vm784 = vmand %vm748, %vm712
      %vm785 = vmand %vm749, %vm713
      %vm786 = vmand %vm750, %vm714
      %vm787 = vmand %vm751, %vm715
      %vm788 = vmand %vm752, %vm716
      %vm789 = vmand %vm753, %vm717
      %vm790 = vmand %vm754, %vm718
      %vm791 = vmand %vm755, %vm719
      %vm792 = vmand %vm756, %vm720
      %vm793 = vmand %vm757, %vm721
      %vm794 = vmand %vm758, %vm722
      %vm795 = vmand %vm759, %vm723
      %vm796 = vmand %vm760, %vm724
      %vm797 = vmand %vm761, %vm725
      %vm798 = vmand %vm762, %vm726
      %vm799 = vmand %vm763, %vm727
      %vm800 = vmand %vm764, %vm728
      %vm801 = vmand %vm765, %vm729
      %vm802 = vmand %vm766, %vm730
      %vm803 = vmand %vm767, %vm731
      %vm804 = vmand %vm768, %vm732
      %vm805 = vmand %vm769, %vm733
      %vm806 = vmand %vm770, %vm734
      %vm807 = vmand %vm771, %vm735
      %v808 = vadd.s32 %v454, 16
      %v809 = vadd.s32 %v461, 16
      %v810 = vadd.s32 %v468, 16
      %v811 = vadd.s32 %v475, 16
      %v812 = vadd.s32 %v482, 16
      %v813 = vadd.s32 %v489, 16
      %v814 = vadd.s32 %v496, 16
      %v815 = vadd.s32 %v503, 16
      %v816 = vadd.s32 %v510, 16
      %v817 = vadd.s32 %v517, 16
      %v818 = vadd.s32 %v524, 16
      %v819 = vadd.s32 %v531, 16
      %v820 = vadd.s32 %v538, 16
      %v821 = vadd.s32 %v545, 16
      %v822 = vadd.s32 %v552, 16
      %v823 = vadd.s32 %v559, 16
      %v824 = vadd.s32 %v566, 16
      %v825 = vadd.s32 %v573, 16
      %v826 = vadd.s32 %v580, 16
      %v827 = vadd.s32 %v587, 16
      %v828 = vadd.s32 %v594, 16
      %v829 = vadd.s32 %v601, 16
      %v830 = vadd.s32 %v608, 16
      %v831 = vadd.s32 %v615, 16
      %v832 = vadd.s32 %v622, 16
      %v833 = vadd.s32 %v629, 16
      %v834 = vadd.s32 %v636, 16
      %v835 = vadd.s32 %v643, 16
      %v836 = vadd.s32 %v650, 16
      %v837 = vadd.s32 %v657, 16
      %v838 = vadd.s32 %v664, 16
      %v839 = vadd.s32 %v671, 16
      %v840 = vadd.s32 %v678, 16
      %v841 = vadd.s32 %v685, 16
      %v842 = vadd.s32 %v692, 16
      %v843 = vadd.s32 %v699, 16
      %v844 = vsel %vm772, %v808, %v454
      %v845 = vsel %vm773, %v809, %v461
      %v846 = vsel %vm774, %v810, %v468
      %v847 = vsel %vm775, %v811, %v475
      %v848 = vsel %vm776, %v812, %v482
      %v849 = vsel %vm777, %v813, %v489
      %v850 = vsel %vm778, %v814, %v496
      %v851 = vsel %vm779, %v815, %v503
      %v852 = vsel %vm780, %v816, %v510
      %v853 = vsel %vm781, %v817, %v517
      %v854 = vsel %vm782, %v818, %v524
      %v855 = vsel %vm783, %v819, %v531
      %v856 = vsel %vm784, %v820, %v538
      %v857 = vsel %vm785, %v821, %v545
      %v858 = vsel %vm786, %v822, %v552
      %v859 = vsel %vm787, %v823, %v559
      %v860 = vsel %vm788, %v824, %v566
      %v861 = vsel %vm789, %v825, %v573
      %v862 = vsel %vm790, %v826, %v580
      %v863 = vsel %vm791, %v827, %v587
      %v864 = vsel %vm792, %v828, %v594
      %v865 = vsel %vm793, %v829, %v601
      %v866 = vsel %vm794, %v830, %v608
      %v867 = vsel %vm795, %v831, %v615
      %v868 = vsel %vm796, %v832, %v622
      %v869 = vsel %vm797, %v833, %v629
      %v870 = vsel %vm798, %v834, %v636
      %v871 = vsel %vm799, %v835, %v643
      %v872 = vsel %vm800, %v836, %v650
      %v873 = vsel %vm801, %v837, %v657
      %v874 = vsel %vm802, %v838, %v664
      %v875 = vsel %vm803, %v839, %v671
      %v876 = vsel %vm804, %v840, %v678
      %v877 = vsel %vm805, %v841, %v685
      %v878 = vsel %vm806, %v842, %v692
      %v879 = vsel %vm807, %v843, %v699
      %vm880 = vcmp.eq.s32.totalorder %v844, 0
      %vm881 = vcmp.eq.s32.totalorder %v845, 0
      %vm882 = vcmp.eq.s32.totalorder %v846, 0
      %vm883 = vcmp.eq.s32.totalorder %v847, 0
      %vm884 = vcmp.eq.s32.totalorder %v848, 0
      %vm885 = vcmp.eq.s32.totalorder %v849, 0
      %vm886 = vcmp.eq.s32.totalorder %v850, 0
      %vm887 = vcmp.eq.s32.totalorder %v851, 0
      %vm888 = vcmp.eq.s32.totalorder %v852, 0
      %vm889 = vcmp.eq.s32.totalorder %v853, 0
      %vm890 = vcmp.eq.s32.totalorder %v854, 0
      %vm891 = vcmp.eq.s32.totalorder %v855, 0
      %vm892 = vcmp.eq.s32.totalorder %v856, 0
      %vm893 = vcmp.eq.s32.totalorder %v857, 0
      %vm894 = vcmp.eq.s32.totalorder %v858, 0
      %vm895 = vcmp.eq.s32.totalorder %v859, 0
      %vm896 = vcmp.eq.s32.totalorder %v860, 0
      %vm897 = vcmp.eq.s32.totalorder %v861, 0
      %vm898 = vcmp.eq.s32.totalorder %v862, 0
      %vm899 = vcmp.eq.s32.totalorder %v863, 0
      %vm900 = vcmp.eq.s32.totalorder %v864, 0
      %vm901 = vcmp.eq.s32.totalorder %v865, 0
      %vm902 = vcmp.eq.s32.totalorder %v866, 0
      %vm903 = vcmp.eq.s32.totalorder %v867, 0
      %vm904 = vcmp.eq.s32.totalorder %v868, 0
      %vm905 = vcmp.eq.s32.totalorder %v869, 0
      %vm906 = vcmp.eq.s32.totalorder %v870, 0
      %vm907 = vcmp.eq.s32.totalorder %v871, 0
      %vm908 = vcmp.eq.s32.totalorder %v872, 0
      %vm909 = vcmp.eq.s32.totalorder %v873, 0
      %vm910 = vcmp.eq.s32.totalorder %v874, 0
      %vm911 = vcmp.eq.s32.totalorder %v875, 0
      %vm912 = vcmp.eq.s32.totalorder %v876, 0
      %vm913 = vcmp.eq.s32.totalorder %v877, 0
      %vm914 = vcmp.eq.s32.totalorder %v878, 0
      %vm915 = vcmp.eq.s32.totalorder %v879, 0
      %v916 = vrot.slane %v379, 7
      %v917 = vrot.slane %v380, 7
      %v918 = vrot.slane %v381, 7
      %v919 = vrot.slane %v382, 7
      %v920 = vrot.slane %v383, 7
      %v921 = vrot.slane %v384, 7
      %v922 = vrot.slane %v385, 7
      %v923 = vrot.slane %v386, 7
      %v924 = vrot.slane %v387, 7
      %v925 = vrot.slane %v388, 7
      %v926 = vrot.slane %v389, 7
      %v927 = vrot.slane %v390, 7
      %v928 = vrot.slane %v391, 7
      %v929 = vrot.slane %v392, 7
      %v930 = vrot.slane %v393, 7
      %v931 = vrot.slane %v394, 7
      %v932 = vrot.slane %v395, 7
      %v933 = vrot.slane %v396, 7
      %v934 = vrot.slane %v397, 7
      %v935 = vrot.slane %v398, 7
      %v936 = vrot.slane %v399, 7
      %v937 = vrot.slane %v400, 7
      %v938 = vrot.slane %v401, 7
      %v939 = vrot.slane %v402, 7
      %v940 = vrot.slane %v403, 7
      %v941 = vrot.slane %v404, 7
      %v942 = vrot.slane %v405, 7
      %v943 = vrot.slane %v406, 7
      %v944 = vrot.slane %v407, 7
      %v945 = vrot.slane %v408, 7
      %v946 = vrot.slane %v409, 7
      %v947 = vrot.slane %v410, 7
      %vm948 = vcmp.lt.s32.totalorder %v412, 1
      %v949 = vsel %vm948, %v947, 0.0
      %v950 = vsel %vm948, %v946, %v947
      %v951 = vsel %vm948, %v945, %v946
      %v952 = vsel %vm948, %v944, %v945
      %v953 = vsel %vm948, %v943, %v944
      %v954 = vsel %vm948, %v942, %v943
      %v955 = vsel %vm948, %v941, %v942
      %v956 = vsel %vm948, %v940, %v941
      %v957 = vsel %vm948, %v939, %v940
      %v958 = vsel %vm948, %v938, %v939
      %v959 = vsel %vm948, %v937, %v938
      %v960 = vsel %vm948, %v936, %v937
      %v961 = vsel %vm948, %v935, %v936
      %v962 = vsel %vm948, %v934, %v935
      %v963 = vsel %vm948, %v933, %v934
      %v964 = vsel %vm948, %v932, %v933
      %v965 = vsel %vm948, %v931, %v932
      %v966 = vsel %vm948, %v930, %v931
      %v967 = vsel %vm948, %v929, %v930
      %v968 = vsel %vm948, %v928, %v929
      %v969 = vsel %vm948, %v927, %v928
      %v970 = vsel %vm948, %v926, %v927
      %v971 = vsel %vm948, %v925, %v926
      %v972 = vsel %vm948, %v924, %v925
      %v973 = vsel %vm948, %v923, %v924
      %v974 = vsel %vm948, %v922, %v923
      %v975 = vsel %vm948, %v921, %v922
      %v976 = vsel %vm948, %v920, %v921
      %v977 = vsel %vm948, %v919, %v920
      %v978 = vsel %vm948, %v918, %v919
      %v979 = vsel %vm948, %v917, %v918
      %v980 = vsel %vm948, %v916, %v917
      %v981 = vsel %vm948, 0.0, %v916
      %v982 = vsel %vm880, 1, 0
      %v983 = vsel %vm881, 1, 0
      %v984 = vsel %vm882, 1, 0
      %v985 = vsel %vm883, 1, 0
      %v986 = vsel %vm884, 1, 0
      %v987 = vsel %vm885, 1, 0
      %v988 = vsel %vm886, 1, 0
      %v989 = vsel %vm887, 1, 0
      %v990 = vsel %vm888, 1, 0
      %v991 = vsel %vm889, 1, 0
      %v992 = vsel %vm890, 1, 0
      %v993 = vsel %vm891, 1, 0
      %v994 = vsel %vm892, 1, 0
      %v995 = vsel %vm893, 1, 0
      %v996 = vsel %vm894, 1, 0
      %v997 = vsel %vm895, 1, 0
      %v998 = vsel %vm896, 1, 0
      %v999 = vsel %vm897, 1, 0
      %v1000 = vsel %vm898, 1, 0
      %v1001 = vsel %vm899, 1, 0
      %v1002 = vsel %vm900, 1, 0
      %v1003 = vsel %vm901, 1, 0
      %v1004 = vsel %vm902, 1, 0
      %v1005 = vsel %vm903, 1, 0
      %v1006 = vsel %vm904, 1, 0
      %v1007 = vsel %vm905, 1, 0
      %v1008 = vsel %vm906, 1, 0
      %v1009 = vsel %vm907, 1, 0
      %v1010 = vsel %vm908, 1, 0
      %v1011 = vsel %vm909, 1, 0
      %v1012 = vsel %vm910, 1, 0
      %v1013 = vsel %vm911, 1, 0
      %v1014 = vsel %vm912, 1, 0
      %v1015 = vsel %vm913, 1, 0
      %v1016 = vsel %vm914, 1, 0
      %v1017 = vsel %vm915, 1, 0
      %vm1018 = vcmp.eq.s32.totalorder %v982, 1
      %vm1019 = vcmp.eq.s32.totalorder %v983, 1
      %vm1020 = vcmp.eq.s32.totalorder %v984, 1
      %vm1021 = vcmp.eq.s32.totalorder %v985, 1
      %vm1022 = vcmp.eq.s32.totalorder %v986, 1
      %vm1023 = vcmp.eq.s32.totalorder %v987, 1
      %vm1024 = vcmp.eq.s32.totalorder %v988, 1
      %vm1025 = vcmp.eq.s32.totalorder %v989, 1
      %vm1026 = vcmp.eq.s32.totalorder %v990, 1
      %vm1027 = vcmp.eq.s32.totalorder %v991, 1
      %vm1028 = vcmp.eq.s32.totalorder %v992, 1
      %vm1029 = vcmp.eq.s32.totalorder %v993, 1
      %vm1030 = vcmp.eq.s32.totalorder %v994, 1
      %vm1031 = vcmp.eq.s32.totalorder %v995, 1
      %vm1032 = vcmp.eq.s32.totalorder %v996, 1
      %vm1033 = vcmp.eq.s32.totalorder %v997, 1
      %vm1034 = vcmp.eq.s32.totalorder %v998, 1
      %vm1035 = vcmp.eq.s32.totalorder %v999, 1
      %vm1036 = vcmp.eq.s32.totalorder %v1000, 1
      %vm1037 = vcmp.eq.s32.totalorder %v1001, 1
      %vm1038 = vcmp.eq.s32.totalorder %v1002, 1
      %vm1039 = vcmp.eq.s32.totalorder %v1003, 1
      %vm1040 = vcmp.eq.s32.totalorder %v1004, 1
      %vm1041 = vcmp.eq.s32.totalorder %v1005, 1
      %vm1042 = vcmp.eq.s32.totalorder %v1006, 1
      %vm1043 = vcmp.eq.s32.totalorder %v1007, 1
      %vm1044 = vcmp.eq.s32.totalorder %v1008, 1
      %vm1045 = vcmp.eq.s32.totalorder %v1009, 1
      %vm1046 = vcmp.eq.s32.totalorder %v1010, 1
      %vm1047 = vcmp.eq.s32.totalorder %v1011, 1
      %vm1048 = vcmp.eq.s32.totalorder %v1012, 1
      %vm1049 = vcmp.eq.s32.totalorder %v1013, 1
      %vm1050 = vcmp.eq.s32.totalorder %v1014, 1
      %vm1051 = vcmp.eq.s32.totalorder %v1015, 1
      %vm1052 = vcmp.eq.s32.totalorder %v1016, 1
      %vm1053 = vcmp.eq.s32.totalorder %v1017, 1
      %v1054 = vsel %vm1018, 0.0, 0.0
      %v1055 = vsel %vm1019, 0.0, 0.0
      %v1056 = vsel %vm1020, 0.0, %v981
      %v1057 = vsel %vm1021, 0.0, %v980
      %v1058 = vsel %vm1022, 0.0, %v979
      %v1059 = vsel %vm1023, 0.0, %v978
      %v1060 = vsel %vm1024, 0.0, %v977
      %v1061 = vsel %vm1025, 0.0, %v976
      %v1062 = vsel %vm1026, 0.0, %v975
      %v1063 = vsel %vm1027, 0.0, %v974
      %v1064 = vsel %vm1028, 0.0, %v973
      %v1065 = vsel %vm1029, 0.0, %v972
      %v1066 = vsel %vm1030, 0.0, %v971
      %v1067 = vsel %vm1031, 0.0, %v970
      %v1068 = vsel %vm1032, 0.0, %v969
      %v1069 = vsel %vm1033, 0.0, %v968
      %v1070 = vsel %vm1034, 0.0, %v967
      %v1071 = vsel %vm1035, 0.0, %v966
      %v1072 = vsel %vm1036, 0.0, %v965
      %v1073 = vsel %vm1037, 0.0, %v964
      %v1074 = vsel %vm1038, 0.0, %v963
      %v1075 = vsel %vm1039, 0.0, %v962
      %v1076 = vsel %vm1040, 0.0, %v961
      %v1077 = vsel %vm1041, 0.0, %v960
      %v1078 = vsel %vm1042, 0.0, %v959
      %v1079 = vsel %vm1043, 0.0, %v958
      %v1080 = vsel %vm1044, 0.0, %v957
      %v1081 = vsel %vm1045, 0.0, %v956
      %v1082 = vsel %vm1046, 0.0, %v955
      %v1083 = vsel %vm1047, 0.0, %v954
      %v1084 = vsel %vm1048, 0.0, %v953
      %v1085 = vsel %vm1049, 0.0, %v952
      %v1086 = vsel %vm1050, 0.0, %v951
      %v1087 = vsel %vm1051, 0.0, %v950
      %v1088 = vsel %vm1052, 0.0, %v949
      %v1089 = vsel %vm1053, 0.0, 0.0
      %vm1090 = vcmp.eq.s32.totalorder %v844, 15
      %vm1091 = vcmp.eq.s32.totalorder %v845, 15
      %vm1092 = vcmp.eq.s32.totalorder %v846, 15
      %vm1093 = vcmp.eq.s32.totalorder %v847, 15
      %vm1094 = vcmp.eq.s32.totalorder %v848, 15
      %vm1095 = vcmp.eq.s32.totalorder %v849, 15
      %vm1096 = vcmp.eq.s32.totalorder %v850, 15
      %vm1097 = vcmp.eq.s32.totalorder %v851, 15
      %vm1098 = vcmp.eq.s32.totalorder %v852, 15
      %vm1099 = vcmp.eq.s32.totalorder %v853, 15
      %vm1100 = vcmp.eq.s32.totalorder %v854, 15
      %vm1101 = vcmp.eq.s32.totalorder %v855, 15
      %vm1102 = vcmp.eq.s32.totalorder %v856, 15
      %vm1103 = vcmp.eq.s32.totalorder %v857, 15
      %vm1104 = vcmp.eq.s32.totalorder %v858, 15
      %vm1105 = vcmp.eq.s32.totalorder %v859, 15
      %vm1106 = vcmp.eq.s32.totalorder %v860, 15
      %vm1107 = vcmp.eq.s32.totalorder %v861, 15
      %vm1108 = vcmp.eq.s32.totalorder %v862, 15
      %vm1109 = vcmp.eq.s32.totalorder %v863, 15
      %vm1110 = vcmp.eq.s32.totalorder %v864, 15
      %vm1111 = vcmp.eq.s32.totalorder %v865, 15
      %vm1112 = vcmp.eq.s32.totalorder %v866, 15
      %vm1113 = vcmp.eq.s32.totalorder %v867, 15
      %vm1114 = vcmp.eq.s32.totalorder %v868, 15
      %vm1115 = vcmp.eq.s32.totalorder %v869, 15
      %vm1116 = vcmp.eq.s32.totalorder %v870, 15
      %vm1117 = vcmp.eq.s32.totalorder %v871, 15
      %vm1118 = vcmp.eq.s32.totalorder %v872, 15
      %vm1119 = vcmp.eq.s32.totalorder %v873, 15
      %vm1120 = vcmp.eq.s32.totalorder %v874, 15
      %vm1121 = vcmp.eq.s32.totalorder %v875, 15
      %vm1122 = vcmp.eq.s32.totalorder %v876, 15
      %vm1123 = vcmp.eq.s32.totalorder %v877, 15
      %vm1124 = vcmp.eq.s32.totalorder %v878, 15
      %vm1125 = vcmp.eq.s32.totalorder %v879, 15
      %v1126 = vrot.slane %v379, 1
      %v1127 = vrot.slane %v380, 1
      %v1128 = vrot.slane %v381, 1
      %v1129 = vrot.slane %v382, 1
      %v1130 = vrot.slane %v383, 1
      %v1131 = vrot.slane %v384, 1
      %v1132 = vrot.slane %v385, 1
      %v1133 = vrot.slane %v386, 1
      %v1134 = vrot.slane %v387, 1
      %v1135 = vrot.slane %v388, 1
      %v1136 = vrot.slane %v389, 1
      %v1137 = vrot.slane %v390, 1
      %v1138 = vrot.slane %v391, 1
      %v1139 = vrot.slane %v392, 1
      %v1140 = vrot.slane %v393, 1
      %v1141 = vrot.slane %v394, 1
      %v1142 = vrot.slane %v395, 1
      %v1143 = vrot.slane %v396, 1
      %v1144 = vrot.slane %v397, 1
      %v1145 = vrot.slane %v398, 1
      %v1146 = vrot.slane %v399, 1
      %v1147 = vrot.slane %v400, 1
      %v1148 = vrot.slane %v401, 1
      %v1149 = vrot.slane %v402, 1
      %v1150 = vrot.slane %v403, 1
      %v1151 = vrot.slane %v404, 1
      %v1152 = vrot.slane %v405, 1
      %v1153 = vrot.slane %v406, 1
      %v1154 = vrot.slane %v407, 1
      %v1155 = vrot.slane %v408, 1
      %v1156 = vrot.slane %v409, 1
      %v1157 = vrot.slane %v410, 1
      %vm1158 = vcmp.lt.s32.totalorder %v412, 7
      %v1159 = vsel %vm1158, %v1157, 0.0
      %v1160 = vsel %vm1158, %v1156, %v1157
      %v1161 = vsel %vm1158, %v1155, %v1156
      %v1162 = vsel %vm1158, %v1154, %v1155
      %v1163 = vsel %vm1158, %v1153, %v1154
      %v1164 = vsel %vm1158, %v1152, %v1153
      %v1165 = vsel %vm1158, %v1151, %v1152
      %v1166 = vsel %vm1158, %v1150, %v1151
      %v1167 = vsel %vm1158, %v1149, %v1150
      %v1168 = vsel %vm1158, %v1148, %v1149
      %v1169 = vsel %vm1158, %v1147, %v1148
      %v1170 = vsel %vm1158, %v1146, %v1147
      %v1171 = vsel %vm1158, %v1145, %v1146
      %v1172 = vsel %vm1158, %v1144, %v1145
      %v1173 = vsel %vm1158, %v1143, %v1144
      %v1174 = vsel %vm1158, %v1142, %v1143
      %v1175 = vsel %vm1158, %v1141, %v1142
      %v1176 = vsel %vm1158, %v1140, %v1141
      %v1177 = vsel %vm1158, %v1139, %v1140
      %v1178 = vsel %vm1158, %v1138, %v1139
      %v1179 = vsel %vm1158, %v1137, %v1138
      %v1180 = vsel %vm1158, %v1136, %v1137
      %v1181 = vsel %vm1158, %v1135, %v1136
      %v1182 = vsel %vm1158, %v1134, %v1135
      %v1183 = vsel %vm1158, %v1133, %v1134
      %v1184 = vsel %vm1158, %v1132, %v1133
      %v1185 = vsel %vm1158, %v1131, %v1132
      %v1186 = vsel %vm1158, %v1130, %v1131
      %v1187 = vsel %vm1158, %v1129, %v1130
      %v1188 = vsel %vm1158, %v1128, %v1129
      %v1189 = vsel %vm1158, %v1127, %v1128
      %v1190 = vsel %vm1158, %v1126, %v1127
      %v1191 = vsel %vm1158, 0.0, %v1126
      %v1192 = vsel %vm1090, 1, 0
      %v1193 = vsel %vm1091, 1, 0
      %v1194 = vsel %vm1092, 1, 0
      %v1195 = vsel %vm1093, 1, 0
      %v1196 = vsel %vm1094, 1, 0
      %v1197 = vsel %vm1095, 1, 0
      %v1198 = vsel %vm1096, 1, 0
      %v1199 = vsel %vm1097, 1, 0
      %v1200 = vsel %vm1098, 1, 0
      %v1201 = vsel %vm1099, 1, 0
      %v1202 = vsel %vm1100, 1, 0
      %v1203 = vsel %vm1101, 1, 0
      %v1204 = vsel %vm1102, 1, 0
      %v1205 = vsel %vm1103, 1, 0
      %v1206 = vsel %vm1104, 1, 0
      %v1207 = vsel %vm1105, 1, 0
      %v1208 = vsel %vm1106, 1, 0
      %v1209 = vsel %vm1107, 1, 0
      %v1210 = vsel %vm1108, 1, 0
      %v1211 = vsel %vm1109, 1, 0
      %v1212 = vsel %vm1110, 1, 0
      %v1213 = vsel %vm1111, 1, 0
      %v1214 = vsel %vm1112, 1, 0
      %v1215 = vsel %vm1113, 1, 0
      %v1216 = vsel %vm1114, 1, 0
      %v1217 = vsel %vm1115, 1, 0
      %v1218 = vsel %vm1116, 1, 0
      %v1219 = vsel %vm1117, 1, 0
      %v1220 = vsel %vm1118, 1, 0
      %v1221 = vsel %vm1119, 1, 0
      %v1222 = vsel %vm1120, 1, 0
      %v1223 = vsel %vm1121, 1, 0
      %v1224 = vsel %vm1122, 1, 0
      %v1225 = vsel %vm1123, 1, 0
      %v1226 = vsel %vm1124, 1, 0
      %v1227 = vsel %vm1125, 1, 0
      %vm1228 = vcmp.eq.s32.totalorder %v1192, 1
      %vm1229 = vcmp.eq.s32.totalorder %v1193, 1
      %vm1230 = vcmp.eq.s32.totalorder %v1194, 1
      %vm1231 = vcmp.eq.s32.totalorder %v1195, 1
      %vm1232 = vcmp.eq.s32.totalorder %v1196, 1
      %vm1233 = vcmp.eq.s32.totalorder %v1197, 1
      %vm1234 = vcmp.eq.s32.totalorder %v1198, 1
      %vm1235 = vcmp.eq.s32.totalorder %v1199, 1
      %vm1236 = vcmp.eq.s32.totalorder %v1200, 1
      %vm1237 = vcmp.eq.s32.totalorder %v1201, 1
      %vm1238 = vcmp.eq.s32.totalorder %v1202, 1
      %vm1239 = vcmp.eq.s32.totalorder %v1203, 1
      %vm1240 = vcmp.eq.s32.totalorder %v1204, 1
      %vm1241 = vcmp.eq.s32.totalorder %v1205, 1
      %vm1242 = vcmp.eq.s32.totalorder %v1206, 1
      %vm1243 = vcmp.eq.s32.totalorder %v1207, 1
      %vm1244 = vcmp.eq.s32.totalorder %v1208, 1
      %vm1245 = vcmp.eq.s32.totalorder %v1209, 1
      %vm1246 = vcmp.eq.s32.totalorder %v1210, 1
      %vm1247 = vcmp.eq.s32.totalorder %v1211, 1
      %vm1248 = vcmp.eq.s32.totalorder %v1212, 1
      %vm1249 = vcmp.eq.s32.totalorder %v1213, 1
      %vm1250 = vcmp.eq.s32.totalorder %v1214, 1
      %vm1251 = vcmp.eq.s32.totalorder %v1215, 1
      %vm1252 = vcmp.eq.s32.totalorder %v1216, 1
      %vm1253 = vcmp.eq.s32.totalorder %v1217, 1
      %vm1254 = vcmp.eq.s32.totalorder %v1218, 1
      %vm1255 = vcmp.eq.s32.totalorder %v1219, 1
      %vm1256 = vcmp.eq.s32.totalorder %v1220, 1
      %vm1257 = vcmp.eq.s32.totalorder %v1221, 1
      %vm1258 = vcmp.eq.s32.totalorder %v1222, 1
      %vm1259 = vcmp.eq.s32.totalorder %v1223, 1
      %vm1260 = vcmp.eq.s32.totalorder %v1224, 1
      %vm1261 = vcmp.eq.s32.totalorder %v1225, 1
      %vm1262 = vcmp.eq.s32.totalorder %v1226, 1
      %vm1263 = vcmp.eq.s32.totalorder %v1227, 1
      %v1264 = vsel %vm1228, 0.0, 0.0
      %v1265 = vsel %vm1229, 0.0, %v1191
      %v1266 = vsel %vm1230, 0.0, %v1190
      %v1267 = vsel %vm1231, 0.0, %v1189
      %v1268 = vsel %vm1232, 0.0, %v1188
      %v1269 = vsel %vm1233, 0.0, %v1187
      %v1270 = vsel %vm1234, 0.0, %v1186
      %v1271 = vsel %vm1235, 0.0, %v1185
      %v1272 = vsel %vm1236, 0.0, %v1184
      %v1273 = vsel %vm1237, 0.0, %v1183
      %v1274 = vsel %vm1238, 0.0, %v1182
      %v1275 = vsel %vm1239, 0.0, %v1181
      %v1276 = vsel %vm1240, 0.0, %v1180
      %v1277 = vsel %vm1241, 0.0, %v1179
      %v1278 = vsel %vm1242, 0.0, %v1178
      %v1279 = vsel %vm1243, 0.0, %v1177
      %v1280 = vsel %vm1244, 0.0, %v1176
      %v1281 = vsel %vm1245, 0.0, %v1175
      %v1282 = vsel %vm1246, 0.0, %v1174
      %v1283 = vsel %vm1247, 0.0, %v1173
      %v1284 = vsel %vm1248, 0.0, %v1172
      %v1285 = vsel %vm1249, 0.0, %v1171
      %v1286 = vsel %vm1250, 0.0, %v1170
      %v1287 = vsel %vm1251, 0.0, %v1169
      %v1288 = vsel %vm1252, 0.0, %v1168
      %v1289 = vsel %vm1253, 0.0, %v1167
      %v1290 = vsel %vm1254, 0.0, %v1166
      %v1291 = vsel %vm1255, 0.0, %v1165
      %v1292 = vsel %vm1256, 0.0, %v1164
      %v1293 = vsel %vm1257, 0.0, %v1163
      %v1294 = vsel %vm1258, 0.0, %v1162
      %v1295 = vsel %vm1259, 0.0, %v1161
      %v1296 = vsel %vm1260, 0.0, %v1160
      %v1297 = vsel %vm1261, 0.0, %v1159
      %v1298 = vsel %vm1262, 0.0, 0.0
      %v1299 = vsel %vm1263, 0.0, 0.0
      %v1300 = vpack.c.bf16 %v1055, %v1054
      %v1301 = vpack.c.bf16 %v1057, %v1056
      %v1302 = vpack.c.bf16 %v1059, %v1058
      %v1303 = vpack.c.bf16 %v1061, %v1060
      %v1304 = vpack.c.bf16 %v1063, %v1062
      %v1305 = vpack.c.bf16 %v1065, %v1064
      %v1306 = vpack.c.bf16 %v1067, %v1066
      %v1307 = vpack.c.bf16 %v1069, %v1068
      %v1308 = vpack.c.bf16 %v1071, %v1070
      %v1309 = vpack.c.bf16 %v1073, %v1072
      %v1310 = vpack.c.bf16 %v1075, %v1074
      %v1311 = vpack.c.bf16 %v1077, %v1076
      %v1312 = vpack.c.bf16 %v1079, %v1078
      %v1313 = vpack.c.bf16 %v1081, %v1080
      %v1314 = vpack.c.bf16 %v1083, %v1082
      %v1315 = vpack.c.bf16 %v1085, %v1084
      %v1316 = vpack.c.bf16 %v1087, %v1086
      %v1317 = vpack.c.bf16 %v1089, %v1088
      %v1318 = vpack.c.bf16 0.0, 0.0
      %v1319 = vpack.c.bf16 %v380, %v379
      %v1320 = vpack.c.bf16 %v382, %v381
      %v1321 = vpack.c.bf16 %v384, %v383
      %v1322 = vpack.c.bf16 %v386, %v385
      %v1323 = vpack.c.bf16 %v388, %v387
      %v1324 = vpack.c.bf16 %v390, %v389
      %v1325 = vpack.c.bf16 %v392, %v391
      %v1326 = vpack.c.bf16 %v394, %v393
      %v1327 = vpack.c.bf16 %v396, %v395
      %v1328 = vpack.c.bf16 %v398, %v397
      %v1329 = vpack.c.bf16 %v400, %v399
      %v1330 = vpack.c.bf16 %v402, %v401
      %v1331 = vpack.c.bf16 %v404, %v403
      %v1332 = vpack.c.bf16 %v406, %v405
      %v1333 = vpack.c.bf16 %v408, %v407
      %v1334 = vpack.c.bf16 %v410, %v409
      %v1335 = vpack.c.bf16 %v1265, %v1264
      %v1336 = vpack.c.bf16 %v1267, %v1266
      %v1337 = vpack.c.bf16 %v1269, %v1268
      %v1338 = vpack.c.bf16 %v1271, %v1270
      %v1339 = vpack.c.bf16 %v1273, %v1272
      %v1340 = vpack.c.bf16 %v1275, %v1274
      %v1341 = vpack.c.bf16 %v1277, %v1276
      %v1342 = vpack.c.bf16 %v1279, %v1278
      %v1343 = vpack.c.bf16 %v1281, %v1280
      %v1344 = vpack.c.bf16 %v1283, %v1282
      %v1345 = vpack.c.bf16 %v1285, %v1284
      %v1346 = vpack.c.bf16 %v1287, %v1286
      %v1347 = vpack.c.bf16 %v1289, %v1288
      %v1348 = vpack.c.bf16 %v1291, %v1290
      %v1349 = vpack.c.bf16 %v1293, %v1292
      %v1350 = vpack.c.bf16 %v1295, %v1294
      %v1351 = vpack.c.bf16 %v1297, %v1296
      %v1352 = vpack.c.bf16 %v1299, %v1298
      %v1353 = vld [vmem:[%s1] sm:$0xf]
      %v1354 = vld [vmem:[%s1 + $0x4] sm:$0xf]
      %v1355 = vld [vmem:[%s1 + $0x8] sm:$0xf]
      %v1356 = vld [vmem:[%s1 + $0xc] sm:$0xf]
      %v1357 = vld [vmem:[%s1 + $0x10] sm:$0xf]
      %v1358 = vld [vmem:[%s1 + $0x14] sm:$0xf]
      %v1359 = vld [vmem:[%s1 + $0x18] sm:$0xf]
      %v1360 = vld [vmem:[%s1 + $0x1c] sm:$0xf]
      %v1361 = vld [vmem:[%s1 + $0x20] sm:$0xf]
      %v1362 = vld [vmem:[%s1 + $0x24] sm:$0xf]
      %v1363 = vld [vmem:[%s1 + $0x28] sm:$0xf]
      %v1364 = vld [vmem:[%s1 + $0x2c] sm:$0xf]
      %v1365 = vld [vmem:[%s1 + $0x30] sm:$0xf]
      %v1366 = vld [vmem:[%s1 + $0x34] sm:$0xf]
      %v1367 = vld [vmem:[%s1 + $0x38] sm:$0xf]
      %v1368 = vld [vmem:[%s1 + $0x3c] sm:$0xf]
      %v1369 = vld [vmem:[%s1 + $0x40] sm:$0xf]
      %v1370 = vld [vmem:[%s1 + $0x44] sm:$0xf]
      %v1371 = vld [vmem:[%s1 + $0x48] sm:$0xf]
      %v1372 = vld [vmem:[%s1 + $0x4c] sm:$0xf]
      %v1373 = vld [vmem:[%s1 + $0x50] sm:$0xf]
      %v1374 = vld [vmem:[%s1 + $0x54] sm:$0xf]
      %v1375 = vld [vmem:[%s1 + $0x58] sm:$0xf]
      %v1376 = vld [vmem:[%s1 + $0x5c] sm:$0xf]
      %v1377 = vld [vmem:[%s1 + $0x60] sm:$0xf]
      %v1378 = vld [vmem:[%s1 + $0x64] sm:$0xf]
      %v1379 = vld [vmem:[%s1 + $0x68] sm:$0xf]
      %v1380 = vld [vmem:[%s1 + $0x6c] sm:$0xf]
      %v1381 = vld [vmem:[%s1 + $0x70] sm:$0xf]
      %v1382 = vld [vmem:[%s1 + $0x74] sm:$0xf]
      %v1383 = vld [vmem:[%s1 + $0x78] sm:$0xf]
      %v1384 = vld [vmem:[%s1 + $0x7c] sm:$0xf]
      %v1385 = vld [vmem:[%s1 + $0x80] sm:$0xf]
      %v1386 = vld [vmem:[%s1 + $0x84] sm:$0xf]
      %v1387 = vld [vmem:[%s1 + $0x88] sm:$0xf]
      %v1388 = vld [vmem:[%s1 + $0x8c] sm:$0xf]
      %v1389 = vld [vmem:[%s1 + $0x90] sm:$0xf]
      %v1390 = vld [vmem:[%s1 + $0x94] sm:$0xf]
      %v1391 = vld [vmem:[%s1 + $0x98] sm:$0xf]
      %v1392 = vld [vmem:[%s1 + $0x9c] sm:$0xf]
      %v1393 = vld [vmem:[%s1 + $0xa0] sm:$0xf]
      %v1394 = vld [vmem:[%s1 + $0xa4] sm:$0xf]
      %v1395 = vld [vmem:[%s1 + $0xa8] sm:$0xf]
      %v1396 = vld [vmem:[%s1 + $0xac] sm:$0xf]
      %v1397 = vld [vmem:[%s1 + $0xb0] sm:$0xf]
      %v1398 = vld [vmem:[%s1 + $0xb4] sm:$0xf]
      %v1399 = vld [vmem:[%s1 + $0xb8] sm:$0xf]
      %v1400 = vld [vmem:[%s1 + $0xbc] sm:$0xf]
      %v1401 = vld [vmem:[%s1 + $0xc0] sm:$0xf]
      %v1402 = vld [vmem:[%s1 + $0xc4] sm:$0xf]
      %v1403 = vld [vmem:[%s1 + $0xc8] sm:$0xf]
      %v1404 = vld [vmem:[%s1 + $0xcc] sm:$0xf]
      %v1405 = vld [vmem:[%s1 + $0xd0] sm:$0xf]
      %v1406 = vld [vmem:[%s1 + $0xd4] sm:$0xf]
      %v1407 = vld [vmem:[%s1 + $0xd8] sm:$0xf]
      %v1408 = vld [vmem:[%s1 + $0xdc] sm:$0xf]
      %v1409 = vld [vmem:[%s1 + $0xe0] sm:$0xf]
      %v1410 = vld [vmem:[%s1 + $0xe4] sm:$0xf]
      %v1411 = vld [vmem:[%s1 + $0xe8] sm:$0xf]
      %v1412 = vld [vmem:[%s1 + $0xec] sm:$0xf]
      %v1413 = vld [vmem:[%s1 + $0xf0] sm:$0xf]
      %v1414 = vld [vmem:[%s1 + $0xf4] sm:$0xf]
      %v1415 = vld [vmem:[%s1 + $0xf8] sm:$0xf]
      %v1416 = vld [vmem:[%s1 + $0xfc] sm:$0xf]
      %v1417 = vld [vmem:[%s1 + $0x100] sm:$0xf]
      %v1418 = vld [vmem:[%s1 + $0x104] sm:$0xf]
      %v1419 = vld [vmem:[%s1 + $0x108] sm:$0xf]
      %v1420 = vld [vmem:[%s1 + $0x10c] sm:$0xf]
      %v1421 = vld [vmem:[%s1 + $0x110] sm:$0xf]
      %v1422 = vld [vmem:[%s1 + $0x114] sm:$0xf]
      %v1423 = vld [vmem:[%s1 + $0x118] sm:$0xf]
      %v1424 = vld [vmem:[%s1 + $0x11c] sm:$0xf]
      %v1425 = vld [vmem:[%s1 + $0x120] sm:$0xf]
      %v1426 = vld [vmem:[%s1 + $0x124] sm:$0xf]
      %v1427 = vld [vmem:[%s1 + $0x128] sm:$0xf]
      %v1428 = vld [vmem:[%s1 + $0x12c] sm:$0xf]
      %v1429 = vld [vmem:[%s1 + $0x130] sm:$0xf]
      %v1430 = vld [vmem:[%s1 + $0x134] sm:$0xf]
      %v1431 = vld [vmem:[%s1 + $0x138] sm:$0xf]
      %v1432 = vld [vmem:[%s1 + $0x13c] sm:$0xf]
      %v1433 = vld [vmem:[%s1 + $0x140] sm:$0xf]
      %v1434 = vld [vmem:[%s1 + $0x144] sm:$0xf]
      %v1435 = vld [vmem:[%s1 + $0x148] sm:$0xf]
      %v1436 = vld [vmem:[%s1 + $0x14c] sm:$0xf]
      %v1437 = vld [vmem:[%s1 + $0x150] sm:$0xf]
      %v1438 = vld [vmem:[%s1 + $0x154] sm:$0xf]
      %v1439 = vld [vmem:[%s1 + $0x158] sm:$0xf]
      %v1440 = vld [vmem:[%s1 + $0x15c] sm:$0xf]
      %v1441 = vld [vmem:[%s1 + $0x160] sm:$0xf]
      %v1442 = vld [vmem:[%s1 + $0x164] sm:$0xf]
      %v1443 = vld [vmem:[%s1 + $0x168] sm:$0xf]
      %v1444 = vld [vmem:[%s1 + $0x16c] sm:$0xf]
      %v1445 = vld [vmem:[%s1 + $0x170] sm:$0xf]
      %v1446 = vld [vmem:[%s1 + $0x174] sm:$0xf]
      %v1447 = vld [vmem:[%s1 + $0x178] sm:$0xf]
      %v1448 = vld [vmem:[%s1 + $0x17c] sm:$0xf]
      %v1449 = vld [vmem:[%s1 + $0x180] sm:$0xf]
      %v1450 = vld [vmem:[%s1 + $0x184] sm:$0xf]
      %v1451 = vld [vmem:[%s1 + $0x188] sm:$0xf]
      %v1452 = vld [vmem:[%s1 + $0x18c] sm:$0xf]
      %v1453 = vld [vmem:[%s1 + $0x190] sm:$0xf]
      %v1454 = vld [vmem:[%s1 + $0x194] sm:$0xf]
      %v1455 = vld [vmem:[%s1 + $0x198] sm:$0xf]
      %v1456 = vld [vmem:[%s1 + $0x19c] sm:$0xf]
      %v1457 = vld [vmem:[%s1 + $0x1a0] sm:$0xf]
      %v1458 = vld [vmem:[%s1 + $0x1a4] sm:$0xf]
      %v1459 = vld [vmem:[%s1 + $0x1a8] sm:$0xf]
      %v1460 = vld [vmem:[%s1 + $0x1ac] sm:$0xf]
      %v1461 = vld [vmem:[%s1 + $0x1b0] sm:$0xf]
      %v1462 = vld [vmem:[%s1 + $0x1b4] sm:$0xf]
      %v1463 = vld [vmem:[%s1 + $0x1b8] sm:$0xf]
      %v1464 = vld [vmem:[%s1 + $0x1bc] sm:$0xf]
      %v1465 = vld [vmem:[%s1 + $0x1c0] sm:$0xf]
      %v1466 = vld [vmem:[%s1 + $0x1c4] sm:$0xf]
      %v1467 = vld [vmem:[%s1 + $0x1c8] sm:$0xf]
      %v1468 = vld [vmem:[%s1 + $0x1cc] sm:$0xf]
      %v1469 = vld [vmem:[%s1 + $0x1d0] sm:$0xf]
      %v1470 = vld [vmem:[%s1 + $0x1d4] sm:$0xf]
      %v1471 = vld [vmem:[%s1 + $0x1d8] sm:$0xf]
      %v1472 = vld [vmem:[%s1 + $0x1dc] sm:$0xf]
      %v1473 = vld [vmem:[%s1 + $0x1e0] sm:$0xf]
      %v1474 = vld [vmem:[%s1 + $0x1e4] sm:$0xf]
      %v1475 = vld [vmem:[%s1 + $0x1e8] sm:$0xf]
      %v1476 = vld [vmem:[%s1 + $0x1ec] sm:$0xf]
      %v1477 = vld [vmem:[%s1 + $0x1f0] sm:$0xf]
      %v1478 = vld [vmem:[%s1 + $0x1f4] sm:$0xf]
      %v1479 = vld [vmem:[%s1 + $0x1f8] sm:$0xf]
      %v1480 = vld [vmem:[%s1 + $0x1fc] sm:$0xf]
      %v1481 = vld [vmem:[%s1 + $0x200] sm:$0xf]
      %v1482 = vld [vmem:[%s1 + $0x204] sm:$0xf]
      %v1483 = vld [vmem:[%s1 + $0x208] sm:$0xf]
      %v1484 = vld [vmem:[%s1 + $0x20c] sm:$0xf]
      %v1485 = vld [vmem:[%s1 + $0x210] sm:$0xf]
      %v1486 = vld [vmem:[%s1 + $0x214] sm:$0xf]
      %v1487 = vld [vmem:[%s1 + $0x218] sm:$0xf]
      %v1488 = vld [vmem:[%s1 + $0x21c] sm:$0xf]
      %v1489 = vld [vmem:[%s1 + $0x220] sm:$0xf]
      %v1490 = vld [vmem:[%s1 + $0x224] sm:$0xf]
      %v1491 = vld [vmem:[%s1 + $0x228] sm:$0xf]
      %v1492 = vld [vmem:[%s1 + $0x22c] sm:$0xf]
      %v1493 = vld [vmem:[%s1 + $0x230] sm:$0xf]
      %v1494 = vld [vmem:[%s1 + $0x234] sm:$0xf]
      %v1495 = vld [vmem:[%s1 + $0x238] sm:$0xf]
      %v1496 = vld [vmem:[%s1 + $0x23c] sm:$0xf]
      %v1641 = vunpack.c.l.b16 %v1353
      %v1642 = vunpack.c.l.b16 %v1354
      %v1643 = vunpack.c.l.b16 %v1355
      %v1644 = vunpack.c.l.b16 %v1356
      %v1645 = vunpack.c.l.b16 %v1357
      %v1646 = vunpack.c.l.b16 %v1358
      %v1647 = vunpack.c.l.b16 %v1359
      %v1648 = vunpack.c.l.b16 %v1360
      %v1649 = vunpack.c.l.b16 %v1361
      %v1650 = vunpack.c.l.b16 %v1362
      %v1651 = vunpack.c.l.b16 %v1363
      %v1652 = vunpack.c.l.b16 %v1364
      %v1653 = vunpack.c.l.b16 %v1365
      %v1654 = vunpack.c.l.b16 %v1366
      %v1655 = vunpack.c.l.b16 %v1367
      %v1656 = vunpack.c.l.b16 %v1368
      %v1657 = vunpack.c.l.b16 %v1369
      %v1658 = vunpack.c.l.b16 %v1370
      %v1659 = vunpack.c.l.b16 %v1371
      %v1660 = vunpack.c.l.b16 %v1372
      %v1661 = vunpack.c.l.b16 %v1373
      %v1662 = vunpack.c.l.b16 %v1374
      %v1663 = vunpack.c.l.b16 %v1375
      %v1664 = vunpack.c.l.b16 %v1376
      %v1665 = vunpack.c.l.b16 %v1377
      %v1666 = vunpack.c.l.b16 %v1378
      %v1667 = vunpack.c.l.b16 %v1379
      %v1668 = vunpack.c.l.b16 %v1380
      %v1669 = vunpack.c.l.b16 %v1381
      %v1670 = vunpack.c.l.b16 %v1382
      %v1671 = vunpack.c.l.b16 %v1383
      %v1672 = vunpack.c.l.b16 %v1384
      %v1673 = vunpack.c.l.b16 %v1385
      %v1674 = vunpack.c.l.b16 %v1386
      %v1675 = vunpack.c.l.b16 %v1387
      %v1676 = vunpack.c.l.b16 %v1388
      %v1677 = vunpack.c.l.b16 %v1389
      %v1678 = vunpack.c.l.b16 %v1390
      %v1679 = vunpack.c.l.b16 %v1391
      %v1680 = vunpack.c.l.b16 %v1392
      %v1681 = vunpack.c.l.b16 %v1393
      %v1682 = vunpack.c.l.b16 %v1394
      %v1683 = vunpack.c.l.b16 %v1395
      %v1684 = vunpack.c.l.b16 %v1396
      %v1685 = vunpack.c.l.b16 %v1397
      %v1686 = vunpack.c.l.b16 %v1398
      %v1687 = vunpack.c.l.b16 %v1399
      %v1688 = vunpack.c.l.b16 %v1400
      %v1689 = vunpack.c.l.b16 %v1401
      %v1690 = vunpack.c.l.b16 %v1402
      %v1691 = vunpack.c.l.b16 %v1403
      %v1692 = vunpack.c.l.b16 %v1404
      %v1693 = vunpack.c.l.b16 %v1405
      %v1694 = vunpack.c.l.b16 %v1406
      %v1695 = vunpack.c.l.b16 %v1407
      %v1696 = vunpack.c.l.b16 %v1408
      %v1697 = vunpack.c.l.b16 %v1409
      %v1698 = vunpack.c.l.b16 %v1410
      %v1699 = vunpack.c.l.b16 %v1411
      %v1700 = vunpack.c.l.b16 %v1412
      %v1701 = vunpack.c.l.b16 %v1413
      %v1702 = vunpack.c.l.b16 %v1414
      %v1703 = vunpack.c.l.b16 %v1415
      %v1704 = vunpack.c.l.b16 %v1416
      %v1705 = vunpack.c.l.b16 %v1417
      %v1706 = vunpack.c.l.b16 %v1418
      %v1707 = vunpack.c.l.b16 %v1419
      %v1708 = vunpack.c.l.b16 %v1420
      %v1709 = vunpack.c.l.b16 %v1421
      %v1710 = vunpack.c.l.b16 %v1422
      %v1711 = vunpack.c.l.b16 %v1423
      %v1712 = vunpack.c.l.b16 %v1424
      %v1713 = vunpack.c.l.b16 %v1425
      %v1714 = vunpack.c.l.b16 %v1426
      %v1715 = vunpack.c.l.b16 %v1427
      %v1716 = vunpack.c.l.b16 %v1428
      %v1717 = vunpack.c.l.b16 %v1429
      %v1718 = vunpack.c.l.b16 %v1430
      %v1719 = vunpack.c.l.b16 %v1431
      %v1720 = vunpack.c.l.b16 %v1432
      %v1721 = vunpack.c.l.b16 %v1433
      %v1722 = vunpack.c.l.b16 %v1434
      %v1723 = vunpack.c.l.b16 %v1435
      %v1724 = vunpack.c.l.b16 %v1436
      %v1725 = vunpack.c.l.b16 %v1437
      %v1726 = vunpack.c.l.b16 %v1438
      %v1727 = vunpack.c.l.b16 %v1439
      %v1728 = vunpack.c.l.b16 %v1440
      %v1729 = vunpack.c.l.b16 %v1441
      %v1730 = vunpack.c.l.b16 %v1442
      %v1731 = vunpack.c.l.b16 %v1443
      %v1732 = vunpack.c.l.b16 %v1444
      %v1733 = vunpack.c.l.b16 %v1445
      %v1734 = vunpack.c.l.b16 %v1446
      %v1735 = vunpack.c.l.b16 %v1447
      %v1736 = vunpack.c.l.b16 %v1448
      %v1737 = vunpack.c.l.b16 %v1449
      %v1738 = vunpack.c.l.b16 %v1450
      %v1739 = vunpack.c.l.b16 %v1451
      %v1740 = vunpack.c.l.b16 %v1452
      %v1741 = vunpack.c.l.b16 %v1453
      %v1742 = vunpack.c.l.b16 %v1454
      %v1743 = vunpack.c.l.b16 %v1455
      %v1744 = vunpack.c.l.b16 %v1456
      %v1745 = vunpack.c.l.b16 %v1457
      %v1746 = vunpack.c.l.b16 %v1458
      %v1747 = vunpack.c.l.b16 %v1459
      %v1748 = vunpack.c.l.b16 %v1460
      %v1749 = vunpack.c.l.b16 %v1461
      %v1750 = vunpack.c.l.b16 %v1462
      %v1751 = vunpack.c.l.b16 %v1463
      %v1752 = vunpack.c.l.b16 %v1464
      %v1753 = vunpack.c.l.b16 %v1465
      %v1754 = vunpack.c.l.b16 %v1466
      %v1755 = vunpack.c.l.b16 %v1467
      %v1756 = vunpack.c.l.b16 %v1468
      %v1757 = vunpack.c.l.b16 %v1469
      %v1758 = vunpack.c.l.b16 %v1470
      %v1759 = vunpack.c.l.b16 %v1471
      %v1760 = vunpack.c.l.b16 %v1472
      %v1761 = vunpack.c.l.b16 %v1473
      %v1762 = vunpack.c.l.b16 %v1474
      %v1763 = vunpack.c.l.b16 %v1475
      %v1764 = vunpack.c.l.b16 %v1476
      %v1765 = vunpack.c.l.b16 %v1477
      %v1766 = vunpack.c.l.b16 %v1478
      %v1767 = vunpack.c.l.b16 %v1479
      %v1768 = vunpack.c.l.b16 %v1480
      %v1769 = vunpack.c.l.b16 %v1481
      %v1770 = vunpack.c.l.b16 %v1482
      %v1771 = vunpack.c.l.b16 %v1483
      %v1772 = vunpack.c.l.b16 %v1484
      %v1773 = vunpack.c.l.b16 %v1485
      %v1774 = vunpack.c.l.b16 %v1486
      %v1775 = vunpack.c.l.b16 %v1487
      %v1776 = vunpack.c.l.b16 %v1488
      %v1777 = vunpack.c.l.b16 %v1489
      %v1778 = vunpack.c.l.b16 %v1490
      %v1779 = vunpack.c.l.b16 %v1491
      %v1780 = vunpack.c.l.b16 %v1492
      %v1781 = vunpack.c.l.b16 %v1493
      %v1782 = vunpack.c.l.b16 %v1494
      %v1783 = vunpack.c.l.b16 %v1495
      %v1784 = vunpack.c.l.b16 %v1496
      %v1785 = vpack.c.b16 %v1642, %v1641
      %v1786 = vpack.c.b16 %v1644, %v1643
      %v1787 = vpack.c.b16 %v1646, %v1645
      %v1788 = vpack.c.b16 %v1648, %v1647
      %v1789 = vpack.c.b16 %v1650, %v1649
      %v1790 = vpack.c.b16 %v1652, %v1651
      %v1791 = vpack.c.b16 %v1654, %v1653
      %v1792 = vpack.c.b16 %v1656, %v1655
      %v1793 = vpack.c.b16 %v1658, %v1657
      %v1794 = vpack.c.b16 %v1660, %v1659
      %v1795 = vpack.c.b16 %v1662, %v1661
      %v1796 = vpack.c.b16 %v1664, %v1663
      %v1797 = vpack.c.b16 %v1666, %v1665
      %v1798 = vpack.c.b16 %v1668, %v1667
      %v1799 = vpack.c.b16 %v1670, %v1669
      %v1800 = vpack.c.b16 %v1672, %v1671
      %v1801 = vpack.c.b16 %v1674, %v1673
      %v1802 = vpack.c.b16 %v1676, %v1675
      %v1803 = vpack.c.b16 %v1678, %v1677
      %v1804 = vpack.c.b16 %v1680, %v1679
      %v1805 = vpack.c.b16 %v1682, %v1681
      %v1806 = vpack.c.b16 %v1684, %v1683
      %v1807 = vpack.c.b16 %v1686, %v1685
      %v1808 = vpack.c.b16 %v1688, %v1687
      %v1809 = vpack.c.b16 %v1690, %v1689
      %v1810 = vpack.c.b16 %v1692, %v1691
      %v1811 = vpack.c.b16 %v1694, %v1693
      %v1812 = vpack.c.b16 %v1696, %v1695
      %v1813 = vpack.c.b16 %v1698, %v1697
      %v1814 = vpack.c.b16 %v1700, %v1699
      %v1815 = vpack.c.b16 %v1702, %v1701
      %v1816 = vpack.c.b16 %v1704, %v1703
      %v1817 = vpack.c.b16 %v1706, %v1705
      %v1818 = vpack.c.b16 %v1708, %v1707
      %v1819 = vpack.c.b16 %v1710, %v1709
      %v1820 = vpack.c.b16 %v1712, %v1711
      %v1821 = vpack.c.b16 %v1714, %v1713
      %v1822 = vpack.c.b16 %v1716, %v1715
      %v1823 = vpack.c.b16 %v1718, %v1717
      %v1824 = vpack.c.b16 %v1720, %v1719
      %v1825 = vpack.c.b16 %v1722, %v1721
      %v1826 = vpack.c.b16 %v1724, %v1723
      %v1827 = vpack.c.b16 %v1726, %v1725
      %v1828 = vpack.c.b16 %v1728, %v1727
      %v1829 = vpack.c.b16 %v1730, %v1729
      %v1830 = vpack.c.b16 %v1732, %v1731
      %v1831 = vpack.c.b16 %v1734, %v1733
      %v1832 = vpack.c.b16 %v1736, %v1735
      %v1833 = vpack.c.b16 %v1738, %v1737
      %v1834 = vpack.c.b16 %v1740, %v1739
      %v1835 = vpack.c.b16 %v1742, %v1741
      %v1836 = vpack.c.b16 %v1744, %v1743
      %v1837 = vpack.c.b16 %v1746, %v1745
      %v1838 = vpack.c.b16 %v1748, %v1747
      %v1839 = vpack.c.b16 %v1750, %v1749
      %v1840 = vpack.c.b16 %v1752, %v1751
      %v1841 = vpack.c.b16 %v1754, %v1753
      %v1842 = vpack.c.b16 %v1756, %v1755
      %v1843 = vpack.c.b16 %v1758, %v1757
      %v1844 = vpack.c.b16 %v1760, %v1759
      %v1845 = vpack.c.b16 %v1762, %v1761
      %v1846 = vpack.c.b16 %v1764, %v1763
      %v1847 = vpack.c.b16 %v1766, %v1765
      %v1848 = vpack.c.b16 %v1768, %v1767
      %v1849 = vpack.c.b16 %v1770, %v1769
      %v1850 = vpack.c.b16 %v1772, %v1771
      %v1851 = vpack.c.b16 %v1774, %v1773
      %v1852 = vpack.c.b16 %v1776, %v1775
      %v1853 = vpack.c.b16 %v1778, %v1777
      %v1854 = vpack.c.b16 %v1780, %v1779
      %v1855 = vpack.c.b16 %v1782, %v1781
      %v1856 = vpack.c.b16 %v1784, %v1783
      %1929 = vmatprep.subr.bf16.mxu0 0
      %1930 = vmatpush1.bf16.msra.mxu0 %v1785
      %1931 = vmatprep.subr.bf16.mxu0 0
      %1932 = vmatpush1.bf16.msra.mxu0 %v1786
      %1933 = vmatprep.subr.bf16.mxu0 0
      %1934 = vmatpush1.bf16.msra.mxu0 %v1787
      %1935 = vmatprep.subr.bf16.mxu0 0
      %1936 = vmatpush1.bf16.msra.mxu0 %v1788
      %1937 = vmatprep.subr.bf16.mxu0 0
      %1938 = vmatpush1.bf16.msra.mxu0 %v1789
      %1939 = vmatprep.subr.bf16.mxu0 0
      %1940 = vmatpush1.bf16.msra.mxu0 %v1790
      %1941 = vmatprep.subr.bf16.mxu0 0
      %1942 = vmatpush1.bf16.msra.mxu0 %v1791
      %1943 = vmatprep.subr.bf16.mxu0 0
      %1944 = vmatpush1.bf16.msra.mxu0 %v1792
      %1945 = vmatprep.subr.bf16.mxu0 0
      %1946 = vmatpush1.bf16.msra.mxu0 %v1793
      %1947 = vmatprep.subr.bf16.mxu0 0
      %1948 = vmatpush1.bf16.msra.mxu0 %v1794
      %1949 = vmatprep.subr.bf16.mxu0 0
      %1950 = vmatpush1.bf16.msra.mxu0 %v1795
      %1951 = vmatprep.subr.bf16.mxu0 0
      %1952 = vmatpush1.bf16.msra.mxu0 %v1796
      %1953 = vmatprep.subr.bf16.mxu0 0
      %1954 = vmatpush1.bf16.msra.mxu0 %v1797
      %1955 = vmatprep.subr.bf16.mxu0 0
      %1956 = vmatpush1.bf16.msra.mxu0 %v1798
      %1957 = vmatprep.subr.bf16.mxu0 0
      %1958 = vmatpush1.bf16.msra.mxu0 %v1799
      %1959 = vmatprep.subr.bf16.mxu0 0
      %1960 = vmatpush1.bf16.msra.mxu0 %v1800
      %1961 = vmatprep.mubr.bf16.mxu0 %v1318
      %1962 = vmatmul.mubr.bf16.gmra.mrb[0].mxu0 %v1300
      %v1963 = vpop.f32.mrb[0].mxu0
      %v1964 = vadd.f32 0.0, %v1963
      %v1965 = vpop.f32.mrb[0].mxu0
      %v1966 = vpop.f32.mrb[0].mxu0
      %v1967 = vadd.f32 0.0, %v1966
      %v1968 = vpop.f32.mrb[0].mxu0
      %1969 = vmatprep.mubr.bf16.mxu0 %v1319
      %1970 = vmatmul.mubr.bf16.gmra.mrb[0].mxu0 %v1301
      %v1971 = vpop.f32.mrb[0].mxu0
      %v1972 = vadd.f32 0.0, %v1971
      %v1973 = vpop.f32.mrb[0].mxu0
      %v1974 = vpop.f32.mrb[0].mxu0
      %v1975 = vadd.f32 0.0, %v1974
      %v1976 = vpop.f32.mrb[0].mxu0
      %1977 = vmatprep.mubr.bf16.mxu0 %v1320
      %1978 = vmatmul.mubr.bf16.gmra.mrb[0].mxu0 %v1302
      %v1979 = vpop.f32.mrb[0].mxu0
      %v1980 = vadd.f32 0.0, %v1979
      %v1981 = vpop.f32.mrb[0].mxu0
      %v1982 = vpop.f32.mrb[0].mxu0
      %v1983 = vadd.f32 0.0, %v1982
      %v1984 = vpop.f32.mrb[0].mxu0
      %1985 = vmatprep.mubr.bf16.mxu0 %v1321
      %1986 = vmatmul.mubr.bf16.gmra.mrb[0].mxu0 %v1303
      %v1987 = vpop.f32.mrb[0].mxu0
      %v1988 = vadd.f32 0.0, %v1987
      %v1989 = vpop.f32.mrb[0].mxu0
      %v1990 = vpop.f32.mrb[0].mxu0
      %v1991 = vadd.f32 0.0, %v1990
      %v1992 = vpop.f32.mrb[0].mxu0
      %1993 = vmatprep.mubr.bf16.mxu0 %v1322
      %1994 = vmatmul.mubr.bf16.gmra.mrb[0].mxu0 %v1304
      %v1995 = vpop.f32.mrb[0].mxu0
      %v1996 = vadd.f32 0.0, %v1995
      %v1997 = vpop.f32.mrb[0].mxu0
      %v1998 = vpop.f32.mrb[0].mxu0
      %v1999 = vadd.f32 0.0, %v1998
      %v2000 = vpop.f32.mrb[0].mxu0
      %2001 = vmatprep.mubr.bf16.mxu0 %v1323
      %2002 = vmatmul.mubr.bf16.gmra.mrb[0].mxu0 %v1305
      %v2003 = vpop.f32.mrb[0].mxu0
      %v2004 = vadd.f32 0.0, %v2003
      %v2005 = vpop.f32.mrb[0].mxu0
      %v2006 = vpop.f32.mrb[0].mxu0
      %v2007 = vadd.f32 0.0, %v2006
      %v2008 = vpop.f32.mrb[0].mxu0
      %2009 = vmatprep.mubr.bf16.mxu0 %v1324
      %2010 = vmatmul.mubr.bf16.gmra.mrb[0].mxu0 %v1306
      %v2011 = vpop.f32.mrb[0].mxu0
      %v2012 = vadd.f32 0.0, %v2011
      %v2013 = vpop.f32.mrb[0].mxu0
      %v2014 = vpop.f32.mrb[0].mxu0
      %v2015 = vadd.f32 0.0, %v2014
      %v2016 = vpop.f32.mrb[0].mxu0
      %2017 = vmatprep.mubr.bf16.mxu0 %v1325
      %2018 = vmatmul.mubr.bf16.gmra.mrb[0].mxu0 %v1307
      %v2019 = vpop.f32.mrb[0].mxu0
      %v2020 = vadd.f32 0.0, %v2019
      %v2021 = vpop.f32.mrb[0].mxu0
      %v2022 = vpop.f32.mrb[0].mxu0
      %v2023 = vadd.f32 0.0, %v2022
      %v2024 = vpop.f32.mrb[0].mxu0
      %2025 = vmatprep.mubr.bf16.mxu0 %v1326
      %2026 = vmatmul.mubr.bf16.gmra.mrb[0].mxu0 %v1308
      %v2027 = vpop.f32.mrb[0].mxu0
      %v2028 = vadd.f32 0.0, %v2027
      %v2029 = vpop.f32.mrb[0].mxu0
      %v2030 = vpop.f32.mrb[0].mxu0
      %v2031 = vadd.f32 0.0, %v2030
      %v2032 = vpop.f32.mrb[0].mxu0
      %2033 = vmatprep.mubr.bf16.mxu0 %v1327
      %2034 = vmatmul.mubr.bf16.gmra.mrb[0].mxu0 %v1309
      %v2035 = vpop.f32.mrb[0].mxu0
      %v2036 = vadd.f32 0.0, %v2035
      %v2037 = vpop.f32.mrb[0].mxu0
      %v2038 = vpop.f32.mrb[0].mxu0
      %v2039 = vadd.f32 0.0, %v2038
      %v2040 = vpop.f32.mrb[0].mxu0
      %2041 = vmatprep.mubr.bf16.mxu0 %v1328
      %2042 = vmatmul.mubr.bf16.gmra.mrb[0].mxu0 %v1310
      %v2043 = vpop.f32.mrb[0].mxu0
      %v2044 = vadd.f32 0.0, %v2043
      %v2045 = vpop.f32.mrb[0].mxu0
      %v2046 = vpop.f32.mrb[0].mxu0
      %v2047 = vadd.f32 0.0, %v2046
      %v2048 = vpop.f32.mrb[0].mxu0
      %2049 = vmatprep.mubr.bf16.mxu0 %v1329
      %2050 = vmatmul.mubr.bf16.gmra.mrb[0].mxu0 %v1311
      %v2051 = vpop.f32.mrb[0].mxu0
      %v2052 = vadd.f32 0.0, %v2051
      %v2053 = vpop.f32.mrb[0].mxu0
      %v2054 = vpop.f32.mrb[0].mxu0
      %v2055 = vadd.f32 0.0, %v2054
      %v2056 = vpop.f32.mrb[0].mxu0
      %2057 = vmatprep.mubr.bf16.mxu0 %v1330
      %2058 = vmatmul.mubr.bf16.gmra.mrb[0].mxu0 %v1312
      %v2059 = vpop.f32.mrb[0].mxu0
      %v2060 = vadd.f32 0.0, %v2059
      %v2061 = vpop.f32.mrb[0].mxu0
      %v2062 = vpop.f32.mrb[0].mxu0
      %v2063 = vadd.f32 0.0, %v2062
      %v2064 = vpop.f32.mrb[0].mxu0
      %2065 = vmatprep.mubr.bf16.mxu0 %v1331
      %2066 = vmatmul.mubr.bf16.gmra.mrb[0].mxu0 %v1313
      %v2067 = vpop.f32.mrb[0].mxu0
      %v2068 = vadd.f32 0.0, %v2067
      %v2069 = vpop.f32.mrb[0].mxu0
      %v2070 = vpop.f32.mrb[0].mxu0
      %v2071 = vadd.f32 0.0, %v2070
      %v2072 = vpop.f32.mrb[0].mxu0
      %2073 = vmatprep.mubr.bf16.mxu0 %v1332
      %2074 = vmatmul.mubr.bf16.gmra.mrb[0].mxu0 %v1314
      %v2075 = vpop.f32.mrb[0].mxu0
      %v2076 = vadd.f32 0.0, %v2075
      %v2077 = vpop.f32.mrb[0].mxu0
      %v2078 = vpop.f32.mrb[0].mxu0
      %v2079 = vadd.f32 0.0, %v2078
      %v2080 = vpop.f32.mrb[0].mxu0
      %2081 = vmatprep.mubr.bf16.mxu0 %v1333
      %2082 = vmatmul.mubr.bf16.gmra.mrb[0].mxu0 %v1315
      %v2083 = vpop.f32.mrb[0].mxu0
      %v2084 = vadd.f32 0.0, %v2083
      %v2085 = vpop.f32.mrb[0].mxu0
      %v2086 = vpop.f32.mrb[0].mxu0
      %v2087 = vadd.f32 0.0, %v2086
      %v2088 = vpop.f32.mrb[0].mxu0
      %2089 = vdwg.mxu0
      %2090 = vmatprep.subr.bf16.mxu0 0
      %2091 = vmatpush1.bf16.msra.mxu0 %v1801
      %2092 = vmatprep.subr.bf16.mxu0 0
      %2093 = vmatpush1.bf16.msra.mxu0 %v1802
      %2094 = vmatprep.subr.bf16.mxu0 0
      %2095 = vmatpush1.bf16.msra.mxu0 %v1803
      %2096 = vmatprep.subr.bf16.mxu0 0
      %2097 = vmatpush1.bf16.msra.mxu0 %v1804
      %2098 = vmatprep.subr.bf16.mxu0 0
      %2099 = vmatpush1.bf16.msra.mxu0 %v1805
      %2100 = vmatprep.subr.bf16.mxu0 0
      %2101 = vmatpush1.bf16.msra.mxu0 %v1806
      %2102 = vmatprep.subr.bf16.mxu0 0
      %2103 = vmatpush1.bf16.msra.mxu0 %v1807
      %2104 = vmatprep.subr.bf16.mxu0 0
      %2105 = vmatpush1.bf16.msra.mxu0 %v1808
      %2106 = vmatprep.subr.bf16.mxu0 0
      %2107 = vmatpush1.bf16.msra.mxu0 %v1809
      %2108 = vmatprep.subr.bf16.mxu0 0
      %2109 = vmatpush1.bf16.msra.mxu0 %v1810
      %2110 = vmatprep.subr.bf16.mxu0 0
      %2111 = vmatpush1.bf16.msra.mxu0 %v1811
      %2112 = vmatprep.subr.bf16.mxu0 0
      %2113 = vmatpush1.bf16.msra.mxu0 %v1812
      %2114 = vmatprep.subr.bf16.mxu0 0
      %2115 = vmatpush1.bf16.msra.mxu0 %v1813
      %2116 = vmatprep.subr.bf16.mxu0 0
      %2117 = vmatpush1.bf16.msra.mxu0 %v1814
      %2118 = vmatprep.subr.bf16.mxu0 0
      %2119 = vmatpush1.bf16.msra.mxu0 %v1815
      %2120 = vmatprep.subr.bf16.mxu0 0
      %2121 = vmatpush1.bf16.msra.mxu0 %v1816
      %2122 = vmatprep.mubr.bf16.mxu0 %v1301
      %2123 = vmatmul.mubr.bf16.gmra.mrb[0].mxu0 %v1335
      %v2124 = vpop.f32.mrb[0].mxu0
      %v2125 = vadd.f32 %v1964, %v2124
      %v2126 = vpop.f32.mrb[0].mxu0
      %v2127 = vpop.f32.mrb[0].mxu0
      %v2128 = vadd.f32 %v1967, %v2127
      %v2129 = vpop.f32.mrb[0].mxu0
      %2130 = vmatprep.mubr.bf16.mxu0 %v1302
      %2131 = vmatmul.mubr.bf16.gmra.mrb[0].mxu0 %v1336
      %v2132 = vpop.f32.mrb[0].mxu0
      %v2133 = vadd.f32 %v1972, %v2132
      %v2134 = vpop.f32.mrb[0].mxu0
      %v2135 = vpop.f32.mrb[0].mxu0
      %v2136 = vadd.f32 %v1975, %v2135
      %v2137 = vpop.f32.mrb[0].mxu0
      %2138 = vmatprep.mubr.bf16.mxu0 %v1303
      %2139 = vmatmul.mubr.bf16.gmra.mrb[0].mxu0 %v1337
      %v2140 = vpop.f32.mrb[0].mxu0
      %v2141 = vadd.f32 %v1980, %v2140
      %v2142 = vpop.f32.mrb[0].mxu0
      %v2143 = vpop.f32.mrb[0].mxu0
      %v2144 = vadd.f32 %v1983, %v2143
      %v2145 = vpop.f32.mrb[0].mxu0
      %2146 = vmatprep.mubr.bf16.mxu0 %v1304
      %2147 = vmatmul.mubr.bf16.gmra.mrb[0].mxu0 %v1338
      %v2148 = vpop.f32.mrb[0].mxu0
      %v2149 = vadd.f32 %v1988, %v2148
      %v2150 = vpop.f32.mrb[0].mxu0
      %v2151 = vpop.f32.mrb[0].mxu0
      %v2152 = vadd.f32 %v1991, %v2151
      %v2153 = vpop.f32.mrb[0].mxu0
      %2154 = vmatprep.mubr.bf16.mxu0 %v1305
      %2155 = vmatmul.mubr.bf16.gmra.mrb[0].mxu0 %v1339
      %v2156 = vpop.f32.mrb[0].mxu0
      %v2157 = vadd.f32 %v1996, %v2156
      %v2158 = vpop.f32.mrb[0].mxu0
      %v2159 = vpop.f32.mrb[0].mxu0
      %v2160 = vadd.f32 %v1999, %v2159
      %v2161 = vpop.f32.mrb[0].mxu0
      %2162 = vmatprep.mubr.bf16.mxu0 %v1306
      %2163 = vmatmul.mubr.bf16.gmra.mrb[0].mxu0 %v1340
      %v2164 = vpop.f32.mrb[0].mxu0
      %v2165 = vadd.f32 %v2004, %v2164
      %v2166 = vpop.f32.mrb[0].mxu0
      %v2167 = vpop.f32.mrb[0].mxu0
      %v2168 = vadd.f32 %v2007, %v2167
      %v2169 = vpop.f32.mrb[0].mxu0
      %2170 = vmatprep.mubr.bf16.mxu0 %v1307
      %2171 = vmatmul.mubr.bf16.gmra.mrb[0].mxu0 %v1341
      %v2172 = vpop.f32.mrb[0].mxu0
      %v2173 = vadd.f32 %v2012, %v2172
      %v2174 = vpop.f32.mrb[0].mxu0
      %v2175 = vpop.f32.mrb[0].mxu0
      %v2176 = vadd.f32 %v2015, %v2175
      %v2177 = vpop.f32.mrb[0].mxu0
      %2178 = vmatprep.mubr.bf16.mxu0 %v1308
      %2179 = vmatmul.mubr.bf16.gmra.mrb[0].mxu0 %v1342
      %v2180 = vpop.f32.mrb[0].mxu0
      %v2181 = vadd.f32 %v2020, %v2180
      %v2182 = vpop.f32.mrb[0].mxu0
      %v2183 = vpop.f32.mrb[0].mxu0
      %v2184 = vadd.f32 %v2023, %v2183
      %v2185 = vpop.f32.mrb[0].mxu0
      %2186 = vmatprep.mubr.bf16.mxu0 %v1309
      %2187 = vmatmul.mubr.bf16.gmra.mrb[0].mxu0 %v1343
      %v2188 = vpop.f32.mrb[0].mxu0
      %v2189 = vadd.f32 %v2028, %v2188
      %v2190 = vpop.f32.mrb[0].mxu0
      %v2191 = vpop.f32.mrb[0].mxu0
      %v2192 = vadd.f32 %v2031, %v2191
      %v2193 = vpop.f32.mrb[0].mxu0
      %2194 = vmatprep.mubr.bf16.mxu0 %v1310
      %2195 = vmatmul.mubr.bf16.gmra.mrb[0].mxu0 %v1344
      %v2196 = vpop.f32.mrb[0].mxu0
      %v2197 = vadd.f32 %v2036, %v2196
      %v2198 = vpop.f32.mrb[0].mxu0
      %v2199 = vpop.f32.mrb[0].mxu0
      %v2200 = vadd.f32 %v2039, %v2199
      %v2201 = vpop.f32.mrb[0].mxu0
      %2202 = vmatprep.mubr.bf16.mxu0 %v1311
      %2203 = vmatmul.mubr.bf16.gmra.mrb[0].mxu0 %v1345
      %v2204 = vpop.f32.mrb[0].mxu0
      %v2205 = vadd.f32 %v2044, %v2204
      %v2206 = vpop.f32.mrb[0].mxu0
      %v2207 = vpop.f32.mrb[0].mxu0
      %v2208 = vadd.f32 %v2047, %v2207
      %v2209 = vpop.f32.mrb[0].mxu0
      %2210 = vmatprep.mubr.bf16.mxu0 %v1312
      %2211 = vmatmul.mubr.bf16.gmra.mrb[0].mxu0 %v1346
      %v2212 = vpop.f32.mrb[0].mxu0
      %v2213 = vadd.f32 %v2052, %v2212
      %v2214 = vpop.f32.mrb[0].mxu0
      %v2215 = vpop.f32.mrb[0].mxu0
      %v2216 = vadd.f32 %v2055, %v2215
      %v2217 = vpop.f32.mrb[0].mxu0
      %2218 = vmatprep.mubr.bf16.mxu0 %v1313
      %2219 = vmatmul.mubr.bf16.gmra.mrb[0].mxu0 %v1347
      %v2220 = vpop.f32.mrb[0].mxu0
      %v2221 = vadd.f32 %v2060, %v2220
      %v2222 = vpop.f32.mrb[0].mxu0
      %v2223 = vpop.f32.mrb[0].mxu0
      %v2224 = vadd.f32 %v2063, %v2223
      %v2225 = vpop.f32.mrb[0].mxu0
      %2226 = vmatprep.mubr.bf16.mxu0 %v1314
      %2227 = vmatmul.mubr.bf16.gmra.mrb[0].mxu0 %v1348
      %v2228 = vpop.f32.mrb[0].mxu0
      %v2229 = vadd.f32 %v2068, %v2228
      %v2230 = vpop.f32.mrb[0].mxu0
      %v2231 = vpop.f32.mrb[0].mxu0
      %v2232 = vadd.f32 %v2071, %v2231
      %v2233 = vpop.f32.mrb[0].mxu0
      %2234 = vmatprep.mubr.bf16.mxu0 %v1315
      %2235 = vmatmul.mubr.bf16.gmra.mrb[0].mxu0 %v1349
      %v2236 = vpop.f32.mrb[0].mxu0
      %v2237 = vadd.f32 %v2076, %v2236
      %v2238 = vpop.f32.mrb[0].mxu0
      %v2239 = vpop.f32.mrb[0].mxu0
      %v2240 = vadd.f32 %v2079, %v2239
      %v2241 = vpop.f32.mrb[0].mxu0
      %2242 = vmatprep.mubr.bf16.mxu0 %v1316
      %2243 = vmatmul.mubr.bf16.gmra.mrb[0].mxu0 %v1350
      %v2244 = vpop.f32.mrb[0].mxu0
      %v2245 = vadd.f32 %v2084, %v2244
      %v2246 = vpop.f32.mrb[0].mxu0
      %v2247 = vpop.f32.mrb[0].mxu0
      %v2248 = vadd.f32 %v2087, %v2247
      %v2249 = vpop.f32.mrb[0].mxu0
      %2250 = vdwg.mxu0
      %2251 = vmatprep.subr.bf16.mxu0 0
      %2252 = vmatpush1.bf16.msra.mxu0 %v1817
      %2253 = vmatprep.subr.bf16.mxu0 0
      %2254 = vmatpush1.bf16.msra.mxu0 %v1818
      %2255 = vmatprep.subr.bf16.mxu0 0
      %2256 = vmatpush1.bf16.msra.mxu0 %v1819
      %2257 = vmatprep.subr.bf16.mxu0 0
      %2258 = vmatpush1.bf16.msra.mxu0 %v1820
      %2259 = vmatprep.subr.bf16.mxu0 0
      %2260 = vmatpush1.bf16.msra.mxu0 %v1821
      %2261 = vmatprep.subr.bf16.mxu0 0
      %2262 = vmatpush1.bf16.msra.mxu0 %v1822
      %2263 = vmatprep.subr.bf16.mxu0 0
      %2264 = vmatpush1.bf16.msra.mxu0 %v1823
      %2265 = vmatprep.subr.bf16.mxu0 0
      %2266 = vmatpush1.bf16.msra.mxu0 %v1824
      %2267 = vmatprep.subr.bf16.mxu0 0
      %2268 = vmatpush1.bf16.msra.mxu0 %v1825
      %2269 = vmatprep.subr.bf16.mxu0 0
      %2270 = vmatpush1.bf16.msra.mxu0 %v1826
      %2271 = vmatprep.subr.bf16.mxu0 0
      %2272 = vmatpush1.bf16.msra.mxu0 %v1827
      %2273 = vmatprep.subr.bf16.mxu0 0
      %2274 = vmatpush1.bf16.msra.mxu0 %v1828
      %2275 = vmatprep.subr.bf16.mxu0 0
      %2276 = vmatpush1.bf16.msra.mxu0 %v1829
      %2277 = vmatprep.subr.bf16.mxu0 0
      %2278 = vmatpush1.bf16.msra.mxu0 %v1830
      %2279 = vmatprep.subr.bf16.mxu0 0
      %2280 = vmatpush1.bf16.msra.mxu0 %v1831
      %2281 = vmatprep.subr.bf16.mxu0 0
      %2282 = vmatpush1.bf16.msra.mxu0 %v1832
      %2283 = vmatprep.mubr.bf16.mxu0 %v1336
      %2284 = vmatmul.mubr.bf16.gmra.mrb[0].mxu0 %v1319
      %v2285 = vpop.f32.mrb[0].mxu0
      %v2286 = vadd.f32 %v2125, %v2285
      %v2287 = vpop.f32.mrb[0].mxu0
      %v2288 = vpop.f32.mrb[0].mxu0
      %v2289 = vadd.f32 %v2128, %v2288
      %v2290 = vpop.f32.mrb[0].mxu0
      %2291 = vmatprep.mubr.bf16.mxu0 %v1337
      %2292 = vmatmul.mubr.bf16.gmra.mrb[0].mxu0 %v1320
      %v2293 = vpop.f32.mrb[0].mxu0
      %v2294 = vadd.f32 %v2133, %v2293
      %v2295 = vpop.f32.mrb[0].mxu0
      %v2296 = vpop.f32.mrb[0].mxu0
      %v2297 = vadd.f32 %v2136, %v2296
      %v2298 = vpop.f32.mrb[0].mxu0
      %2299 = vmatprep.mubr.bf16.mxu0 %v1338
      %2300 = vmatmul.mubr.bf16.gmra.mrb[0].mxu0 %v1321
      %v2301 = vpop.f32.mrb[0].mxu0
      %v2302 = vadd.f32 %v2141, %v2301
      %v2303 = vpop.f32.mrb[0].mxu0
      %v2304 = vpop.f32.mrb[0].mxu0
      %v2305 = vadd.f32 %v2144, %v2304
      %v2306 = vpop.f32.mrb[0].mxu0
      %2307 = vmatprep.mubr.bf16.mxu0 %v1339
      %2308 = vmatmul.mubr.bf16.gmra.mrb[0].mxu0 %v1322
      %v2309 = vpop.f32.mrb[0].mxu0
      %v2310 = vadd.f32 %v2149, %v2309
      %v2311 = vpop.f32.mrb[0].mxu0
      %v2312 = vpop.f32.mrb[0].mxu0
      %v2313 = vadd.f32 %v2152, %v2312
      %v2314 = vpop.f32.mrb[0].mxu0
      %2315 = vmatprep.mubr.bf16.mxu0 %v1340
      %2316 = vmatmul.mubr.bf16.gmra.mrb[0].mxu0 %v1323
      %v2317 = vpop.f32.mrb[0].mxu0
      %v2318 = vadd.f32 %v2157, %v2317
      %v2319 = vpop.f32.mrb[0].mxu0
      %v2320 = vpop.f32.mrb[0].mxu0
      %v2321 = vadd.f32 %v2160, %v2320
      %v2322 = vpop.f32.mrb[0].mxu0
      %2323 = vmatprep.mubr.bf16.mxu0 %v1341
      %2324 = vmatmul.mubr.bf16.gmra.mrb[0].mxu0 %v1324
      %v2325 = vpop.f32.mrb[0].mxu0
      %v2326 = vadd.f32 %v2165, %v2325
      %v2327 = vpop.f32.mrb[0].mxu0
      %v2328 = vpop.f32.mrb[0].mxu0
      %v2329 = vadd.f32 %v2168, %v2328
      %v2330 = vpop.f32.mrb[0].mxu0
      %2331 = vmatprep.mubr.bf16.mxu0 %v1342
      %2332 = vmatmul.mubr.bf16.gmra.mrb[0].mxu0 %v1325
      %v2333 = vpop.f32.mrb[0].mxu0
      %v2334 = vadd.f32 %v2173, %v2333
      %v2335 = vpop.f32.mrb[0].mxu0
      %v2336 = vpop.f32.mrb[0].mxu0
      %v2337 = vadd.f32 %v2176, %v2336
      %v2338 = vpop.f32.mrb[0].mxu0
      %2339 = vmatprep.mubr.bf16.mxu0 %v1343
      %2340 = vmatmul.mubr.bf16.gmra.mrb[0].mxu0 %v1326
      %v2341 = vpop.f32.mrb[0].mxu0
      %v2342 = vadd.f32 %v2181, %v2341
      %v2343 = vpop.f32.mrb[0].mxu0
      %v2344 = vpop.f32.mrb[0].mxu0
      %v2345 = vadd.f32 %v2184, %v2344
      %v2346 = vpop.f32.mrb[0].mxu0
      %2347 = vmatprep.mubr.bf16.mxu0 %v1344
      %2348 = vmatmul.mubr.bf16.gmra.mrb[0].mxu0 %v1327
      %v2349 = vpop.f32.mrb[0].mxu0
      %v2350 = vadd.f32 %v2189, %v2349
      %v2351 = vpop.f32.mrb[0].mxu0
      %v2352 = vpop.f32.mrb[0].mxu0
      %v2353 = vadd.f32 %v2192, %v2352
      %v2354 = vpop.f32.mrb[0].mxu0
      %2355 = vmatprep.mubr.bf16.mxu0 %v1345
      %2356 = vmatmul.mubr.bf16.gmra.mrb[0].mxu0 %v1328
      %v2357 = vpop.f32.mrb[0].mxu0
      %v2358 = vadd.f32 %v2197, %v2357
      %v2359 = vpop.f32.mrb[0].mxu0
      %v2360 = vpop.f32.mrb[0].mxu0
      %v2361 = vadd.f32 %v2200, %v2360
      %v2362 = vpop.f32.mrb[0].mxu0
      %2363 = vmatprep.mubr.bf16.mxu0 %v1346
      %2364 = vmatmul.mubr.bf16.gmra.mrb[0].mxu0 %v1329
      %v2365 = vpop.f32.mrb[0].mxu0
      %v2366 = vadd.f32 %v2205, %v2365
      %v2367 = vpop.f32.mrb[0].mxu0
      %v2368 = vpop.f32.mrb[0].mxu0
      %v2369 = vadd.f32 %v2208, %v2368
      %v2370 = vpop.f32.mrb[0].mxu0
      %2371 = vmatprep.mubr.bf16.mxu0 %v1347
      %2372 = vmatmul.mubr.bf16.gmra.mrb[0].mxu0 %v1330
      %v2373 = vpop.f32.mrb[0].mxu0
      %v2374 = vadd.f32 %v2213, %v2373
      %v2375 = vpop.f32.mrb[0].mxu0
      %v2376 = vpop.f32.mrb[0].mxu0
      %v2377 = vadd.f32 %v2216, %v2376
      %v2378 = vpop.f32.mrb[0].mxu0
      %2379 = vmatprep.mubr.bf16.mxu0 %v1348
      %2380 = vmatmul.mubr.bf16.gmra.mrb[0].mxu0 %v1331
      %v2381 = vpop.f32.mrb[0].mxu0
      %v2382 = vadd.f32 %v2221, %v2381
      %v2383 = vpop.f32.mrb[0].mxu0
      %v2384 = vpop.f32.mrb[0].mxu0
      %v2385 = vadd.f32 %v2224, %v2384
      %v2386 = vpop.f32.mrb[0].mxu0
      %2387 = vmatprep.mubr.bf16.mxu0 %v1349
      %2388 = vmatmul.mubr.bf16.gmra.mrb[0].mxu0 %v1332
      %v2389 = vpop.f32.mrb[0].mxu0
      %v2390 = vadd.f32 %v2229, %v2389
      %v2391 = vpop.f32.mrb[0].mxu0
      %v2392 = vpop.f32.mrb[0].mxu0
      %v2393 = vadd.f32 %v2232, %v2392
      %v2394 = vpop.f32.mrb[0].mxu0
      %2395 = vmatprep.mubr.bf16.mxu0 %v1350
      %2396 = vmatmul.mubr.bf16.gmra.mrb[0].mxu0 %v1333
      %v2397 = vpop.f32.mrb[0].mxu0
      %v2398 = vadd.f32 %v2237, %v2397
      %v2399 = vpop.f32.mrb[0].mxu0
      %v2400 = vpop.f32.mrb[0].mxu0
      %v2401 = vadd.f32 %v2240, %v2400
      %v2402 = vpop.f32.mrb[0].mxu0
      %2403 = vmatprep.mubr.bf16.mxu0 %v1351
      %2404 = vmatmul.mubr.bf16.gmra.mrb[0].mxu0 %v1334
      %v2405 = vpop.f32.mrb[0].mxu0
      %v2406 = vadd.f32 %v2245, %v2405
      %v2407 = vpop.f32.mrb[0].mxu0
      %v2408 = vpop.f32.mrb[0].mxu0
      %v2409 = vadd.f32 %v2248, %v2408
      %v2410 = vpop.f32.mrb[0].mxu0
      %2411 = vdwg.mxu0
      %2412 = vmatprep.subr.bf16.mxu0 0
      %2413 = vmatpush1.bf16.msra.mxu0 %v1833
      %2414 = vmatprep.subr.bf16.mxu0 0
      %2415 = vmatpush1.bf16.msra.mxu0 %v1834
      %2416 = vmatprep.subr.bf16.mxu0 0
      %2417 = vmatpush1.bf16.msra.mxu0 %v1835
      %2418 = vmatprep.subr.bf16.mxu0 0
      %2419 = vmatpush1.bf16.msra.mxu0 %v1836
      %2420 = vmatprep.subr.bf16.mxu0 0
      %2421 = vmatpush1.bf16.msra.mxu0 %v1837
      %2422 = vmatprep.subr.bf16.mxu0 0
      %2423 = vmatpush1.bf16.msra.mxu0 %v1838
      %2424 = vmatprep.subr.bf16.mxu0 0
      %2425 = vmatpush1.bf16.msra.mxu0 %v1839
      %2426 = vmatprep.subr.bf16.mxu0 0
      %2427 = vmatpush1.bf16.msra.mxu0 %v1840
      %2428 = vmatprep.subr.bf16.mxu0 0
      %2429 = vmatpush1.bf16.msra.mxu0 %v1841
      %2430 = vmatprep.subr.bf16.mxu0 0
      %2431 = vmatpush1.bf16.msra.mxu0 %v1842
      %2432 = vmatprep.subr.bf16.mxu0 0
      %2433 = vmatpush1.bf16.msra.mxu0 %v1843
      %2434 = vmatprep.subr.bf16.mxu0 0
      %2435 = vmatpush1.bf16.msra.mxu0 %v1844
      %2436 = vmatprep.subr.bf16.mxu0 0
      %2437 = vmatpush1.bf16.msra.mxu0 %v1845
      %2438 = vmatprep.subr.bf16.mxu0 0
      %2439 = vmatpush1.bf16.msra.mxu0 %v1846
      %2440 = vmatprep.subr.bf16.mxu0 0
      %2441 = vmatpush1.bf16.msra.mxu0 %v1847
      %2442 = vmatprep.subr.bf16.mxu0 0
      %2443 = vmatpush1.bf16.msra.mxu0 %v1848
      %2444 = vmatprep.mubr.bf16.mxu0 %v1320
      %2445 = vmatmul.mubr.bf16.gmra.mrb[0].mxu0 %v1302
      %v2446 = vpop.f32.mrb[0].mxu0
      %v2447 = vadd.f32 %v2286, %v2446
      %v2448 = vpop.f32.mrb[0].mxu0
      %v2449 = vpop.f32.mrb[0].mxu0
      %v2450 = vadd.f32 %v2289, %v2449
      %v2451 = vpop.f32.mrb[0].mxu0
      %2452 = vmatprep.mubr.bf16.mxu0 %v1321
      %2453 = vmatmul.mubr.bf16.gmra.mrb[0].mxu0 %v1303
      %v2454 = vpop.f32.mrb[0].mxu0
      %v2455 = vadd.f32 %v2294, %v2454
      %v2456 = vpop.f32.mrb[0].mxu0
      %v2457 = vpop.f32.mrb[0].mxu0
      %v2458 = vadd.f32 %v2297, %v2457
      %v2459 = vpop.f32.mrb[0].mxu0
      %2460 = vmatprep.mubr.bf16.mxu0 %v1322
      %2461 = vmatmul.mubr.bf16.gmra.mrb[0].mxu0 %v1304
      %v2462 = vpop.f32.mrb[0].mxu0
      %v2463 = vadd.f32 %v2302, %v2462
      %v2464 = vpop.f32.mrb[0].mxu0
      %v2465 = vpop.f32.mrb[0].mxu0
      %v2466 = vadd.f32 %v2305, %v2465
      %v2467 = vpop.f32.mrb[0].mxu0
      %2468 = vmatprep.mubr.bf16.mxu0 %v1323
      %2469 = vmatmul.mubr.bf16.gmra.mrb[0].mxu0 %v1305
      %v2470 = vpop.f32.mrb[0].mxu0
      %v2471 = vadd.f32 %v2310, %v2470
      %v2472 = vpop.f32.mrb[0].mxu0
      %v2473 = vpop.f32.mrb[0].mxu0
      %v2474 = vadd.f32 %v2313, %v2473
      %v2475 = vpop.f32.mrb[0].mxu0
      %2476 = vmatprep.mubr.bf16.mxu0 %v1324
      %2477 = vmatmul.mubr.bf16.gmra.mrb[0].mxu0 %v1306
      %v2478 = vpop.f32.mrb[0].mxu0
      %v2479 = vadd.f32 %v2318, %v2478
      %v2480 = vpop.f32.mrb[0].mxu0
      %v2481 = vpop.f32.mrb[0].mxu0
      %v2482 = vadd.f32 %v2321, %v2481
      %v2483 = vpop.f32.mrb[0].mxu0
      %2484 = vmatprep.mubr.bf16.mxu0 %v1325
      %2485 = vmatmul.mubr.bf16.gmra.mrb[0].mxu0 %v1307
      %v2486 = vpop.f32.mrb[0].mxu0
      %v2487 = vadd.f32 %v2326, %v2486
      %v2488 = vpop.f32.mrb[0].mxu0
      %v2489 = vpop.f32.mrb[0].mxu0
      %v2490 = vadd.f32 %v2329, %v2489
      %v2491 = vpop.f32.mrb[0].mxu0
      %2492 = vmatprep.mubr.bf16.mxu0 %v1326
      %2493 = vmatmul.mubr.bf16.gmra.mrb[0].mxu0 %v1308
      %v2494 = vpop.f32.mrb[0].mxu0
      %v2495 = vadd.f32 %v2334, %v2494
      %v2496 = vpop.f32.mrb[0].mxu0
      %v2497 = vpop.f32.mrb[0].mxu0
      %v2498 = vadd.f32 %v2337, %v2497
      %v2499 = vpop.f32.mrb[0].mxu0
      %2500 = vmatprep.mubr.bf16.mxu0 %v1327
      %2501 = vmatmul.mubr.bf16.gmra.mrb[0].mxu0 %v1309
      %v2502 = vpop.f32.mrb[0].mxu0
      %v2503 = vadd.f32 %v2342, %v2502
      %v2504 = vpop.f32.mrb[0].mxu0
      %v2505 = vpop.f32.mrb[0].mxu0
      %v2506 = vadd.f32 %v2345, %v2505
      %v2507 = vpop.f32.mrb[0].mxu0
      %2508 = vmatprep.mubr.bf16.mxu0 %v1328
      %2509 = vmatmul.mubr.bf16.gmra.mrb[0].mxu0 %v1310
      %v2510 = vpop.f32.mrb[0].mxu0
      %v2511 = vadd.f32 %v2350, %v2510
      %v2512 = vpop.f32.mrb[0].mxu0
      %v2513 = vpop.f32.mrb[0].mxu0
      %v2514 = vadd.f32 %v2353, %v2513
      %v2515 = vpop.f32.mrb[0].mxu0
      %2516 = vmatprep.mubr.bf16.mxu0 %v1329
      %2517 = vmatmul.mubr.bf16.gmra.mrb[0].mxu0 %v1311
      %v2518 = vpop.f32.mrb[0].mxu0
      %v2519 = vadd.f32 %v2358, %v2518
      %v2520 = vpop.f32.mrb[0].mxu0
      %v2521 = vpop.f32.mrb[0].mxu0
      %v2522 = vadd.f32 %v2361, %v2521
      %v2523 = vpop.f32.mrb[0].mxu0
      %2524 = vmatprep.mubr.bf16.mxu0 %v1330
      %2525 = vmatmul.mubr.bf16.gmra.mrb[0].mxu0 %v1312
      %v2526 = vpop.f32.mrb[0].mxu0
      %v2527 = vadd.f32 %v2366, %v2526
      %v2528 = vpop.f32.mrb[0].mxu0
      %v2529 = vpop.f32.mrb[0].mxu0
      %v2530 = vadd.f32 %v2369, %v2529
      %v2531 = vpop.f32.mrb[0].mxu0
      %2532 = vmatprep.mubr.bf16.mxu0 %v1331
      %2533 = vmatmul.mubr.bf16.gmra.mrb[0].mxu0 %v1313
      %v2534 = vpop.f32.mrb[0].mxu0
      %v2535 = vadd.f32 %v2374, %v2534
      %v2536 = vpop.f32.mrb[0].mxu0
      %v2537 = vpop.f32.mrb[0].mxu0
      %v2538 = vadd.f32 %v2377, %v2537
      %v2539 = vpop.f32.mrb[0].mxu0
      %2540 = vmatprep.mubr.bf16.mxu0 %v1332
      %2541 = vmatmul.mubr.bf16.gmra.mrb[0].mxu0 %v1314
      %v2542 = vpop.f32.mrb[0].mxu0
      %v2543 = vadd.f32 %v2382, %v2542
      %v2544 = vpop.f32.mrb[0].mxu0
      %v2545 = vpop.f32.mrb[0].mxu0
      %v2546 = vadd.f32 %v2385, %v2545
      %v2547 = vpop.f32.mrb[0].mxu0
      %2548 = vmatprep.mubr.bf16.mxu0 %v1333
      %2549 = vmatmul.mubr.bf16.gmra.mrb[0].mxu0 %v1315
      %v2550 = vpop.f32.mrb[0].mxu0
      %v2551 = vadd.f32 %v2390, %v2550
      %v2552 = vpop.f32.mrb[0].mxu0
      %v2553 = vpop.f32.mrb[0].mxu0
      %v2554 = vadd.f32 %v2393, %v2553
      %v2555 = vpop.f32.mrb[0].mxu0
      %2556 = vmatprep.mubr.bf16.mxu0 %v1334
      %2557 = vmatmul.mubr.bf16.gmra.mrb[0].mxu0 %v1316
      %v2558 = vpop.f32.mrb[0].mxu0
      %v2559 = vadd.f32 %v2398, %v2558
      %v2560 = vpop.f32.mrb[0].mxu0
      %v2561 = vpop.f32.mrb[0].mxu0
      %v2562 = vadd.f32 %v2401, %v2561
      %v2563 = vpop.f32.mrb[0].mxu0
      %2564 = vmatprep.mubr.bf16.mxu0 %v1318
      %2565 = vmatmul.mubr.bf16.gmra.mrb[0].mxu0 %v1317
      %v2566 = vpop.f32.mrb[0].mxu0
      %v2567 = vadd.f32 %v2406, %v2566
      %v2568 = vpop.f32.mrb[0].mxu0
      %v2569 = vpop.f32.mrb[0].mxu0
      %v2570 = vadd.f32 %v2409, %v2569
      %v2571 = vpop.f32.mrb[0].mxu0
      %2572 = vdwg.mxu0
      %2573 = vmatprep.subr.bf16.mxu0 0
      %2574 = vmatpush1.bf16.msra.mxu0 %v1849
      %2575 = vmatprep.subr.bf16.mxu0 0
      %2576 = vmatpush1.bf16.msra.mxu0 %v1850
      %2577 = vmatprep.subr.bf16.mxu0 0
      %2578 = vmatpush1.bf16.msra.mxu0 %v1851
      %2579 = vmatprep.subr.bf16.mxu0 0
      %2580 = vmatpush1.bf16.msra.mxu0 %v1852
      %2581 = vmatprep.subr.bf16.mxu0 0
      %2582 = vmatpush1.bf16.msra.mxu0 %v1853
      %2583 = vmatprep.subr.bf16.mxu0 0
      %2584 = vmatpush1.bf16.msra.mxu0 %v1854
      %2585 = vmatprep.subr.bf16.mxu0 0
      %2586 = vmatpush1.bf16.msra.mxu0 %v1855
      %2587 = vmatprep.subr.bf16.mxu0 0
      %2588 = vmatpush1.bf16.msra.mxu0 %v1856
      %2589 = vmatprep.subr.bf16.mxu0 0
      %2590 = vmatpush1.bf16.msra.mxu0 0
      %2591 = vmatprep.subr.bf16.mxu0 0
      %2592 = vmatpush1.bf16.msra.mxu0 0
      %2593 = vmatprep.subr.bf16.mxu0 0
      %2594 = vmatpush1.bf16.msra.mxu0 0
      %2595 = vmatprep.subr.bf16.mxu0 0
      %2596 = vmatpush1.bf16.msra.mxu0 0
      %2597 = vmatprep.subr.bf16.mxu0 0
      %2598 = vmatpush1.bf16.msra.mxu0 0
      %2599 = vmatprep.subr.bf16.mxu0 0
      %2600 = vmatpush1.bf16.msra.mxu0 0
      %2601 = vmatprep.subr.bf16.mxu0 0
      %2602 = vmatpush1.bf16.msra.mxu0 0
      %2603 = vmatprep.subr.bf16.mxu0 0
      %2604 = vmatpush1.bf16.msra.mxu0 0
      %2605 = vmatprep.mubr.bf16.mxu0 0
      %2606 = vmatmul.mubr.bf16.gmra.mrb[0].mxu0 %v1337
      %v2607 = vpop.f32.mrb[0].mxu0
      %v2608 = vadd.f32 %v2447, %v2607
      %v2609 = vpop.f32.mrb[0].mxu0
      %v2610 = vpop.f32.mrb[0].mxu0
      %v2611 = vadd.f32 %v2450, %v2610
      %v2612 = vpop.f32.mrb[0].mxu0
      %2613 = vmatprep.mubr.bf16.mxu0 0
      %2614 = vmatmul.mubr.bf16.gmra.mrb[0].mxu0 %v1338
      %v2615 = vpop.f32.mrb[0].mxu0
      %v2616 = vadd.f32 %v2455, %v2615
      %v2617 = vpop.f32.mrb[0].mxu0
      %v2618 = vpop.f32.mrb[0].mxu0
      %v2619 = vadd.f32 %v2458, %v2618
      %v2620 = vpop.f32.mrb[0].mxu0
      %2621 = vmatprep.mubr.bf16.mxu0 0
      %2622 = vmatmul.mubr.bf16.gmra.mrb[0].mxu0 %v1339
      %v2623 = vpop.f32.mrb[0].mxu0
      %v2624 = vadd.f32 %v2463, %v2623
      %v2625 = vpop.f32.mrb[0].mxu0
      %v2626 = vpop.f32.mrb[0].mxu0
      %v2627 = vadd.f32 %v2466, %v2626
      %v2628 = vpop.f32.mrb[0].mxu0
      %2629 = vmatprep.mubr.bf16.mxu0 0
      %2630 = vmatmul.mubr.bf16.gmra.mrb[0].mxu0 %v1340
      %v2631 = vpop.f32.mrb[0].mxu0
      %v2632 = vadd.f32 %v2471, %v2631
      %v2633 = vpop.f32.mrb[0].mxu0
      %v2634 = vpop.f32.mrb[0].mxu0
      %v2635 = vadd.f32 %v2474, %v2634
      %v2636 = vpop.f32.mrb[0].mxu0
      %2637 = vmatprep.mubr.bf16.mxu0 0
      %2638 = vmatmul.mubr.bf16.gmra.mrb[0].mxu0 %v1341
      %v2639 = vpop.f32.mrb[0].mxu0
      %v2640 = vadd.f32 %v2479, %v2639
      %v2641 = vpop.f32.mrb[0].mxu0
      %v2642 = vpop.f32.mrb[0].mxu0
      %v2643 = vadd.f32 %v2482, %v2642
      %v2644 = vpop.f32.mrb[0].mxu0
      %2645 = vmatprep.mubr.bf16.mxu0 0
      %2646 = vmatmul.mubr.bf16.gmra.mrb[0].mxu0 %v1342
      %v2647 = vpop.f32.mrb[0].mxu0
      %v2648 = vadd.f32 %v2487, %v2647
      %v2649 = vpop.f32.mrb[0].mxu0
      %v2650 = vpop.f32.mrb[0].mxu0
      %v2651 = vadd.f32 %v2490, %v2650
      %v2652 = vpop.f32.mrb[0].mxu0
      %2653 = vmatprep.mubr.bf16.mxu0 0
      %2654 = vmatmul.mubr.bf16.gmra.mrb[0].mxu0 %v1343
      %v2655 = vpop.f32.mrb[0].mxu0
      %v2656 = vadd.f32 %v2495, %v2655
      %v2657 = vpop.f32.mrb[0].mxu0
      %v2658 = vpop.f32.mrb[0].mxu0
      %v2659 = vadd.f32 %v2498, %v2658
      %v2660 = vpop.f32.mrb[0].mxu0
      %2661 = vmatprep.mubr.bf16.mxu0 0
      %2662 = vmatmul.mubr.bf16.gmra.mrb[0].mxu0 %v1344
      %v2663 = vpop.f32.mrb[0].mxu0
      %v2664 = vadd.f32 %v2503, %v2663
      %v2665 = vpop.f32.mrb[0].mxu0
      %v2666 = vpop.f32.mrb[0].mxu0
      %v2667 = vadd.f32 %v2506, %v2666
      %v2668 = vpop.f32.mrb[0].mxu0
      %2669 = vmatprep.mubr.bf16.mxu0 0
      %2670 = vmatmul.mubr.bf16.gmra.mrb[0].mxu0 %v1345
      %v2671 = vpop.f32.mrb[0].mxu0
      %v2672 = vadd.f32 %v2511, %v2671
      %v2673 = vpop.f32.mrb[0].mxu0
      %v2674 = vpop.f32.mrb[0].mxu0
      %v2675 = vadd.f32 %v2514, %v2674
      %v2676 = vpop.f32.mrb[0].mxu0
      %2677 = vmatprep.mubr.bf16.mxu0 0
      %2678 = vmatmul.mubr.bf16.gmra.mrb[0].mxu0 %v1346
      %v2679 = vpop.f32.mrb[0].mxu0
      %v2680 = vadd.f32 %v2519, %v2679
      %v2681 = vpop.f32.mrb[0].mxu0
      %v2682 = vpop.f32.mrb[0].mxu0
      %v2683 = vadd.f32 %v2522, %v2682
      %v2684 = vpop.f32.mrb[0].mxu0
      %2685 = vmatprep.mubr.bf16.mxu0 0
      %2686 = vmatmul.mubr.bf16.gmra.mrb[0].mxu0 %v1347
      %v2687 = vpop.f32.mrb[0].mxu0
      %v2688 = vadd.f32 %v2527, %v2687
      %v2689 = vpop.f32.mrb[0].mxu0
      %v2690 = vpop.f32.mrb[0].mxu0
      %v2691 = vadd.f32 %v2530, %v2690
      %v2692 = vpop.f32.mrb[0].mxu0
      %2693 = vmatprep.mubr.bf16.mxu0 0
      %2694 = vmatmul.mubr.bf16.gmra.mrb[0].mxu0 %v1348
      %v2695 = vpop.f32.mrb[0].mxu0
      %v2696 = vadd.f32 %v2535, %v2695
      %v2697 = vpop.f32.mrb[0].mxu0
      %v2698 = vpop.f32.mrb[0].mxu0
      %v2699 = vadd.f32 %v2538, %v2698
      %v2700 = vpop.f32.mrb[0].mxu0
      %2701 = vmatprep.mubr.bf16.mxu0 0
      %2702 = vmatmul.mubr.bf16.gmra.mrb[0].mxu0 %v1349
      %v2703 = vpop.f32.mrb[0].mxu0
      %v2704 = vadd.f32 %v2543, %v2703
      %v2705 = vpop.f32.mrb[0].mxu0
      %v2706 = vpop.f32.mrb[0].mxu0
      %v2707 = vadd.f32 %v2546, %v2706
      %v2708 = vpop.f32.mrb[0].mxu0
      %2709 = vmatprep.mubr.bf16.mxu0 0
      %2710 = vmatmul.mubr.bf16.gmra.mrb[0].mxu0 %v1350
      %v2711 = vpop.f32.mrb[0].mxu0
      %v2712 = vadd.f32 %v2551, %v2711
      %v2713 = vpop.f32.mrb[0].mxu0
      %v2714 = vpop.f32.mrb[0].mxu0
      %v2715 = vadd.f32 %v2554, %v2714
      %v2716 = vpop.f32.mrb[0].mxu0
      %2717 = vmatprep.mubr.bf16.mxu0 0
      %2718 = vmatmul.mubr.bf16.gmra.mrb[0].mxu0 %v1351
      %v2719 = vpop.f32.mrb[0].mxu0
      %v2720 = vadd.f32 %v2559, %v2719
      %v2721 = vpop.f32.mrb[0].mxu0
      %v2722 = vpop.f32.mrb[0].mxu0
      %v2723 = vadd.f32 %v2562, %v2722
      %v2724 = vpop.f32.mrb[0].mxu0
      %2725 = vmatprep.mubr.bf16.mxu0 0
      %2726 = vmatmul.mubr.bf16.gmra.mrb[0].mxu0 %v1352
      %v2727 = vpop.f32.mrb[0].mxu0
      %v2728 = vadd.f32 %v2567, %v2727
      %v2729 = vpop.f32.mrb[0].mxu0
      %v2730 = vpop.f32.mrb[0].mxu0
      %v2731 = vadd.f32 %v2570, %v2730
      %v2732 = vpop.f32.mrb[0].mxu0
      %2733 = vdwg.mxu0
      %v2734 = vpack.c.bf16 %v2611, %v2608
      %v2735 = vpack.c.bf16 %v2619, %v2616
      %v2736 = vpack.c.bf16 %v2627, %v2624
      %v2737 = vpack.c.bf16 %v2635, %v2632
      %v2738 = vpack.c.bf16 %v2643, %v2640
      %v2739 = vpack.c.bf16 %v2651, %v2648
      %v2740 = vpack.c.bf16 %v2659, %v2656
      %v2741 = vpack.c.bf16 %v2667, %v2664
      %v2742 = vpack.c.bf16 %v2675, %v2672
      %v2743 = vpack.c.bf16 %v2683, %v2680
      %v2744 = vpack.c.bf16 %v2691, %v2688
      %v2745 = vpack.c.bf16 %v2699, %v2696
      %v2746 = vpack.c.bf16 %v2707, %v2704
      %v2747 = vpack.c.bf16 %v2715, %v2712
      %v2748 = vpack.c.bf16 %v2723, %v2720
      %v2749 = vpack.c.bf16 %v2731, %v2728
      %v2766 = vunpack.c.l.b16 %v2734
      %v2767 = vunpack.c.h.b16 %v2734
      %v2768 = vunpack.c.l.b16 %v2735
      %v2769 = vunpack.c.h.b16 %v2735
      %v2770 = vunpack.c.l.b16 %v2736
      %v2771 = vunpack.c.h.b16 %v2736
      %v2772 = vunpack.c.l.b16 %v2737
      %v2773 = vunpack.c.h.b16 %v2737
      %v2774 = vunpack.c.l.b16 %v2738
      %v2775 = vunpack.c.h.b16 %v2738
      %v2776 = vunpack.c.l.b16 %v2739
      %v2777 = vunpack.c.h.b16 %v2739
      %v2778 = vunpack.c.l.b16 %v2740
      %v2779 = vunpack.c.h.b16 %v2740
      %v2780 = vunpack.c.l.b16 %v2741
      %v2781 = vunpack.c.h.b16 %v2741
      %v2782 = vunpack.c.l.b16 %v2742
      %v2783 = vunpack.c.h.b16 %v2742
      %v2784 = vunpack.c.l.b16 %v2743
      %v2785 = vunpack.c.h.b16 %v2743
      %v2786 = vunpack.c.l.b16 %v2744
      %v2787 = vunpack.c.h.b16 %v2744
      %v2788 = vunpack.c.l.b16 %v2745
      %v2789 = vunpack.c.h.b16 %v2745
      %v2790 = vunpack.c.l.b16 %v2746
      %v2791 = vunpack.c.h.b16 %v2746
      %v2792 = vunpack.c.l.b16 %v2747
      %v2793 = vunpack.c.h.b16 %v2747
      %v2794 = vunpack.c.l.b16 %v2748
      %v2795 = vunpack.c.h.b16 %v2748
      %v2796 = vunpack.c.l.b16 %v2749
      %v2797 = vunpack.c.h.b16 %v2749
      %v2798 = vpack.c.b16 %v2766, %v2766
      %v2799 = vpack.c.b16 %v2767, %v2767
      %v2800 = vpack.c.b16 %v2768, %v2768
      %v2801 = vpack.c.b16 %v2769, %v2769
      %v2802 = vpack.c.b16 %v2770, %v2770
      %v2803 = vpack.c.b16 %v2771, %v2771
      %v2804 = vpack.c.b16 %v2772, %v2772
      %v2805 = vpack.c.b16 %v2773, %v2773
      %v2806 = vpack.c.b16 %v2774, %v2774
      %v2807 = vpack.c.b16 %v2775, %v2775
      %v2808 = vpack.c.b16 %v2776, %v2776
      %v2809 = vpack.c.b16 %v2777, %v2777
      %v2810 = vpack.c.b16 %v2778, %v2778
      %v2811 = vpack.c.b16 %v2779, %v2779
      %v2812 = vpack.c.b16 %v2780, %v2780
      %v2813 = vpack.c.b16 %v2781, %v2781
      %v2814 = vpack.c.b16 %v2782, %v2782
      %v2815 = vpack.c.b16 %v2783, %v2783
      %v2816 = vpack.c.b16 %v2784, %v2784
      %v2817 = vpack.c.b16 %v2785, %v2785
      %v2818 = vpack.c.b16 %v2786, %v2786
      %v2819 = vpack.c.b16 %v2787, %v2787
      %v2820 = vpack.c.b16 %v2788, %v2788
      %v2821 = vpack.c.b16 %v2789, %v2789
      %v2822 = vpack.c.b16 %v2790, %v2790
      %v2823 = vpack.c.b16 %v2791, %v2791
      %v2824 = vpack.c.b16 %v2792, %v2792
      %v2825 = vpack.c.b16 %v2793, %v2793
      %v2826 = vpack.c.b16 %v2794, %v2794
      %v2827 = vpack.c.b16 %v2795, %v2795
      %v2828 = vpack.c.b16 %v2796, %v2796
      %v2829 = vpack.c.b16 %v2797, %v2797
      %2862 = vst [vmem:[%s231] sm:$0xf] %v2798
      %2863 = vst [vmem:[%s231 + $0x4] sm:$0xf] %v2799
      %2864 = vst [vmem:[%s231 + $0x8] sm:$0xf] %v2800
      %2865 = vst [vmem:[%s231 + $0xc] sm:$0xf] %v2801
      %2866 = vst [vmem:[%s231 + $0x10] sm:$0xf] %v2802
      %2867 = vst [vmem:[%s231 + $0x14] sm:$0xf] %v2803
      %2868 = vst [vmem:[%s231 + $0x18] sm:$0xf] %v2804
      %2869 = vst [vmem:[%s231 + $0x1c] sm:$0xf] %v2805
      %2870 = vst [vmem:[%s231 + $0x20] sm:$0xf] %v2806
      %2871 = vst [vmem:[%s231 + $0x24] sm:$0xf] %v2807
      %2872 = vst [vmem:[%s231 + $0x28] sm:$0xf] %v2808
      %2873 = vst [vmem:[%s231 + $0x2c] sm:$0xf] %v2809
      %2874 = vst [vmem:[%s231 + $0x30] sm:$0xf] %v2810
      %2875 = vst [vmem:[%s231 + $0x34] sm:$0xf] %v2811
      %2876 = vst [vmem:[%s231 + $0x38] sm:$0xf] %v2812
      %2877 = vst [vmem:[%s231 + $0x3c] sm:$0xf] %v2813
      %2878 = vst [vmem:[%s231 + $0x40] sm:$0xf] %v2814
      %2879 = vst [vmem:[%s231 + $0x44] sm:$0xf] %v2815
      %2880 = vst [vmem:[%s231 + $0x48] sm:$0xf] %v2816
      %2881 = vst [vmem:[%s231 + $0x4c] sm:$0xf] %v2817
      %2882 = vst [vmem:[%s231 + $0x50] sm:$0xf] %v2818
      %2883 = vst [vmem:[%s231 + $0x54] sm:$0xf] %v2819
      %2884 = vst [vmem:[%s231 + $0x58] sm:$0xf] %v2820
      %2885 = vst [vmem:[%s231 + $0x5c] sm:$0xf] %v2821
      %2886 = vst [vmem:[%s231 + $0x60] sm:$0xf] %v2822
      %2887 = vst [vmem:[%s231 + $0x64] sm:$0xf] %v2823
      %2888 = vst [vmem:[%s231 + $0x68] sm:$0xf] %v2824
      %2889 = vst [vmem:[%s231 + $0x6c] sm:$0xf] %v2825
      %2890 = vst [vmem:[%s231 + $0x70] sm:$0xf] %v2826
      %2891 = vst [vmem:[%s231 + $0x74] sm:$0xf] %v2827
      %2892 = vst [vmem:[%s231 + $0x78] sm:$0xf] %v2828
      %2893 = vst [vmem:[%s231 + $0x7c] sm:$0xf] %v2829
      %v2894 = vadd.f32 %v2608, %v2611
      %v2895 = vadd.f32 %v2894, %v2616
      %v2896 = vadd.f32 %v2895, %v2619
      %v2897 = vadd.f32 %v2896, %v2624
      %v2898 = vadd.f32 %v2897, %v2627
      %v2899 = vadd.f32 %v2898, %v2632
      %v2900 = vadd.f32 %v2899, %v2635
      %v2901 = vadd.f32 %v2900, %v2640
      %v2902 = vadd.f32 %v2901, %v2643
      %v2903 = vadd.f32 %v2902, %v2648
      %v2904 = vadd.f32 %v2903, %v2651
      %v2905 = vadd.f32 %v2904, %v2656
      %v2906 = vadd.f32 %v2905, %v2659
      %v2907 = vadd.f32 %v2906, %v2664
      %v2908 = vadd.f32 %v2907, %v2667
      %v2909 = vadd.f32 %v2908, %v2672
      %v2910 = vadd.f32 %v2909, %v2675
      %v2911 = vadd.f32 %v2910, %v2680
      %v2912 = vadd.f32 %v2911, %v2683
      %v2913 = vadd.f32 %v2912, %v2688
      %v2914 = vadd.f32 %v2913, %v2691
      %v2915 = vadd.f32 %v2914, %v2696
      %v2916 = vadd.f32 %v2915, %v2699
      %v2917 = vadd.f32 %v2916, %v2704
      %v2918 = vadd.f32 %v2917, %v2707
      %v2919 = vadd.f32 %v2918, %v2712
      %v2920 = vadd.f32 %v2919, %v2715
      %v2921 = vadd.f32 %v2920, %v2720
      %v2922 = vadd.f32 %v2921, %v2723
      %v2923 = vadd.f32 %v2922, %v2728
      %v2924 = vadd.f32 %v2923, %v2731
      %v2925 = vrot.slane %v2924, 4
      %v2926 = vadd.f32 %v2924, %v2925
      %v2927 = vrot.slane %v2926, 2
      %v2928 = vadd.f32 %v2926, %v2927
      %v2929 = vrot.slane %v2928, 1
      %v2930 = vadd.f32 %v2928, %v2929
      %v2931 = vmul.f32 %v2608, %v2608
      %v2932 = vmul.f32 %v2611, %v2611
      %v2933 = vmul.f32 %v2616, %v2616
      %v2934 = vmul.f32 %v2619, %v2619
      %v2935 = vmul.f32 %v2624, %v2624
      %v2936 = vmul.f32 %v2627, %v2627
      %v2937 = vmul.f32 %v2632, %v2632
      %v2938 = vmul.f32 %v2635, %v2635
      %v2939 = vmul.f32 %v2640, %v2640
      %v2940 = vmul.f32 %v2643, %v2643
      %v2941 = vmul.f32 %v2648, %v2648
      %v2942 = vmul.f32 %v2651, %v2651
      %v2943 = vmul.f32 %v2656, %v2656
      %v2944 = vmul.f32 %v2659, %v2659
      %v2945 = vmul.f32 %v2664, %v2664
      %v2946 = vmul.f32 %v2667, %v2667
      %v2947 = vmul.f32 %v2672, %v2672
      %v2948 = vmul.f32 %v2675, %v2675
      %v2949 = vmul.f32 %v2680, %v2680
      %v2950 = vmul.f32 %v2683, %v2683
      %v2951 = vmul.f32 %v2688, %v2688
      %v2952 = vmul.f32 %v2691, %v2691
      %v2953 = vmul.f32 %v2696, %v2696
      %v2954 = vmul.f32 %v2699, %v2699
      %v2955 = vmul.f32 %v2704, %v2704
      %v2956 = vmul.f32 %v2707, %v2707
      %v2957 = vmul.f32 %v2712, %v2712
      %v2958 = vmul.f32 %v2715, %v2715
      %v2959 = vmul.f32 %v2720, %v2720
      %v2960 = vmul.f32 %v2723, %v2723
      %v2961 = vmul.f32 %v2728, %v2728
      %v2962 = vmul.f32 %v2731, %v2731
      %v2963 = vadd.f32 %v2931, %v2932
      %v2964 = vadd.f32 %v2963, %v2933
      %v2965 = vadd.f32 %v2964, %v2934
      %v2966 = vadd.f32 %v2965, %v2935
      %v2967 = vadd.f32 %v2966, %v2936
      %v2968 = vadd.f32 %v2967, %v2937
      %v2969 = vadd.f32 %v2968, %v2938
      %v2970 = vadd.f32 %v2969, %v2939
      %v2971 = vadd.f32 %v2970, %v2940
      %v2972 = vadd.f32 %v2971, %v2941
      %v2973 = vadd.f32 %v2972, %v2942
      %v2974 = vadd.f32 %v2973, %v2943
      %v2975 = vadd.f32 %v2974, %v2944
      %v2976 = vadd.f32 %v2975, %v2945
      %v2977 = vadd.f32 %v2976, %v2946
      %v2978 = vadd.f32 %v2977, %v2947
      %v2979 = vadd.f32 %v2978, %v2948
      %v2980 = vadd.f32 %v2979, %v2949
      %v2981 = vadd.f32 %v2980, %v2950
      %v2982 = vadd.f32 %v2981, %v2951
      %v2983 = vadd.f32 %v2982, %v2952
      %v2984 = vadd.f32 %v2983, %v2953
      %v2985 = vadd.f32 %v2984, %v2954
      %v2986 = vadd.f32 %v2985, %v2955
      %v2987 = vadd.f32 %v2986, %v2956
      %v2988 = vadd.f32 %v2987, %v2957
      %v2989 = vadd.f32 %v2988, %v2958
      %v2990 = vadd.f32 %v2989, %v2959
      %v2991 = vadd.f32 %v2990, %v2960
      %v2992 = vadd.f32 %v2991, %v2961
      %v2993 = vadd.f32 %v2992, %v2962
      %v2994 = vrot.slane %v2993, 4
      %v2995 = vadd.f32 %v2993, %v2994
      %v2996 = vrot.slane %v2995, 2
      %v2997 = vadd.f32 %v2995, %v2996
      %v2998 = vrot.slane %v2997, 1
      %v2999 = vadd.f32 %v2997, %v2998
      %vm3000 = vcmask 1040384
      %v3001 = vsel %vm3000, %v2930, %v2999
      %3002 = vst [vmem:[%s235] sm:$0x3] %v3001
      %p3003 = scmp.lt.s32.totalorder %s17, 1
      %s3004 = scalar_select %p3003, %s17, 1
      %s3005 = smul.addr %s3004, 32
      %s3006 = smul.addr %s3005, 4
      %s3007 = scalar_lea.vmem %s4, %s3006
      %p3008 = scmp.lt.s32.totalorder %s17, 1
      %s3009 = scalar_select %p3008, %s17, 1
      %s3010 = smul.addr %s3009, 2
      %s3011 = scalar_lea.vmem %s5, %s3010
      // Predicated region
      $region37: #{basic_block_forward.5} parent=35 // pred_check
        %p3012 = pneg %p124
      $region38: #{basic_block_forward.5} parent=35 // pred_check_branch
        %3014 = sbr.rel (%p3012) target = $region40
      $region39: #{basic_block_forward.5} parent=35 // pred_region
        _
      $region40: #{basic_block_forward.5} parent=35 // pred_fallthru
        _
      // Predicated region
      $region41: #{basic_block_forward.5} parent=35 // pred_check
        %p3015 = pneg %p150
      $region42: #{basic_block_forward.5} parent=35 // pred_check_branch
        %3017 = sbr.rel (%p3015) target = $region44
      $region43: #{basic_block_forward.5} parent=35 // pred_region
        _
      $region44: #{basic_block_forward.5} parent=35 // pred_fallthru
        _
    $region36: #{basic_block_forward.5} parent=5 // pred_fallthru
      _
    %p3018 = scmp.le.s32.totalorder 2, %s12
    // Predicated region
    $region45: #{basic_block_forward.5} parent=5 // pred_check
      %p3019 = pneg %p3018
    $region46: #{basic_block_forward.5} parent=5 // pred_check_branch
      %3021 = sbr.rel (%p3019) target = $region48
    $region47: #{basic_block_forward.5} parent=5 // pred_region
      %s3022 = ssub.s32 %s12, 2
      // Predicated region
      $region49: #{basic_block_forward.5} parent=47 // pred_check
        %p3023 = pneg %p130
      $region50: #{basic_block_forward.5} parent=47 // pred_check_branch
        %3025 = sbr.rel (%p3023) target = $region52
      $region51: #{basic_block_forward.5} parent=47 // pred_region
        %p3026 = scmp.lt.s32.totalorder %s18, 1
        %s3027 = scalar_select %p3026, %s18, 1
        %s3028 = smul.addr %s3027, 32
        %s3029 = smul.addr %s3028, 4
        %s3030 = scalar_lea.vmem %s4, %s3029
      $region52: #{basic_block_forward.5} parent=47 // pred_fallthru
        _
      // Predicated region
      $region53: #{basic_block_forward.5} parent=47 // pred_check
        %p3031 = pneg %p156
      $region54: #{basic_block_forward.5} parent=47 // pred_check_branch
        %3033 = sbr.rel (%p3031) target = $region56
      $region55: #{basic_block_forward.5} parent=47 // pred_region
        %p3034 = scmp.lt.s32.totalorder %s18, 1
        %s3035 = scalar_select %p3034, %s18, 1
        %s3036 = smul.addr %s3035, 2
        %s3037 = scalar_lea.vmem %s5, %s3036
      $region56: #{basic_block_forward.5} parent=47 // pred_fallthru
        _
    $region48: #{basic_block_forward.5} parent=5 // pred_fallthru
      _
  $region6: #{basic_block_forward.5} parent=0 // loop_footer
    %s16 = sadd.s32 1, %s12
  $region7: #{basic_block_forward.5} parent=0 // loop_footer_branch
    %11 = sbr.rel target = $region3
  $region8: #{basic_block_forward.5} parent=0 // loop_exit
    _

</llo_original>
